<compile_context>
chip_gen: v5e
topology: v5e:2x2
jax: 0.10.0
libtpu: 0.0.40
codegen_flags: <defaults>
</compile_context>

<pallas_src>
import jax
import jax.numpy as jnp
from jax import lax
from jax.experimental import pallas as pl
from jax.experimental.pallas import tpu as pltpu

BN_EPS = 1e-5


# ----------------------------------------------------------------------------
# Fused SCR kernel: one grid step processes `tile_n` pixels end-to-end.
#   x_ref   : (u, v, tile_n, c0)  bf16   (spatial-major, pixel inner, ch last)
#   weights : BN-scale-folded, bf16; biases (shift) f32
#   o_ref   : (tile_n, c4)        f32
#   y1_ref  : VMEM (u, v, tile_n, c1) bf16     stage-1 activations
#   acc2_ref: VMEM (uo*vo*tile_n, c2) f32      stage-2 accumulator
# ----------------------------------------------------------------------------
def _scr_fused_kernel(x_ref, w_in_ref, b_in_ref, w1_ref, b1_ref,
                      w2_ref, b2_ref, w_out_ref, b_out_ref,
                      o_ref, y1_ref, acc2_ref):
    u, v, tile_n, c0 = x_ref.shape
    c1 = w_in_ref.shape[1]
    uo, vo = u - 2, v - 2                       # 3x3 VALID output extent

    # ---- Stage 1: 1x1 conv (+folded BN scale) + shift + ReLU --------------
    # Chunked over the u axis: each chunk is one (v*tile_n, c0)x(c0, c1) MXU
    # matmul (keeps M large while bounding the live value).
    for ui in range(u):
        xs = x_ref[ui].reshape(v * tile_n, c0)          # bf16
        ya = jnp.dot(xs, w_in_ref[...], preferred_element_type=jnp.float32)
        ya = jnp.maximum(ya + b_in_ref[...], 0.0)
        y1_ref[ui] = ya.reshape(v, tile_n, c1).astype(y1_ref.dtype)

    # ---- Stage 2: Conv3d (1,3,3) VALID as 9-tap shift-and-matmul ----------
    # acc2 rows are ordered (oi, oj, p): row = (oi*vo + oj)*tile_n + p.
    for ki in range(3):
        for kj in range(3):
            t = ki * 3 + kj
            tap = y1_ref[pl.ds(ki, uo), pl.ds(kj, vo), :, :]   # (uo,vo,tile_n,c1)
            tap = tap.reshape(uo * vo * tile_n, c1)
            contrib = jnp.dot(tap, w1_ref[t],
                              preferred_element_type=jnp.float32)
            if t == 0:
                acc2_ref[...] = contrib
            else:
                acc2_ref[...] += contrib

    # ---- Stage 3: second Conv3d (1,3,3) VALID; output spatial is 1x1, so
    # contract over the uo*vo positions with 9 (tile_n,c2)x(c2,c3) matmuls.
    acc3 = None
    for pos in range(uo * vo):
        y2p = jnp.maximum(
            acc2_ref[pl.ds(pos * tile_n, tile_n), :] + b1_ref[...], 0.0)
        part = jnp.dot(y2p.astype(jnp.bfloat16), w2_ref[pos],
                       preferred_element_type=jnp.float32)
        acc3 = part if pos == 0 else acc3 + part
    y3 = jnp.maximum(acc3 + b2_ref[...], 0.0)              # (tile_n, c3) f32

    # ---- Stage 4: 1x1 conv out + shift (no ReLU); lane-dense store --------
    yo = jnp.dot(y3.astype(jnp.bfloat16), w_out_ref[...],
                 preferred_element_type=jnp.float32)
    o_ref[...] = (yo + b_out_ref[...]).astype(o_ref.dtype)


# ----------------------------------------------------------------------------
# Tile picker: largest 8-multiple pixel tile dividing n that fits a per-buffer
# VMEM budget and keeps >=4 grid steps when possible (v7x has 2 TensorCores).
# ----------------------------------------------------------------------------
def _pick_tile(n_pixels, bytes_per_pixel, vmem_budget_bytes=8 * 1024 * 1024):
    cap = max(8, vmem_budget_bytes // max(bytes_per_pixel, 1))
    cands = [t for t in (256, 192, 128, 96, 64, 48, 32, 24, 16, 8)
             if t <= cap and n_pixels % t == 0]
    for min_steps in (4, 2, 1):
        for t in cands:
            if n_pixels // t >= min_steps:
                return t
    return n_pixels   # fallback: full-extent block (single-step grid)


# ----------------------------------------------------------------------------
# SCR forward (JAX wrapper: one input relayout, one fused pallas_call)
# ----------------------------------------------------------------------------
def scr_forward(x, kp):
    b, c0, h, w, u, v = x.shape
    # TODO(synk): only ksize=3, stride=1, do_padding=False with u=v=5 patches
    # (the configuration the module's final .view requires) is implemented.
    assert u == 5 and v == 5, "SCR fused kernel requires 5x5 (u, v) patches"

    c1 = kp["w_in"].shape[1]
    c2 = kp["w1"].shape[-1]
    c3 = kp["w2"].shape[-1]
    c4 = kp["w_out"].shape[1]
    n = b * h * w

    # Single channels-last relayout of the input.
    # TODO(synk): accept channels-last input at the module boundary to avoid
    # this full HBM relayout.
    xl = jnp.transpose(x, (4, 5, 0, 2, 3, 1))            # (u, v, b, h, w, c0)
    xl = xl.reshape(u, v, n, c0).astype(jnp.bfloat16)

    # rough per-pixel VMEM footprint: x block + y1 + acc2 + out block
    bpp = (u * v * c0 * 2) + (u * v * c1 * 2) + (9 * c2 * 4) + (c4 * 4)
    tile_n = _pick_tile(n, bpp)

    w1 = kp["w1"].reshape(9, c1, c2)                     # tap-major (ki*3+kj)
    w2 = kp["w2"].reshape(9, c2, c3)                     # position-major

    out = pl.pallas_call(
        _scr_fused_kernel,
        out_shape=jax.ShapeDtypeStruct((n, c4), jnp.float32),
        grid_spec=pltpu.PrefetchScalarGridSpec(
            num_scalar_prefetch=0,
            grid=(n // tile_n,),
            in_specs=[
                pl.BlockSpec((u, v, tile_n, c0), lambda i: (0, 0, i, 0)),
                pl.BlockSpec((c0, c1), lambda i: (0, 0)),
                pl.BlockSpec((1, c1), lambda i: (0, 0)),
                pl.BlockSpec((9, c1, c2), lambda i: (0, 0, 0)),
                pl.BlockSpec((1, c2), lambda i: (0, 0)),
                pl.BlockSpec((9, c2, c3), lambda i: (0, 0, 0)),
                pl.BlockSpec((1, c3), lambda i: (0, 0)),
                pl.BlockSpec((c3, c4), lambda i: (0, 0)),
                pl.BlockSpec((1, c4), lambda i: (0, 0)),
            ],
            out_specs=pl.BlockSpec((tile_n, c4), lambda i: (i, 0)),
            scratch_shapes=[
                pltpu.VMEM((u, v, tile_n, c1), jnp.bfloat16),               # y1
                pltpu.VMEM(((u - 2) * (v - 2) * tile_n, c2), jnp.float32),  # acc2
            ],
        ),
        compiler_params=pltpu.CompilerParams(
            dimension_semantics=("parallel",),
            # stay well inside v7x's 64 MiB physical / 32 MiB scoped VMEM
            vmem_limit_bytes=32 * 1024 * 1024,
        ),
    )(xl, kp["w_in"], kp["b_in"], w1, kp["b1"], w2, kp["b2"],
      kp["w_out"], kp["b_out"])

    return out.reshape(b, h, w, c4).transpose(0, 3, 1, 2)   # NCHW output


# ----------------------------------------------------------------------------
# Parameter construction: raw conv weights + eval-mode BN, then fold BN scale
# into the weights (bf16) and keep the per-channel shift in f32.
# ----------------------------------------------------------------------------
def init_params(key, planes):
    c0, c1, c2, c3, c4 = planes
    ks = jax.random.split(key, 8)

    def bn(k, c):
        k1, k2, k3, k4 = jax.random.split(k, 4)
        gamma = jax.random.uniform(k1, (c,), jnp.float32, 0.5, 1.5)
        beta = 0.1 * jax.random.normal(k2, (c,), jnp.float32)
        mean = 0.1 * jax.random.normal(k3, (c,), jnp.float32)
        var = jax.random.uniform(k4, (c,), jnp.float32, 0.5, 1.5)
        scale = gamma / jnp.sqrt(var + BN_EPS)
        shift = beta - mean * scale
        return scale, shift

    p = {}
    p["w_in"] = 0.1 * jax.random.normal(ks[0], (c0, c1), jnp.float32)
    p["s_in"], p["b_in"] = bn(ks[1], c1)
    p["w1"] = 0.1 * jax.random.normal(ks[2], (3, 3, c1, c2), jnp.float32)
    p["s1"], p["b1"] = bn(ks[3], c2)
    p["w2"] = 0.1 * jax.random.normal(ks[4], (3, 3, c2, c3), jnp.float32)
    p["s2"], p["b2"] = bn(ks[5], c3)
    p["w_out"] = 0.1 * jax.random.normal(ks[6], (c3, c4), jnp.float32)
    p["s_out"], p["b_out"] = bn(ks[7], c4)
    return p


def prepare_kernel_params(p):
    kp = {}
    kp["w_in"] = (p["w_in"] * p["s_in"][None, :]).astype(jnp.bfloat16)
    kp["b_in"] = p["b_in"].reshape(1, -1).astype(jnp.float32)
    kp["w1"] = (p["w1"] * p["s1"][None, None, None, :]).astype(jnp.bfloat16)
    kp["b1"] = p["b1"].reshape(1, -1).astype(jnp.float32)
    kp["w2"] = (p["w2"] * p["s2"][None, None, None, :]).astype(jnp.bfloat16)
    kp["b2"] = p["b2"].reshape(1, -1).astype(jnp.float32)
    kp["w_out"] = (p["w_out"] * p["s_out"][None, :]).astype(jnp.bfloat16)
    kp["b_out"] = p["b_out"].reshape(1, -1).astype(jnp.float32)
    return kp


# ----------------------------------------------------------------------------
# Pure-JAX reference (einsum + lax.conv) using the same folded bf16 weights;
# activations are rounded to bf16 at the same points as the kernel, so only
# the accumulation order differs.
# ----------------------------------------------------------------------------
def scr_reference(x, kp):
    b, c0, h, w, u, v = x.shape
    f32 = jnp.float32
    q = lambda a: a.astype(jnp.bfloat16).astype(f32)

    xq = q(x)
    y = jnp.einsum("bchwuv,cd->bhwuvd", xq, kp["w_in"].astype(f32))
    y = q(jnp.maximum(y + kp["b_in"], 0.0))
    c1 = y.shape[-1]
    yn = y.reshape(b * h * w, u, v, c1)

    z = lax.conv_general_dilated(
        yn, kp["w1"].astype(f32), (1, 1), "VALID",
        dimension_numbers=("NHWC", "HWIO", "NHWC"))
    z = q(jnp.maximum(z + kp["b1"], 0.0))

    z = lax.conv_general_dilated(
        z, kp["w2"].astype(f32), (1, 1), "VALID",
        dimension_numbers=("NHWC", "HWIO", "NHWC"))
    z = q(jnp.maximum(z + kp["b2"], 0.0))                    # (N, 1, 1, c3)

    c3 = z.shape[-1]
    z = z.reshape(b, h, w, c3)
    out = jnp.einsum("bhwc,cd->bhwd", z, kp["w_out"].astype(f32)) + kp["b_out"]
    return out.transpose(0, 3, 1, 2)


if __name__ == "__main__":
    key = jax.random.PRNGKey(0)
    # small test config: u = v = 5 so the two VALID 3x3 convs reduce the
    # (u, v) patch to 1x1, matching the module's final .view
    b, h, w, u, v = 2, 4, 4, 5, 5
    planes = [128, 64, 64, 64, 128]

    k_param, k_x = jax.random.split(key)
    kp = prepare_kernel_params(init_params(k_param, planes))
    x = jax.random.normal(k_x, (b, planes[0], h, w, u, v), jnp.float32)

    out = jax.jit(lambda xx: scr_forward(xx, kp))(x)
    out = jax.block_until_ready(out)

    ref = jax.block_until_ready(scr_reference(x, kp))
    assert out.shape == (b, planes[4], h, w), out.shape
    max_err = float(jnp.max(jnp.abs(out - ref)))
    assert jnp.allclose(out, ref, atol=2e-2, rtol=2e-2), max_err

    print("KERNEL_OK")
</pallas_src>

<mosaic_0001>
module attributes {stable_mosaic.version = 11 : i64} {
  func.func @_scr_fused_kernel(%arg0: i32, %arg1: memref<5x5x8x128xbf16, #tpu.memory_space<vmem>>, %arg2: memref<128x64xbf16, #tpu.memory_space<vmem>>, %arg3: memref<1x64xf32, #tpu.memory_space<vmem>>, %arg4: memref<9x64x64xbf16, #tpu.memory_space<vmem>>, %arg5: memref<1x64xf32, #tpu.memory_space<vmem>>, %arg6: memref<9x64x64xbf16, #tpu.memory_space<vmem>>, %arg7: memref<1x64xf32, #tpu.memory_space<vmem>>, %arg8: memref<64x128xbf16, #tpu.memory_space<vmem>>, %arg9: memref<1x128xf32, #tpu.memory_space<vmem>>, %arg10: memref<8x128xf32, #tpu.memory_space<vmem>>, %arg11: memref<5x5x8x64xbf16, #tpu.memory_space<vmem>>, %arg12: memref<72x64xf32, #tpu.memory_space<vmem>>) attributes {dimension_semantics = [#tpu.dimension_semantics<parallel>], iteration_bounds = array<i64: 4>, scalar_prefetch = 0 : i64, scratch_operands = 2 : i64, tpu.core_type = #tpu.core_type<tc>, window_params = [{transform_indices = @transform_0, window_bounds = array<i64: 5, 5, 8, 128>}, {pipeline_mode = #tpu.pipeline_mode<synchronous>, transform_indices = @transform_1, window_bounds = array<i64: 128, 64>}, {pipeline_mode = #tpu.pipeline_mode<synchronous>, transform_indices = @transform_2, window_bounds = array<i64: 1, 64>}, {pipeline_mode = #tpu.pipeline_mode<synchronous>, transform_indices = @transform_3, window_bounds = array<i64: 9, 64, 64>}, {pipeline_mode = #tpu.pipeline_mode<synchronous>, transform_indices = @transform_4, window_bounds = array<i64: 1, 64>}, {pipeline_mode = #tpu.pipeline_mode<synchronous>, transform_indices = @transform_5, window_bounds = array<i64: 9, 64, 64>}, {pipeline_mode = #tpu.pipeline_mode<synchronous>, transform_indices = @transform_6, window_bounds = array<i64: 1, 64>}, {pipeline_mode = #tpu.pipeline_mode<synchronous>, transform_indices = @transform_7, window_bounds = array<i64: 64, 128>}, {pipeline_mode = #tpu.pipeline_mode<synchronous>, transform_indices = @transform_8, window_bounds = array<i64: 1, 128>}, {transform_indices = @transform_9, window_bounds = array<i64: 8, 128>}]} {
    %c0 = arith.constant 0 : index
    %c0_0 = arith.constant 0 : index
    %c0_1 = arith.constant 0 : index
    %c0_2 = arith.constant 0 : index
    %0 = vector.load %arg1[%c0, %c0_0, %c0_1, %c0_2] : memref<5x5x8x128xbf16, #tpu.memory_space<vmem>>, vector<1x5x8x128xbf16>
    %1 = vector.shape_cast %0 : vector<1x5x8x128xbf16> to vector<5x8x128xbf16>
    %2 = vector.shape_cast %1 : vector<5x8x128xbf16> to vector<40x128xbf16>
    %c0_3 = arith.constant 0 : index
    %c0_4 = arith.constant 0 : index
    %3 = vector.load %arg2[%c0_3, %c0_4] : memref<128x64xbf16, #tpu.memory_space<vmem>>, vector<128x64xbf16>
    %cst = arith.constant dense<0.000000e+00> : vector<40x64xf32>
    %4 = tpu.matmul %2, %3, %cst {dimension_numbers = #tpu.dot_dimension_numbers<[1], [0], [0], [1], [0, 0, 1, 1], [], []>} : vector<40x128xbf16>, vector<128x64xbf16>, vector<40x64xf32> -> vector<40x64xf32>
    %c0_5 = arith.constant 0 : index
    %c0_6 = arith.constant 0 : index
    %5 = vector.load %arg3[%c0_5, %c0_6] : memref<1x64xf32, #tpu.memory_space<vmem>>, vector<1x64xf32>
    %6 = vector.broadcast %5 : vector<1x64xf32> to vector<40x64xf32>
    %7 = arith.addf %4, %6 : vector<40x64xf32>
    %cst_7 = arith.constant 0.000000e+00 : f32
    %8 = vector.broadcast %cst_7 : f32 to vector<40x64xf32>
    %9 = arith.maximumf %7, %8 : vector<40x64xf32>
    %10 = vector.shape_cast %9 : vector<40x64xf32> to vector<5x8x64xf32>
    %11 = arith.truncf %10 : vector<5x8x64xf32> to vector<5x8x64xbf16>
    %c0_8 = arith.constant 0 : index
    %c0_9 = arith.constant 0 : index
    %c0_10 = arith.constant 0 : index
    %c0_11 = arith.constant 0 : index
    %12 = vector.load %arg11[%c0_8, %c0_9, %c0_10, %c0_11] : memref<5x5x8x64xbf16, #tpu.memory_space<vmem>>, vector<1x5x8x64xbf16>
    %13 = vector.shape_cast %12 : vector<1x5x8x64xbf16> to vector<5x8x64xbf16>
    %14 = vector.shape_cast %11 : vector<5x8x64xbf16> to vector<1x5x8x64xbf16>
    tpu.vector_store %arg11[%c0_8, %c0_9, %c0_10, %c0_11], %14 {strides = array<i32>} : memref<5x5x8x64xbf16, #tpu.memory_space<vmem>>, vector<1x5x8x64xbf16>,
    %c1 = arith.constant 1 : index
    %c0_12 = arith.constant 0 : index
    %c0_13 = arith.constant 0 : index
    %c0_14 = arith.constant 0 : index
    %15 = vector.load %arg1[%c1, %c0_12, %c0_13, %c0_14] : memref<5x5x8x128xbf16, #tpu.memory_space<vmem>>, vector<1x5x8x128xbf16>
    %16 = vector.shape_cast %15 : vector<1x5x8x128xbf16> to vector<5x8x128xbf16>
    %17 = vector.shape_cast %16 : vector<5x8x128xbf16> to vector<40x128xbf16>
    %c0_15 = arith.constant 0 : index
    %c0_16 = arith.constant 0 : index
    %18 = vector.load %arg2[%c0_15, %c0_16] : memref<128x64xbf16, #tpu.memory_space<vmem>>, vector<128x64xbf16>
    %cst_17 = arith.constant dense<0.000000e+00> : vector<40x64xf32>
    %19 = tpu.matmul %17, %18, %cst_17 {dimension_numbers = #tpu.dot_dimension_numbers<[1], [0], [0], [1], [0, 0, 1, 1], [], []>} : vector<40x128xbf16>, vector<128x64xbf16>, vector<40x64xf32> -> vector<40x64xf32>
    %c0_18 = arith.constant 0 : index
    %c0_19 = arith.constant 0 : index
    %20 = vector.load %arg3[%c0_18, %c0_19] : memref<1x64xf32, #tpu.memory_space<vmem>>, vector<1x64xf32>
    %21 = vector.broadcast %20 : vector<1x64xf32> to vector<40x64xf32>
    %22 = arith.addf %19, %21 : vector<40x64xf32>
    %cst_20 = arith.constant 0.000000e+00 : f32
    %23 = vector.broadcast %cst_20 : f32 to vector<40x64xf32>
    %24 = arith.maximumf %22, %23 : vector<40x64xf32>
    %25 = vector.shape_cast %24 : vector<40x64xf32> to vector<5x8x64xf32>
    %26 = arith.truncf %25 : vector<5x8x64xf32> to vector<5x8x64xbf16>
    %c1_21 = arith.constant 1 : index
    %c0_22 = arith.constant 0 : index
    %c0_23 = arith.constant 0 : index
    %c0_24 = arith.constant 0 : index
    %27 = vector.load %arg11[%c1_21, %c0_22, %c0_23, %c0_24] : memref<5x5x8x64xbf16, #tpu.memory_space<vmem>>, vector<1x5x8x64xbf16>
    %28 = vector.shape_cast %27 : vector<1x5x8x64xbf16> to vector<5x8x64xbf16>
    %29 = vector.shape_cast %26 : vector<5x8x64xbf16> to vector<1x5x8x64xbf16>
    tpu.vector_store %arg11[%c1_21, %c0_22, %c0_23, %c0_24], %29 {strides = array<i32>} : memref<5x5x8x64xbf16, #tpu.memory_space<vmem>>, vector<1x5x8x64xbf16>,
    %c2 = arith.constant 2 : index
    %c0_25 = arith.constant 0 : index
    %c0_26 = arith.constant 0 : index
    %c0_27 = arith.constant 0 : index
    %30 = vector.load %arg1[%c2, %c0_25, %c0_26, %c0_27] : memref<5x5x8x128xbf16, #tpu.memory_space<vmem>>, vector<1x5x8x128xbf16>
    %31 = vector.shape_cast %30 : vector<1x5x8x128xbf16> to vector<5x8x128xbf16>
    %32 = vector.shape_cast %31 : vector<5x8x128xbf16> to vector<40x128xbf16>
    %c0_28 = arith.constant 0 : index
    %c0_29 = arith.constant 0 : index
    %33 = vector.load %arg2[%c0_28, %c0_29] : memref<128x64xbf16, #tpu.memory_space<vmem>>, vector<128x64xbf16>
    %cst_30 = arith.constant dense<0.000000e+00> : vector<40x64xf32>
    %34 = tpu.matmul %32, %33, %cst_30 {dimension_numbers = #tpu.dot_dimension_numbers<[1], [0], [0], [1], [0, 0, 1, 1], [], []>} : vector<40x128xbf16>, vector<128x64xbf16>, vector<40x64xf32> -> vector<40x64xf32>
    %c0_31 = arith.constant 0 : index
    %c0_32 = arith.constant 0 : index
    %35 = vector.load %arg3[%c0_31, %c0_32] : memref<1x64xf32, #tpu.memory_space<vmem>>, vector<1x64xf32>
    %36 = vector.broadcast %35 : vector<1x64xf32> to vector<40x64xf32>
    %37 = arith.addf %34, %36 : vector<40x64xf32>
    %cst_33 = arith.constant 0.000000e+00 : f32
    %38 = vector.broadcast %cst_33 : f32 to vector<40x64xf32>
    %39 = arith.maximumf %37, %38 : vector<40x64xf32>
    %40 = vector.shape_cast %39 : vector<40x64xf32> to vector<5x8x64xf32>
    %41 = arith.truncf %40 : vector<5x8x64xf32> to vector<5x8x64xbf16>
    %c2_34 = arith.constant 2 : index
    %c0_35 = arith.constant 0 : index
    %c0_36 = arith.constant 0 : index
    %c0_37 = arith.constant 0 : index
    %42 = vector.load %arg11[%c2_34, %c0_35, %c0_36, %c0_37] : memref<5x5x8x64xbf16, #tpu.memory_space<vmem>>, vector<1x5x8x64xbf16>
    %43 = vector.shape_cast %42 : vector<1x5x8x64xbf16> to vector<5x8x64xbf16>
    %44 = vector.shape_cast %41 : vector<5x8x64xbf16> to vector<1x5x8x64xbf16>
    tpu.vector_store %arg11[%c2_34, %c0_35, %c0_36, %c0_37], %44 {strides = array<i32>} : memref<5x5x8x64xbf16, #tpu.memory_space<vmem>>, vector<1x5x8x64xbf16>,
    %c3 = arith.constant 3 : index
    %c0_38 = arith.constant 0 : index
    %c0_39 = arith.constant 0 : index
    %c0_40 = arith.constant 0 : index
    %45 = vector.load %arg1[%c3, %c0_38, %c0_39, %c0_40] : memref<5x5x8x128xbf16, #tpu.memory_space<vmem>>, vector<1x5x8x128xbf16>
    %46 = vector.shape_cast %45 : vector<1x5x8x128xbf16> to vector<5x8x128xbf16>
    %47 = vector.shape_cast %46 : vector<5x8x128xbf16> to vector<40x128xbf16>
    %c0_41 = arith.constant 0 : index
    %c0_42 = arith.constant 0 : index
    %48 = vector.load %arg2[%c0_41, %c0_42] : memref<128x64xbf16, #tpu.memory_space<vmem>>, vector<128x64xbf16>
    %cst_43 = arith.constant dense<0.000000e+00> : vector<40x64xf32>
    %49 = tpu.matmul %47, %48, %cst_43 {dimension_numbers = #tpu.dot_dimension_numbers<[1], [0], [0], [1], [0, 0, 1, 1], [], []>} : vector<40x128xbf16>, vector<128x64xbf16>, vector<40x64xf32> -> vector<40x64xf32>
    %c0_44 = arith.constant 0 : index
    %c0_45 = arith.constant 0 : index
    %50 = vector.load %arg3[%c0_44, %c0_45] : memref<1x64xf32, #tpu.memory_space<vmem>>, vector<1x64xf32>
    %51 = vector.broadcast %50 : vector<1x64xf32> to vector<40x64xf32>
    %52 = arith.addf %49, %51 : vector<40x64xf32>
    %cst_46 = arith.constant 0.000000e+00 : f32
    %53 = vector.broadcast %cst_46 : f32 to vector<40x64xf32>
    %54 = arith.maximumf %52, %53 : vector<40x64xf32>
    %55 = vector.shape_cast %54 : vector<40x64xf32> to vector<5x8x64xf32>
    %56 = arith.truncf %55 : vector<5x8x64xf32> to vector<5x8x64xbf16>
    %c3_47 = arith.constant 3 : index
    %c0_48 = arith.constant 0 : index
    %c0_49 = arith.constant 0 : index
    %c0_50 = arith.constant 0 : index
    %57 = vector.load %arg11[%c3_47, %c0_48, %c0_49, %c0_50] : memref<5x5x8x64xbf16, #tpu.memory_space<vmem>>, vector<1x5x8x64xbf16>
    %58 = vector.shape_cast %57 : vector<1x5x8x64xbf16> to vector<5x8x64xbf16>
    %59 = vector.shape_cast %56 : vector<5x8x64xbf16> to vector<1x5x8x64xbf16>
    tpu.vector_store %arg11[%c3_47, %c0_48, %c0_49, %c0_50], %59 {strides = array<i32>} : memref<5x5x8x64xbf16, #tpu.memory_space<vmem>>, vector<1x5x8x64xbf16>,
    %c4 = arith.constant 4 : index
    %c0_51 = arith.constant 0 : index
    %c0_52 = arith.constant 0 : index
    %c0_53 = arith.constant 0 : index
    %60 = vector.load %arg1[%c4, %c0_51, %c0_52, %c0_53] : memref<5x5x8x128xbf16, #tpu.memory_space<vmem>>, vector<1x5x8x128xbf16>
    %61 = vector.shape_cast %60 : vector<1x5x8x128xbf16> to vector<5x8x128xbf16>
    %62 = vector.shape_cast %61 : vector<5x8x128xbf16> to vector<40x128xbf16>
    %c0_54 = arith.constant 0 : index
    %c0_55 = arith.constant 0 : index
    %63 = vector.load %arg2[%c0_54, %c0_55] : memref<128x64xbf16, #tpu.memory_space<vmem>>, vector<128x64xbf16>
    %cst_56 = arith.constant dense<0.000000e+00> : vector<40x64xf32>
    %64 = tpu.matmul %62, %63, %cst_56 {dimension_numbers = #tpu.dot_dimension_numbers<[1], [0], [0], [1], [0, 0, 1, 1], [], []>} : vector<40x128xbf16>, vector<128x64xbf16>, vector<40x64xf32> -> vector<40x64xf32>
    %c0_57 = arith.constant 0 : index
    %c0_58 = arith.constant 0 : index
    %65 = vector.load %arg3[%c0_57, %c0_58] : memref<1x64xf32, #tpu.memory_space<vmem>>, vector<1x64xf32>
    %66 = vector.broadcast %65 : vector<1x64xf32> to vector<40x64xf32>
    %67 = arith.addf %64, %66 : vector<40x64xf32>
    %cst_59 = arith.constant 0.000000e+00 : f32
    %68 = vector.broadcast %cst_59 : f32 to vector<40x64xf32>
    %69 = arith.maximumf %67, %68 : vector<40x64xf32>
    %70 = vector.shape_cast %69 : vector<40x64xf32> to vector<5x8x64xf32>
    %71 = arith.truncf %70 : vector<5x8x64xf32> to vector<5x8x64xbf16>
    %c4_60 = arith.constant 4 : index
    %c0_61 = arith.constant 0 : index
    %c0_62 = arith.constant 0 : index
    %c0_63 = arith.constant 0 : index
    %72 = vector.load %arg11[%c4_60, %c0_61, %c0_62, %c0_63] : memref<5x5x8x64xbf16, #tpu.memory_space<vmem>>, vector<1x5x8x64xbf16>
    %73 = vector.shape_cast %72 : vector<1x5x8x64xbf16> to vector<5x8x64xbf16>
    %74 = vector.shape_cast %71 : vector<5x8x64xbf16> to vector<1x5x8x64xbf16>
    tpu.vector_store %arg11[%c4_60, %c0_61, %c0_62, %c0_63], %74 {strides = array<i32>} : memref<5x5x8x64xbf16, #tpu.memory_space<vmem>>, vector<1x5x8x64xbf16>,
    %c0_64 = arith.constant 0 : index
    %c0_65 = arith.constant 0 : index
    %c0_66 = arith.constant 0 : index
    %c0_67 = arith.constant 0 : index
    %75 = vector.load %arg11[%c0_64, %c0_65, %c0_66, %c0_67] : memref<5x5x8x64xbf16, #tpu.memory_space<vmem>>, vector<3x3x8x64xbf16>
    %76 = vector.shape_cast %75 : vector<3x3x8x64xbf16> to vector<72x64xbf16>
    %c0_68 = arith.constant 0 : index
    %c0_69 = arith.constant 0 : index
    %c0_70 = arith.constant 0 : index
    %77 = vector.load %arg4[%c0_68, %c0_69, %c0_70] : memref<9x64x64xbf16, #tpu.memory_space<vmem>>, vector<1x64x64xbf16>
    %78 = vector.shape_cast %77 : vector<1x64x64xbf16> to vector<64x64xbf16>
    %cst_71 = arith.constant dense<0.000000e+00> : vector<72x64xf32>
    %79 = tpu.matmul %76, %78, %cst_71 {dimension_numbers = #tpu.dot_dimension_numbers<[1], [0], [0], [1], [0, 0, 1, 1], [], []>} : vector<72x64xbf16>, vector<64x64xbf16>, vector<72x64xf32> -> vector<72x64xf32>
    %c0_72 = arith.constant 0 : index
    %c0_73 = arith.constant 0 : index
    %80 = vector.load %arg12[%c0_72, %c0_73] : memref<72x64xf32, #tpu.memory_space<vmem>>, vector<72x64xf32>
    tpu.vector_store %arg12[%c0_72, %c0_73], %79 {strides = array<i32>} : memref<72x64xf32, #tpu.memory_space<vmem>>, vector<72x64xf32>,
    %c0_74 = arith.constant 0 : index
    %c1_75 = arith.constant 1 : index
    %c0_76 = arith.constant 0 : index
    %c0_77 = arith.constant 0 : index
    %81 = vector.load %arg11[%c0_74, %c1_75, %c0_76, %c0_77] : memref<5x5x8x64xbf16, #tpu.memory_space<vmem>>, vector<3x3x8x64xbf16>
    %82 = vector.shape_cast %81 : vector<3x3x8x64xbf16> to vector<72x64xbf16>
    %c1_78 = arith.constant 1 : index
    %c0_79 = arith.constant 0 : index
    %c0_80 = arith.constant 0 : index
    %83 = vector.load %arg4[%c1_78, %c0_79, %c0_80] : memref<9x64x64xbf16, #tpu.memory_space<vmem>>, vector<1x64x64xbf16>
    %84 = vector.shape_cast %83 : vector<1x64x64xbf16> to vector<64x64xbf16>
    %cst_81 = arith.constant dense<0.000000e+00> : vector<72x64xf32>
    %85 = tpu.matmul %82, %84, %cst_81 {dimension_numbers = #tpu.dot_dimension_numbers<[1], [0], [0], [1], [0, 0, 1, 1], [], []>} : vector<72x64xbf16>, vector<64x64xbf16>, vector<72x64xf32> -> vector<72x64xf32>
    %c0_82 = arith.constant 0 : index
    %c0_83 = arith.constant 0 : index
    %86 = vector.load %arg12[%c0_82, %c0_83] : memref<72x64xf32, #tpu.memory_space<vmem>>, vector<72x64xf32>
    %87 = arith.addf %86, %85 : vector<72x64xf32>
    %c0_84 = arith.constant 0 : index
    %c0_85 = arith.constant 0 : index
    %88 = vector.load %arg12[%c0_84, %c0_85] : memref<72x64xf32, #tpu.memory_space<vmem>>, vector<72x64xf32>
    tpu.vector_store %arg12[%c0_84, %c0_85], %87 {strides = array<i32>} : memref<72x64xf32, #tpu.memory_space<vmem>>, vector<72x64xf32>,
    %c0_86 = arith.constant 0 : index
    %c2_87 = arith.constant 2 : index
    %c0_88 = arith.constant 0 : index
    %c0_89 = arith.constant 0 : index
    %89 = vector.load %arg11[%c0_86, %c2_87, %c0_88, %c0_89] : memref<5x5x8x64xbf16, #tpu.memory_space<vmem>>, vector<3x3x8x64xbf16>
    %90 = vector.shape_cast %89 : vector<3x3x8x64xbf16> to vector<72x64xbf16>
    %c2_90 = arith.constant 2 : index
    %c0_91 = arith.constant 0 : index
    %c0_92 = arith.constant 0 : index
    %91 = vector.load %arg4[%c2_90, %c0_91, %c0_92] : memref<9x64x64xbf16, #tpu.memory_space<vmem>>, vector<1x64x64xbf16>
    %92 = vector.shape_cast %91 : vector<1x64x64xbf16> to vector<64x64xbf16>
    %cst_93 = arith.constant dense<0.000000e+00> : vector<72x64xf32>
    %93 = tpu.matmul %90, %92, %cst_93 {dimension_numbers = #tpu.dot_dimension_numbers<[1], [0], [0], [1], [0, 0, 1, 1], [], []>} : vector<72x64xbf16>, vector<64x64xbf16>, vector<72x64xf32> -> vector<72x64xf32>
    %c0_94 = arith.constant 0 : index
    %c0_95 = arith.constant 0 : index
    %94 = vector.load %arg12[%c0_94, %c0_95] : memref<72x64xf32, #tpu.memory_space<vmem>>, vector<72x64xf32>
    %95 = arith.addf %94, %93 : vector<72x64xf32>
    %c0_96 = arith.constant 0 : index
    %c0_97 = arith.constant 0 : index
    %96 = vector.load %arg12[%c0_96, %c0_97] : memref<72x64xf32, #tpu.memory_space<vmem>>, vector<72x64xf32>
    tpu.vector_store %arg12[%c0_96, %c0_97], %95 {strides = array<i32>} : memref<72x64xf32, #tpu.memory_space<vmem>>, vector<72x64xf32>,
    %c1_98 = arith.constant 1 : index
    %c0_99 = arith.constant 0 : index
    %c0_100 = arith.constant 0 : index
    %c0_101 = arith.constant 0 : index
    %97 = vector.load %arg11[%c1_98, %c0_99, %c0_100, %c0_101] : memref<5x5x8x64xbf16, #tpu.memory_space<vmem>>, vector<3x3x8x64xbf16>
    %98 = vector.shape_cast %97 : vector<3x3x8x64xbf16> to vector<72x64xbf16>
    %c3_102 = arith.constant 3 : index
    %c0_103 = arith.constant 0 : index
    %c0_104 = arith.constant 0 : index
    %99 = vector.load %arg4[%c3_102, %c0_103, %c0_104] : memref<9x64x64xbf16, #tpu.memory_space<vmem>>, vector<1x64x64xbf16>
    %100 = vector.shape_cast %99 : vector<1x64x64xbf16> to vector<64x64xbf16>
    %cst_105 = arith.constant dense<0.000000e+00> : vector<72x64xf32>
    %101 = tpu.matmul %98, %100, %cst_105 {dimension_numbers = #tpu.dot_dimension_numbers<[1], [0], [0], [1], [0, 0, 1, 1], [], []>} : vector<72x64xbf16>, vector<64x64xbf16>, vector<72x64xf32> -> vector<72x64xf32>
    %c0_106 = arith.constant 0 : index
    %c0_107 = arith.constant 0 : index
    %102 = vector.load %arg12[%c0_106, %c0_107] : memref<72x64xf32, #tpu.memory_space<vmem>>, vector<72x64xf32>
    %103 = arith.addf %102, %101 : vector<72x64xf32>
    %c0_108 = arith.constant 0 : index
    %c0_109 = arith.constant 0 : index
    %104 = vector.load %arg12[%c0_108, %c0_109] : memref<72x64xf32, #tpu.memory_space<vmem>>, vector<72x64xf32>
    tpu.vector_store %arg12[%c0_108, %c0_109], %103 {strides = array<i32>} : memref<72x64xf32, #tpu.memory_space<vmem>>, vector<72x64xf32>,
    %c1_110 = arith.constant 1 : index
    %c1_111 = arith.constant 1 : index
    %c0_112 = arith.constant 0 : index
    %c0_113 = arith.constant 0 : index
    %105 = vector.load %arg11[%c1_110, %c1_111, %c0_112, %c0_113] : memref<5x5x8x64xbf16, #tpu.memory_space<vmem>>, vector<3x3x8x64xbf16>
    %106 = vector.shape_cast %105 : vector<3x3x8x64xbf16> to vector<72x64xbf16>
    %c4_114 = arith.constant 4 : index
    %c0_115 = arith.constant 0 : index
    %c0_116 = arith.constant 0 : index
    %107 = vector.load %arg4[%c4_114, %c0_115, %c0_116] : memref<9x64x64xbf16, #tpu.memory_space<vmem>>, vector<1x64x64xbf16>
    %108 = vector.shape_cast %107 : vector<1x64x64xbf16> to vector<64x64xbf16>
    %cst_117 = arith.constant dense<0.000000e+00> : vector<72x64xf32>
    %109 = tpu.matmul %106, %108, %cst_117 {dimension_numbers = #tpu.dot_dimension_numbers<[1], [0], [0], [1], [0, 0, 1, 1], [], []>} : vector<72x64xbf16>, vector<64x64xbf16>, vector<72x64xf32> -> vector<72x64xf32>
    %c0_118 = arith.constant 0 : index
    %c0_119 = arith.constant 0 : index
    %110 = vector.load %arg12[%c0_118, %c0_119] : memref<72x64xf32, #tpu.memory_space<vmem>>, vector<72x64xf32>
    %111 = arith.addf %110, %109 : vector<72x64xf32>
    %c0_120 = arith.constant 0 : index
    %c0_121 = arith.constant 0 : index
    %112 = vector.load %arg12[%c0_120, %c0_121] : memref<72x64xf32, #tpu.memory_space<vmem>>, vector<72x64xf32>
    tpu.vector_store %arg12[%c0_120, %c0_121], %111 {strides = array<i32>} : memref<72x64xf32, #tpu.memory_space<vmem>>, vector<72x64xf32>,
    %c1_122 = arith.constant 1 : index
    %c2_123 = arith.constant 2 : index
    %c0_124 = arith.constant 0 : index
    %c0_125 = arith.constant 0 : index
    %113 = vector.load %arg11[%c1_122, %c2_123, %c0_124, %c0_125] : memref<5x5x8x64xbf16, #tpu.memory_space<vmem>>, vector<3x3x8x64xbf16>
    %114 = vector.shape_cast %113 : vector<3x3x8x64xbf16> to vector<72x64xbf16>
    %c5 = arith.constant 5 : index
    %c0_126 = arith.constant 0 : index
    %c0_127 = arith.constant 0 : index
    %115 = vector.load %arg4[%c5, %c0_126, %c0_127] : memref<9x64x64xbf16, #tpu.memory_space<vmem>>, vector<1x64x64xbf16>
    %116 = vector.shape_cast %115 : vector<1x64x64xbf16> to vector<64x64xbf16>
    %cst_128 = arith.constant dense<0.000000e+00> : vector<72x64xf32>
    %117 = tpu.matmul %114, %116, %cst_128 {dimension_numbers = #tpu.dot_dimension_numbers<[1], [0], [0], [1], [0, 0, 1, 1], [], []>} : vector<72x64xbf16>, vector<64x64xbf16>, vector<72x64xf32> -> vector<72x64xf32>
    %c0_129 = arith.constant 0 : index
    %c0_130 = arith.constant 0 : index
    %118 = vector.load %arg12[%c0_129, %c0_130] : memref<72x64xf32, #tpu.memory_space<vmem>>, vector<72x64xf32>
    %119 = arith.addf %118, %117 : vector<72x64xf32>
    %c0_131 = arith.constant 0 : index
    %c0_132 = arith.constant 0 : index
    %120 = vector.load %arg12[%c0_131, %c0_132] : memref<72x64xf32, #tpu.memory_space<vmem>>, vector<72x64xf32>
    tpu.vector_store %arg12[%c0_131, %c0_132], %119 {strides = array<i32>} : memref<72x64xf32, #tpu.memory_space<vmem>>, vector<72x64xf32>,
    %c2_133 = arith.constant 2 : index
    %c0_134 = arith.constant 0 : index
    %c0_135 = arith.constant 0 : index
    %c0_136 = arith.constant 0 : index
    %121 = vector.load %arg11[%c2_133, %c0_134, %c0_135, %c0_136] : memref<5x5x8x64xbf16, #tpu.memory_space<vmem>>, vector<3x3x8x64xbf16>
    %122 = vector.shape_cast %121 : vector<3x3x8x64xbf16> to vector<72x64xbf16>
    %c6 = arith.constant 6 : index
    %c0_137 = arith.constant 0 : index
    %c0_138 = arith.constant 0 : index
    %123 = vector.load %arg4[%c6, %c0_137, %c0_138] : memref<9x64x64xbf16, #tpu.memory_space<vmem>>, vector<1x64x64xbf16>
    %124 = vector.shape_cast %123 : vector<1x64x64xbf16> to vector<64x64xbf16>
    %cst_139 = arith.constant dense<0.000000e+00> : vector<72x64xf32>
    %125 = tpu.matmul %122, %124, %cst_139 {dimension_numbers = #tpu.dot_dimension_numbers<[1], [0], [0], [1], [0, 0, 1, 1], [], []>} : vector<72x64xbf16>, vector<64x64xbf16>, vector<72x64xf32> -> vector<72x64xf32>
    %c0_140 = arith.constant 0 : index
    %c0_141 = arith.constant 0 : index
    %126 = vector.load %arg12[%c0_140, %c0_141] : memref<72x64xf32, #tpu.memory_space<vmem>>, vector<72x64xf32>
    %127 = arith.addf %126, %125 : vector<72x64xf32>
    %c0_142 = arith.constant 0 : index
    %c0_143 = arith.constant 0 : index
    %128 = vector.load %arg12[%c0_142, %c0_143] : memref<72x64xf32, #tpu.memory_space<vmem>>, vector<72x64xf32>
    tpu.vector_store %arg12[%c0_142, %c0_143], %127 {strides = array<i32>} : memref<72x64xf32, #tpu.memory_space<vmem>>, vector<72x64xf32>,
    %c2_144 = arith.constant 2 : index
    %c1_145 = arith.constant 1 : index
    %c0_146 = arith.constant 0 : index
    %c0_147 = arith.constant 0 : index
    %129 = vector.load %arg11[%c2_144, %c1_145, %c0_146, %c0_147] : memref<5x5x8x64xbf16, #tpu.memory_space<vmem>>, vector<3x3x8x64xbf16>
    %130 = vector.shape_cast %129 : vector<3x3x8x64xbf16> to vector<72x64xbf16>
    %c7 = arith.constant 7 : index
    %c0_148 = arith.constant 0 : index
    %c0_149 = arith.constant 0 : index
    %131 = vector.load %arg4[%c7, %c0_148, %c0_149] : memref<9x64x64xbf16, #tpu.memory_space<vmem>>, vector<1x64x64xbf16>
    %132 = vector.shape_cast %131 : vector<1x64x64xbf16> to vector<64x64xbf16>
    %cst_150 = arith.constant dense<0.000000e+00> : vector<72x64xf32>
    %133 = tpu.matmul %130, %132, %cst_150 {dimension_numbers = #tpu.dot_dimension_numbers<[1], [0], [0], [1], [0, 0, 1, 1], [], []>} : vector<72x64xbf16>, vector<64x64xbf16>, vector<72x64xf32> -> vector<72x64xf32>
    %c0_151 = arith.constant 0 : index
    %c0_152 = arith.constant 0 : index
    %134 = vector.load %arg12[%c0_151, %c0_152] : memref<72x64xf32, #tpu.memory_space<vmem>>, vector<72x64xf32>
    %135 = arith.addf %134, %133 : vector<72x64xf32>
    %c0_153 = arith.constant 0 : index
    %c0_154 = arith.constant 0 : index
    %136 = vector.load %arg12[%c0_153, %c0_154] : memref<72x64xf32, #tpu.memory_space<vmem>>, vector<72x64xf32>
    tpu.vector_store %arg12[%c0_153, %c0_154], %135 {strides = array<i32>} : memref<72x64xf32, #tpu.memory_space<vmem>>, vector<72x64xf32>,
    %c2_155 = arith.constant 2 : index
    %c2_156 = arith.constant 2 : index
    %c0_157 = arith.constant 0 : index
    %c0_158 = arith.constant 0 : index
    %137 = vector.load %arg11[%c2_155, %c2_156, %c0_157, %c0_158] : memref<5x5x8x64xbf16, #tpu.memory_space<vmem>>, vector<3x3x8x64xbf16>
    %138 = vector.shape_cast %137 : vector<3x3x8x64xbf16> to vector<72x64xbf16>
    %c8 = arith.constant 8 : index
    %c0_159 = arith.constant 0 : index
    %c0_160 = arith.constant 0 : index
    %139 = vector.load %arg4[%c8, %c0_159, %c0_160] : memref<9x64x64xbf16, #tpu.memory_space<vmem>>, vector<1x64x64xbf16>
    %140 = vector.shape_cast %139 : vector<1x64x64xbf16> to vector<64x64xbf16>
    %cst_161 = arith.constant dense<0.000000e+00> : vector<72x64xf32>
    %141 = tpu.matmul %138, %140, %cst_161 {dimension_numbers = #tpu.dot_dimension_numbers<[1], [0], [0], [1], [0, 0, 1, 1], [], []>} : vector<72x64xbf16>, vector<64x64xbf16>, vector<72x64xf32> -> vector<72x64xf32>
    %c0_162 = arith.constant 0 : index
    %c0_163 = arith.constant 0 : index
    %142 = vector.load %arg12[%c0_162, %c0_163] : memref<72x64xf32, #tpu.memory_space<vmem>>, vector<72x64xf32>
    %143 = arith.addf %142, %141 : vector<72x64xf32>
    %c0_164 = arith.constant 0 : index
    %c0_165 = arith.constant 0 : index
    %144 = vector.load %arg12[%c0_164, %c0_165] : memref<72x64xf32, #tpu.memory_space<vmem>>, vector<72x64xf32>
    tpu.vector_store %arg12[%c0_164, %c0_165], %143 {strides = array<i32>} : memref<72x64xf32, #tpu.memory_space<vmem>>, vector<72x64xf32>,
    %c0_166 = arith.constant 0 : index
    %c0_167 = arith.constant 0 : index
    %145 = vector.load %arg12[%c0_166, %c0_167] : memref<72x64xf32, #tpu.memory_space<vmem>>, vector<8x64xf32>
    %c0_168 = arith.constant 0 : index
    %c0_169 = arith.constant 0 : index
    %146 = vector.load %arg5[%c0_168, %c0_169] : memref<1x64xf32, #tpu.memory_space<vmem>>, vector<1x64xf32>
    %147 = vector.broadcast %146 : vector<1x64xf32> to vector<8x64xf32>
    %148 = arith.addf %145, %147 : vector<8x64xf32>
    %cst_170 = arith.constant 0.000000e+00 : f32
    %149 = vector.broadcast %cst_170 : f32 to vector<8x64xf32>
    %150 = arith.maximumf %148, %149 : vector<8x64xf32>
    %151 = arith.truncf %150 : vector<8x64xf32> to vector<8x64xbf16>
    %c0_171 = arith.constant 0 : index
    %c0_172 = arith.constant 0 : index
    %c0_173 = arith.constant 0 : index
    %152 = vector.load %arg6[%c0_171, %c0_172, %c0_173] : memref<9x64x64xbf16, #tpu.memory_space<vmem>>, vector<1x64x64xbf16>
    %153 = vector.shape_cast %152 : vector<1x64x64xbf16> to vector<64x64xbf16>
    %cst_174 = arith.constant dense<0.000000e+00> : vector<8x64xf32>
    %154 = tpu.matmul %151, %153, %cst_174 {dimension_numbers = #tpu.dot_dimension_numbers<[1], [0], [0], [1], [0, 0, 1, 1], [], []>} : vector<8x64xbf16>, vector<64x64xbf16>, vector<8x64xf32> -> vector<8x64xf32>
    %c8_175 = arith.constant 8 : index
    %c0_176 = arith.constant 0 : index
    %155 = vector.load %arg12[%c8_175, %c0_176] : memref<72x64xf32, #tpu.memory_space<vmem>>, vector<8x64xf32>
    %c0_177 = arith.constant 0 : index
    %c0_178 = arith.constant 0 : index
    %156 = vector.load %arg5[%c0_177, %c0_178] : memref<1x64xf32, #tpu.memory_space<vmem>>, vector<1x64xf32>
    %157 = vector.broadcast %156 : vector<1x64xf32> to vector<8x64xf32>
    %158 = arith.addf %155, %157 : vector<8x64xf32>
    %cst_179 = arith.constant 0.000000e+00 : f32
    %159 = vector.broadcast %cst_179 : f32 to vector<8x64xf32>
    %160 = arith.maximumf %158, %159 : vector<8x64xf32>
    %161 = arith.truncf %160 : vector<8x64xf32> to vector<8x64xbf16>
    %c1_180 = arith.constant 1 : index
    %c0_181 = arith.constant 0 : index
    %c0_182 = arith.constant 0 : index
    %162 = vector.load %arg6[%c1_180, %c0_181, %c0_182] : memref<9x64x64xbf16, #tpu.memory_space<vmem>>, vector<1x64x64xbf16>
    %163 = vector.shape_cast %162 : vector<1x64x64xbf16> to vector<64x64xbf16>
    %cst_183 = arith.constant dense<0.000000e+00> : vector<8x64xf32>
    %164 = tpu.matmul %161, %163, %cst_183 {dimension_numbers = #tpu.dot_dimension_numbers<[1], [0], [0], [1], [0, 0, 1, 1], [], []>} : vector<8x64xbf16>, vector<64x64xbf16>, vector<8x64xf32> -> vector<8x64xf32>
    %165 = arith.addf %154, %164 : vector<8x64xf32>
    %c16 = arith.constant 16 : index
    %c0_184 = arith.constant 0 : index
    %166 = vector.load %arg12[%c16, %c0_184] : memref<72x64xf32, #tpu.memory_space<vmem>>, vector<8x64xf32>
    %c0_185 = arith.constant 0 : index
    %c0_186 = arith.constant 0 : index
    %167 = vector.load %arg5[%c0_185, %c0_186] : memref<1x64xf32, #tpu.memory_space<vmem>>, vector<1x64xf32>
    %168 = vector.broadcast %167 : vector<1x64xf32> to vector<8x64xf32>
    %169 = arith.addf %166, %168 : vector<8x64xf32>
    %cst_187 = arith.constant 0.000000e+00 : f32
    %170 = vector.broadcast %cst_187 : f32 to vector<8x64xf32>
    %171 = arith.maximumf %169, %170 : vector<8x64xf32>
    %172 = arith.truncf %171 : vector<8x64xf32> to vector<8x64xbf16>
    %c2_188 = arith.constant 2 : index
    %c0_189 = arith.constant 0 : index
    %c0_190 = arith.constant 0 : index
    %173 = vector.load %arg6[%c2_188, %c0_189, %c0_190] : memref<9x64x64xbf16, #tpu.memory_space<vmem>>, vector<1x64x64xbf16>
    %174 = vector.shape_cast %173 : vector<1x64x64xbf16> to vector<64x64xbf16>
    %cst_191 = arith.constant dense<0.000000e+00> : vector<8x64xf32>
    %175 = tpu.matmul %172, %174, %cst_191 {dimension_numbers = #tpu.dot_dimension_numbers<[1], [0], [0], [1], [0, 0, 1, 1], [], []>} : vector<8x64xbf16>, vector<64x64xbf16>, vector<8x64xf32> -> vector<8x64xf32>
    %176 = arith.addf %165, %175 : vector<8x64xf32>
    %c24 = arith.constant 24 : index
    %c0_192 = arith.constant 0 : index
    %177 = vector.load %arg12[%c24, %c0_192] : memref<72x64xf32, #tpu.memory_space<vmem>>, vector<8x64xf32>
    %c0_193 = arith.constant 0 : index
    %c0_194 = arith.constant 0 : index
    %178 = vector.load %arg5[%c0_193, %c0_194] : memref<1x64xf32, #tpu.memory_space<vmem>>, vector<1x64xf32>
    %179 = vector.broadcast %178 : vector<1x64xf32> to vector<8x64xf32>
    %180 = arith.addf %177, %179 : vector<8x64xf32>
    %cst_195 = arith.constant 0.000000e+00 : f32
    %181 = vector.broadcast %cst_195 : f32 to vector<8x64xf32>
    %182 = arith.maximumf %180, %181 : vector<8x64xf32>
    %183 = arith.truncf %182 : vector<8x64xf32> to vector<8x64xbf16>
    %c3_196 = arith.constant 3 : index
    %c0_197 = arith.constant 0 : index
    %c0_198 = arith.constant 0 : index
    %184 = vector.load %arg6[%c3_196, %c0_197, %c0_198] : memref<9x64x64xbf16, #tpu.memory_space<vmem>>, vector<1x64x64xbf16>
    %185 = vector.shape_cast %184 : vector<1x64x64xbf16> to vector<64x64xbf16>
    %cst_199 = arith.constant dense<0.000000e+00> : vector<8x64xf32>
    %186 = tpu.matmul %183, %185, %cst_199 {dimension_numbers = #tpu.dot_dimension_numbers<[1], [0], [0], [1], [0, 0, 1, 1], [], []>} : vector<8x64xbf16>, vector<64x64xbf16>, vector<8x64xf32> -> vector<8x64xf32>
    %187 = arith.addf %176, %186 : vector<8x64xf32>
    %c32 = arith.constant 32 : index
    %c0_200 = arith.constant 0 : index
    %188 = vector.load %arg12[%c32, %c0_200] : memref<72x64xf32, #tpu.memory_space<vmem>>, vector<8x64xf32>
    %c0_201 = arith.constant 0 : index
    %c0_202 = arith.constant 0 : index
    %189 = vector.load %arg5[%c0_201, %c0_202] : memref<1x64xf32, #tpu.memory_space<vmem>>, vector<1x64xf32>
    %190 = vector.broadcast %189 : vector<1x64xf32> to vector<8x64xf32>
    %191 = arith.addf %188, %190 : vector<8x64xf32>
    %cst_203 = arith.constant 0.000000e+00 : f32
    %192 = vector.broadcast %cst_203 : f32 to vector<8x64xf32>
    %193 = arith.maximumf %191, %192 : vector<8x64xf32>
    %194 = arith.truncf %193 : vector<8x64xf32> to vector<8x64xbf16>
    %c4_204 = arith.constant 4 : index
    %c0_205 = arith.constant 0 : index
    %c0_206 = arith.constant 0 : index
    %195 = vector.load %arg6[%c4_204, %c0_205, %c0_206] : memref<9x64x64xbf16, #tpu.memory_space<vmem>>, vector<1x64x64xbf16>
    %196 = vector.shape_cast %195 : vector<1x64x64xbf16> to vector<64x64xbf16>
    %cst_207 = arith.constant dense<0.000000e+00> : vector<8x64xf32>
    %197 = tpu.matmul %194, %196, %cst_207 {dimension_numbers = #tpu.dot_dimension_numbers<[1], [0], [0], [1], [0, 0, 1, 1], [], []>} : vector<8x64xbf16>, vector<64x64xbf16>, vector<8x64xf32> -> vector<8x64xf32>
    %198 = arith.addf %187, %197 : vector<8x64xf32>
    %c40 = arith.constant 40 : index
    %c0_208 = arith.constant 0 : index
    %199 = vector.load %arg12[%c40, %c0_208] : memref<72x64xf32, #tpu.memory_space<vmem>>, vector<8x64xf32>
    %c0_209 = arith.constant 0 : index
    %c0_210 = arith.constant 0 : index
    %200 = vector.load %arg5[%c0_209, %c0_210] : memref<1x64xf32, #tpu.memory_space<vmem>>, vector<1x64xf32>
    %201 = vector.broadcast %200 : vector<1x64xf32> to vector<8x64xf32>
    %202 = arith.addf %199, %201 : vector<8x64xf32>
    %cst_211 = arith.constant 0.000000e+00 : f32
    %203 = vector.broadcast %cst_211 : f32 to vector<8x64xf32>
    %204 = arith.maximumf %202, %203 : vector<8x64xf32>
    %205 = arith.truncf %204 : vector<8x64xf32> to vector<8x64xbf16>
    %c5_212 = arith.constant 5 : index
    %c0_213 = arith.constant 0 : index
    %c0_214 = arith.constant 0 : index
    %206 = vector.load %arg6[%c5_212, %c0_213, %c0_214] : memref<9x64x64xbf16, #tpu.memory_space<vmem>>, vector<1x64x64xbf16>
    %207 = vector.shape_cast %206 : vector<1x64x64xbf16> to vector<64x64xbf16>
    %cst_215 = arith.constant dense<0.000000e+00> : vector<8x64xf32>
    %208 = tpu.matmul %205, %207, %cst_215 {dimension_numbers = #tpu.dot_dimension_numbers<[1], [0], [0], [1], [0, 0, 1, 1], [], []>} : vector<8x64xbf16>, vector<64x64xbf16>, vector<8x64xf32> -> vector<8x64xf32>
    %209 = arith.addf %198, %208 : vector<8x64xf32>
    %c48 = arith.constant 48 : index
    %c0_216 = arith.constant 0 : index
    %210 = vector.load %arg12[%c48, %c0_216] : memref<72x64xf32, #tpu.memory_space<vmem>>, vector<8x64xf32>
    %c0_217 = arith.constant 0 : index
    %c0_218 = arith.constant 0 : index
    %211 = vector.load %arg5[%c0_217, %c0_218] : memref<1x64xf32, #tpu.memory_space<vmem>>, vector<1x64xf32>
    %212 = vector.broadcast %211 : vector<1x64xf32> to vector<8x64xf32>
    %213 = arith.addf %210, %212 : vector<8x64xf32>
    %cst_219 = arith.constant 0.000000e+00 : f32
    %214 = vector.broadcast %cst_219 : f32 to vector<8x64xf32>
    %215 = arith.maximumf %213, %214 : vector<8x64xf32>
    %216 = arith.truncf %215 : vector<8x64xf32> to vector<8x64xbf16>
    %c6_220 = arith.constant 6 : index
    %c0_221 = arith.constant 0 : index
    %c0_222 = arith.constant 0 : index
    %217 = vector.load %arg6[%c6_220, %c0_221, %c0_222] : memref<9x64x64xbf16, #tpu.memory_space<vmem>>, vector<1x64x64xbf16>
    %218 = vector.shape_cast %217 : vector<1x64x64xbf16> to vector<64x64xbf16>
    %cst_223 = arith.constant dense<0.000000e+00> : vector<8x64xf32>
    %219 = tpu.matmul %216, %218, %cst_223 {dimension_numbers = #tpu.dot_dimension_numbers<[1], [0], [0], [1], [0, 0, 1, 1], [], []>} : vector<8x64xbf16>, vector<64x64xbf16>, vector<8x64xf32> -> vector<8x64xf32>
    %220 = arith.addf %209, %219 : vector<8x64xf32>
    %c56 = arith.constant 56 : index
    %c0_224 = arith.constant 0 : index
    %221 = vector.load %arg12[%c56, %c0_224] : memref<72x64xf32, #tpu.memory_space<vmem>>, vector<8x64xf32>
    %c0_225 = arith.constant 0 : index
    %c0_226 = arith.constant 0 : index
    %222 = vector.load %arg5[%c0_225, %c0_226] : memref<1x64xf32, #tpu.memory_space<vmem>>, vector<1x64xf32>
    %223 = vector.broadcast %222 : vector<1x64xf32> to vector<8x64xf32>
    %224 = arith.addf %221, %223 : vector<8x64xf32>
    %cst_227 = arith.constant 0.000000e+00 : f32
    %225 = vector.broadcast %cst_227 : f32 to vector<8x64xf32>
    %226 = arith.maximumf %224, %225 : vector<8x64xf32>
    %227 = arith.truncf %226 : vector<8x64xf32> to vector<8x64xbf16>
    %c7_228 = arith.constant 7 : index
    %c0_229 = arith.constant 0 : index
    %c0_230 = arith.constant 0 : index
    %228 = vector.load %arg6[%c7_228, %c0_229, %c0_230] : memref<9x64x64xbf16, #tpu.memory_space<vmem>>, vector<1x64x64xbf16>
    %229 = vector.shape_cast %228 : vector<1x64x64xbf16> to vector<64x64xbf16>
    %cst_231 = arith.constant dense<0.000000e+00> : vector<8x64xf32>
    %230 = tpu.matmul %227, %229, %cst_231 {dimension_numbers = #tpu.dot_dimension_numbers<[1], [0], [0], [1], [0, 0, 1, 1], [], []>} : vector<8x64xbf16>, vector<64x64xbf16>, vector<8x64xf32> -> vector<8x64xf32>
    %231 = arith.addf %220, %230 : vector<8x64xf32>
    %c64 = arith.constant 64 : index
    %c0_232 = arith.constant 0 : index
    %232 = vector.load %arg12[%c64, %c0_232] : memref<72x64xf32, #tpu.memory_space<vmem>>, vector<8x64xf32>
    %c0_233 = arith.constant 0 : index
    %c0_234 = arith.constant 0 : index
    %233 = vector.load %arg5[%c0_233, %c0_234] : memref<1x64xf32, #tpu.memory_space<vmem>>, vector<1x64xf32>
    %234 = vector.broadcast %233 : vector<1x64xf32> to vector<8x64xf32>
    %235 = arith.addf %232, %234 : vector<8x64xf32>
    %cst_235 = arith.constant 0.000000e+00 : f32
    %236 = vector.broadcast %cst_235 : f32 to vector<8x64xf32>
    %237 = arith.maximumf %235, %236 : vector<8x64xf32>
    %238 = arith.truncf %237 : vector<8x64xf32> to vector<8x64xbf16>
    %c8_236 = arith.constant 8 : index
    %c0_237 = arith.constant 0 : index
    %c0_238 = arith.constant 0 : index
    %239 = vector.load %arg6[%c8_236, %c0_237, %c0_238] : memref<9x64x64xbf16, #tpu.memory_space<vmem>>, vector<1x64x64xbf16>
    %240 = vector.shape_cast %239 : vector<1x64x64xbf16> to vector<64x64xbf16>
    %cst_239 = arith.constant dense<0.000000e+00> : vector<8x64xf32>
    %241 = tpu.matmul %238, %240, %cst_239 {dimension_numbers = #tpu.dot_dimension_numbers<[1], [0], [0], [1], [0, 0, 1, 1], [], []>} : vector<8x64xbf16>, vector<64x64xbf16>, vector<8x64xf32> -> vector<8x64xf32>
    %242 = arith.addf %231, %241 : vector<8x64xf32>
    %c0_240 = arith.constant 0 : index
    %c0_241 = arith.constant 0 : index
    %243 = vector.load %arg7[%c0_240, %c0_241] : memref<1x64xf32, #tpu.memory_space<vmem>>, vector<1x64xf32>
    %244 = vector.broadcast %243 : vector<1x64xf32> to vector<8x64xf32>
    %245 = arith.addf %242, %244 : vector<8x64xf32>
    %cst_242 = arith.constant 0.000000e+00 : f32
    %246 = vector.broadcast %cst_242 : f32 to vector<8x64xf32>
    %247 = arith.maximumf %245, %246 : vector<8x64xf32>
    %248 = arith.truncf %247 : vector<8x64xf32> to vector<8x64xbf16>
    %c0_243 = arith.constant 0 : index
    %c0_244 = arith.constant 0 : index
    %249 = vector.load %arg8[%c0_243, %c0_244] : memref<64x128xbf16, #tpu.memory_space<vmem>>, vector<64x128xbf16>
    %cst_245 = arith.constant dense<0.000000e+00> : vector<8x128xf32>
    %250 = tpu.matmul %248, %249, %cst_245 {dimension_numbers = #tpu.dot_dimension_numbers<[1], [0], [0], [1], [0, 0, 1, 1], [], []>} : vector<8x64xbf16>, vector<64x128xbf16>, vector<8x128xf32> -> vector<8x128xf32>
    %c0_246 = arith.constant 0 : index
    %c0_247 = arith.constant 0 : index
    %251 = vector.load %arg9[%c0_246, %c0_247] : memref<1x128xf32, #tpu.memory_space<vmem>>, vector<1x128xf32>
    %252 = vector.broadcast %251 : vector<1x128xf32> to vector<8x128xf32>
    %253 = arith.addf %250, %252 : vector<8x128xf32>
    %c0_248 = arith.constant 0 : index
    %c0_249 = arith.constant 0 : index
    %254 = vector.load %arg10[%c0_248, %c0_249] : memref<8x128xf32, #tpu.memory_space<vmem>>, vector<8x128xf32>
    tpu.vector_store %arg10[%c0_248, %c0_249], %253 {strides = array<i32>} : memref<8x128xf32, #tpu.memory_space<vmem>>, vector<8x128xf32>,
    return
  }
  func.func @transform_0(%arg0: i32) -> (i32, i32, i32, i32) {
    %c0_i32 = arith.constant 0 : i32
    %c0_i32_0 = arith.constant 0 : i32
    %c0_i32_1 = arith.constant 0 : i32
    %c0_i32_2 = arith.constant 0 : i32
    return %c0_i32, %c0_i32_0, %arg0, %c0_i32_1 : i32, i32, i32, i32
  }
  func.func @transform_1(%arg0: i32) -> (i32, i32) {
    %c0_i32 = arith.constant 0 : i32
    %c0_i32_0 = arith.constant 0 : i32
    %c0_i32_1 = arith.constant 0 : i32
    return %c0_i32, %c0_i32_0 : i32, i32
  }
  func.func @transform_2(%arg0: i32) -> (i32, i32) {
    %c0_i32 = arith.constant 0 : i32
    %c0_i32_0 = arith.constant 0 : i32
    %c0_i32_1 = arith.constant 0 : i32
    return %c0_i32, %c0_i32_0 : i32, i32
  }
  func.func @transform_3(%arg0: i32) -> (i32, i32, i32) {
    %c0_i32 = arith.constant 0 : i32
    %c0_i32_0 = arith.constant 0 : i32
    %c0_i32_1 = arith.constant 0 : i32
    %c0_i32_2 = arith.constant 0 : i32
    return %c0_i32, %c0_i32_0, %c0_i32_1 : i32, i32, i32
  }
  func.func @transform_4(%arg0: i32) -> (i32, i32) {
    %c0_i32 = arith.constant 0 : i32
    %c0_i32_0 = arith.constant 0 : i32
    %c0_i32_1 = arith.constant 0 : i32
    return %c0_i32, %c0_i32_0 : i32, i32
  }
  func.func @transform_5(%arg0: i32) -> (i32, i32, i32) {
    %c0_i32 = arith.constant 0 : i32
    %c0_i32_0 = arith.constant 0 : i32
    %c0_i32_1 = arith.constant 0 : i32
    %c0_i32_2 = arith.constant 0 : i32
    return %c0_i32, %c0_i32_0, %c0_i32_1 : i32, i32, i32
  }
  func.func @transform_6(%arg0: i32) -> (i32, i32) {
    %c0_i32 = arith.constant 0 : i32
    %c0_i32_0 = arith.constant 0 : i32
    %c0_i32_1 = arith.constant 0 : i32
    return %c0_i32, %c0_i32_0 : i32, i32
  }
  func.func @transform_7(%arg0: i32) -> (i32, i32) {
    %c0_i32 = arith.constant 0 : i32
    %c0_i32_0 = arith.constant 0 : i32
    %c0_i32_1 = arith.constant 0 : i32
    return %c0_i32, %c0_i32_0 : i32, i32
  }
  func.func @transform_8(%arg0: i32) -> (i32, i32) {
    %c0_i32 = arith.constant 0 : i32
    %c0_i32_0 = arith.constant 0 : i32
    %c0_i32_1 = arith.constant 0 : i32
    return %c0_i32, %c0_i32_0 : i32, i32
  }
  func.func @transform_9(%arg0: i32) -> (i32, i32) {
    %c0_i32 = arith.constant 0 : i32
    %c0_i32_0 = arith.constant 0 : i32
    return %arg0, %c0_i32 : i32, i32
  }
}

</mosaic_0001>

<llo_original>
// kernel: _lambda_.1
$region0: #{_lambda_.1}
  #allocation0 [shape = 'u32[]', space=smem, size = 0x4, offset = 0x4, fixed_abs, tag = 'smem constant byte address 0x4 - core index']
  #allocation1 [shape = 'u32[72,128]{1,0:T(1,128)}', space=vmem, size = 0x9000, scoped, tag = 'internal scratch']
  #allocation2 [shape = 'bf16[5,5,8,64]{3,2,1,0:T(8,128)(2,1)}', space=vmem, size = 0xc800, scoped, tag = 'scratch operand']
  #allocation3 [shape = 'f32[72,64]{1,0:T(8,128)}', space=vmem, size = 0x9000, scoped, tag = 'scratch operand']
  %s0 = inlined_call_operand.vmem [shape: bf16[5,5,32,128], index: 0, kind: input, shape index: {}]
  %s1 = inlined_call_operand.vmem [shape: bf16[128,64], index: 1, kind: input, shape index: {}]
  %s2 = inlined_call_operand.vmem [shape: f32[1,64], index: 2, kind: input, shape index: {}]
  %s3 = inlined_call_operand.vmem [shape: bf16[9,64,64], index: 3, kind: input, shape index: {}]
  %s4 = inlined_call_operand.vmem [shape: f32[1,64], index: 4, kind: input, shape index: {}]
  %s5 = inlined_call_operand.vmem [shape: bf16[9,64,64], index: 5, kind: input, shape index: {}]
  %s6 = inlined_call_operand.vmem [shape: f32[1,64], index: 6, kind: input, shape index: {}]
  %s7 = inlined_call_operand.vmem [shape: bf16[64,128], index: 7, kind: input, shape index: {}]
  %s8 = inlined_call_operand.vmem [shape: f32[1,128], index: 8, kind: input, shape index: {}]
  %s9 = inlined_call_operand.hbm [shape: f32[32,128], index: 9, kind: output, shape index: {}]
  %s10 = sld [smem:[#allocation0]]
  $region110: #{_lambda_.1} parent=0
    _
  %s12 = ssub.s32 1, %s10
  %s13 = scalar_select 0, %s12, %s10
  $region1: #{_lambda_.1} parent=0
    #allocation4 [shape = 'u8[102400]{0}', space=vmem, size = 0x19000, scoped, tag = 'input window, operand 0']
    #allocation5 [shape = 'u8[8192]{0}', space=vmem, size = 0x2000, scoped, tag = 'output window, operand 0']
    #allocation6 [shape = 's32[2]{0}', space=sflag, size = 0x8, scoped, tag = 'scoped memory for _lambda_.1']
    %14 = vsyncpa [#allocation6], 0
    %s15 = scalar_lea.sflag [#allocation6], 1
    %16 = vsyncpa %s15, 0
    loop: start=0, step=1, limit=6
    $region2: #{_lambda_.1} parent=1 // loop_pre_header
      _
    $region3: #{_lambda_.1} parent=1 // loop_header
      %s18 = sphi 0, %s22
      %p19 = scmp.ge.s32.totalorder %s18, 6
      %s28 = sphi 0, %s30
      %s31 = sphi 0, %s28
      %s32 = sphi 0, %s31
      %s48 = sphi 0, %s32
      %s52 = sphi 0, %s52
      %s54 = sphi 0, %s52
      %s55 = sphi 0, %s54
      %s69 = sphi 0, %s55
      %s73 = sphi 0, %s73
      %s75 = sphi 0, %s73
      %s76 = sphi 0, %s75
      %s90 = sphi 0, %s76
      %s94 = sphi 0, %s94
      %s96 = sphi 0, %s94
      %s97 = sphi 0, %s96
      %s111 = sphi 0, %s97
      %s115 = sphi 0, %s115
      %s117 = sphi 0, %s115
      %s118 = sphi 0, %s117
      %s132 = sphi 0, %s118
      %s136 = sphi 0, %s136
      %s138 = sphi 0, %s136
      %s139 = sphi 0, %s138
      %s153 = sphi 0, %s139
      %s157 = sphi 0, %s157
      %s159 = sphi 0, %s157
      %s160 = sphi 0, %s159
      %s174 = sphi 0, %s160
      %s178 = sphi 0, %s178
      %s180 = sphi 0, %s178
      %s181 = sphi 0, %s180
      %s195 = sphi 0, %s181
      %s199 = sphi 0, %s199
      %s201 = sphi 0, %s199
      %s202 = sphi 0, %s201
      %s216 = sphi 0, %s202
      %s222 = sphi 0, %s224
      %s225 = sphi 0, %s222
      %s226 = sphi 0, %s225
      %s242 = sphi 0, %s226
    $region4: #{_lambda_.1} parent=1 // loop_header_branch
      %21 = sbr.rel (%p19) target = $region8
    $region5: #{_lambda_.1} parent=1 // loop_body
      %s23 = ssub.s32 %s18, 1
      %s24 = ssub.s32 %s18, 2
      %s25 = sadd.s32 %s18, 1
      %s26 = ssub.s32 %s18, %s25
      %p27 = scmp.eq.s32.totalorder %s26, 0
      %s29 = sadd.s32 %s28, 1
      %s30 = scalar_select %p27, %s28, %s29
      %p33 = pneg %p27
      %p34 = scmp.eq.s32.totalorder %s18, 3
      %p35 = por %p33, %p34
      %p36 = scmp.ne.s32.totalorder %s28, %s31
      %p37 = scmp.eq.s32.totalorder %s18, 0
      %p38 = por %p36, %p37
      %p39 = scmp.ne.s32.totalorder %s28, %s31
      %p40 = scmp.eq.s32.totalorder %s23, 3
      %p41 = por %p39, %p40
      %p42 = scmp.ne.s32.totalorder %s31, %s32
      %p43 = scmp.eq.s32.totalorder %s23, 0
      %p44 = por %p42, %p43
      %p45 = scmp.ne.s32.totalorder %s31, %s32
      %p46 = scmp.eq.s32.totalorder %s24, 3
      %p47 = por %p45, %p46
      %p49 = scmp.ne.s32.totalorder %s32, %s48
      %p50 = scmp.eq.s32.totalorder %s24, 0
      %p51 = por %p49, %p50
      %s53 = sadd.s32 %s52, 1
      %p56 = scmp.eq.s32.totalorder %s18, 3
      %p57 = scmp.ne.s32.totalorder %s52, %s54
      %p58 = scmp.eq.s32.totalorder %s18, 0
      %p59 = por %p57, %p58
      %p60 = scmp.ne.s32.totalorder %s52, %s54
      %p61 = scmp.eq.s32.totalorder %s23, 3
      %p62 = por %p60, %p61
      %p63 = scmp.ne.s32.totalorder %s54, %s55
      %p64 = scmp.eq.s32.totalorder %s23, 0
      %p65 = por %p63, %p64
      %p66 = scmp.ne.s32.totalorder %s54, %s55
      %p67 = scmp.eq.s32.totalorder %s24, 3
      %p68 = por %p66, %p67
      %p70 = scmp.ne.s32.totalorder %s55, %s69
      %p71 = scmp.eq.s32.totalorder %s24, 0
      %p72 = por %p70, %p71
      %s74 = sadd.s32 %s73, 1
      %p77 = scmp.eq.s32.totalorder %s18, 3
      %p78 = scmp.ne.s32.totalorder %s73, %s75
      %p79 = scmp.eq.s32.totalorder %s18, 0
      %p80 = por %p78, %p79
      %p81 = scmp.ne.s32.totalorder %s73, %s75
      %p82 = scmp.eq.s32.totalorder %s23, 3
      %p83 = por %p81, %p82
      %p84 = scmp.ne.s32.totalorder %s75, %s76
      %p85 = scmp.eq.s32.totalorder %s23, 0
      %p86 = por %p84, %p85
      %p87 = scmp.ne.s32.totalorder %s75, %s76
      %p88 = scmp.eq.s32.totalorder %s24, 3
      %p89 = por %p87, %p88
      %p91 = scmp.ne.s32.totalorder %s76, %s90
      %p92 = scmp.eq.s32.totalorder %s24, 0
      %p93 = por %p91, %p92
      %s95 = sadd.s32 %s94, 1
      %p98 = scmp.eq.s32.totalorder %s18, 3
      %p99 = scmp.ne.s32.totalorder %s94, %s96
      %p100 = scmp.eq.s32.totalorder %s18, 0
      %p101 = por %p99, %p100
      %p102 = scmp.ne.s32.totalorder %s94, %s96
      %p103 = scmp.eq.s32.totalorder %s23, 3
      %p104 = por %p102, %p103
      %p105 = scmp.ne.s32.totalorder %s96, %s97
      %p106 = scmp.eq.s32.totalorder %s23, 0
      %p107 = por %p105, %p106
      %p108 = scmp.ne.s32.totalorder %s96, %s97
      %p109 = scmp.eq.s32.totalorder %s24, 3
      %p110 = por %p108, %p109
      %p112 = scmp.ne.s32.totalorder %s97, %s111
      %p113 = scmp.eq.s32.totalorder %s24, 0
      %p114 = por %p112, %p113
      %s116 = sadd.s32 %s115, 1
      %p119 = scmp.eq.s32.totalorder %s18, 3
      %p120 = scmp.ne.s32.totalorder %s115, %s117
      %p121 = scmp.eq.s32.totalorder %s18, 0
      %p122 = por %p120, %p121
      %p123 = scmp.ne.s32.totalorder %s115, %s117
      %p124 = scmp.eq.s32.totalorder %s23, 3
      %p125 = por %p123, %p124
      %p126 = scmp.ne.s32.totalorder %s117, %s118
      %p127 = scmp.eq.s32.totalorder %s23, 0
      %p128 = por %p126, %p127
      %p129 = scmp.ne.s32.totalorder %s117, %s118
      %p130 = scmp.eq.s32.totalorder %s24, 3
      %p131 = por %p129, %p130
      %p133 = scmp.ne.s32.totalorder %s118, %s132
      %p134 = scmp.eq.s32.totalorder %s24, 0
      %p135 = por %p133, %p134
      %s137 = sadd.s32 %s136, 1
      %p140 = scmp.eq.s32.totalorder %s18, 3
      %p141 = scmp.ne.s32.totalorder %s136, %s138
      %p142 = scmp.eq.s32.totalorder %s18, 0
      %p143 = por %p141, %p142
      %p144 = scmp.ne.s32.totalorder %s136, %s138
      %p145 = scmp.eq.s32.totalorder %s23, 3
      %p146 = por %p144, %p145
      %p147 = scmp.ne.s32.totalorder %s138, %s139
      %p148 = scmp.eq.s32.totalorder %s23, 0
      %p149 = por %p147, %p148
      %p150 = scmp.ne.s32.totalorder %s138, %s139
      %p151 = scmp.eq.s32.totalorder %s24, 3
      %p152 = por %p150, %p151
      %p154 = scmp.ne.s32.totalorder %s139, %s153
      %p155 = scmp.eq.s32.totalorder %s24, 0
      %p156 = por %p154, %p155
      %s158 = sadd.s32 %s157, 1
      %p161 = scmp.eq.s32.totalorder %s18, 3
      %p162 = scmp.ne.s32.totalorder %s157, %s159
      %p163 = scmp.eq.s32.totalorder %s18, 0
      %p164 = por %p162, %p163
      %p165 = scmp.ne.s32.totalorder %s157, %s159
      %p166 = scmp.eq.s32.totalorder %s23, 3
      %p167 = por %p165, %p166
      %p168 = scmp.ne.s32.totalorder %s159, %s160
      %p169 = scmp.eq.s32.totalorder %s23, 0
      %p170 = por %p168, %p169
      %p171 = scmp.ne.s32.totalorder %s159, %s160
      %p172 = scmp.eq.s32.totalorder %s24, 3
      %p173 = por %p171, %p172
      %p175 = scmp.ne.s32.totalorder %s160, %s174
      %p176 = scmp.eq.s32.totalorder %s24, 0
      %p177 = por %p175, %p176
      %s179 = sadd.s32 %s178, 1
      %p182 = scmp.eq.s32.totalorder %s18, 3
      %p183 = scmp.ne.s32.totalorder %s178, %s180
      %p184 = scmp.eq.s32.totalorder %s18, 0
      %p185 = por %p183, %p184
      %p186 = scmp.ne.s32.totalorder %s178, %s180
      %p187 = scmp.eq.s32.totalorder %s23, 3
      %p188 = por %p186, %p187
      %p189 = scmp.ne.s32.totalorder %s180, %s181
      %p190 = scmp.eq.s32.totalorder %s23, 0
      %p191 = por %p189, %p190
      %p192 = scmp.ne.s32.totalorder %s180, %s181
      %p193 = scmp.eq.s32.totalorder %s24, 3
      %p194 = por %p192, %p193
      %p196 = scmp.ne.s32.totalorder %s181, %s195
      %p197 = scmp.eq.s32.totalorder %s24, 0
      %p198 = por %p196, %p197
      %s200 = sadd.s32 %s199, 1
      %p203 = scmp.eq.s32.totalorder %s18, 3
      %p204 = scmp.ne.s32.totalorder %s199, %s201
      %p205 = scmp.eq.s32.totalorder %s18, 0
      %p206 = por %p204, %p205
      %p207 = scmp.ne.s32.totalorder %s199, %s201
      %p208 = scmp.eq.s32.totalorder %s23, 3
      %p209 = por %p207, %p208
      %p210 = scmp.ne.s32.totalorder %s201, %s202
      %p211 = scmp.eq.s32.totalorder %s23, 0
      %p212 = por %p210, %p211
      %p213 = scmp.ne.s32.totalorder %s201, %s202
      %p214 = scmp.eq.s32.totalorder %s24, 3
      %p215 = por %p213, %p214
      %p217 = scmp.ne.s32.totalorder %s202, %s216
      %p218 = scmp.eq.s32.totalorder %s24, 0
      %p219 = por %p217, %p218
      %s220 = ssub.s32 %s18, %s25
      %p221 = scmp.eq.s32.totalorder %s220, 0
      %s223 = sadd.s32 %s222, 1
      %s224 = scalar_select %p221, %s222, %s223
      %p227 = pneg %p221
      %p228 = scmp.eq.s32.totalorder %s18, 3
      %p229 = por %p227, %p228
      %p230 = scmp.ne.s32.totalorder %s222, %s225
      %p231 = scmp.eq.s32.totalorder %s18, 0
      %p232 = por %p230, %p231
      %p233 = scmp.ne.s32.totalorder %s222, %s225
      %p234 = scmp.eq.s32.totalorder %s23, 3
      %p235 = por %p233, %p234
      %p236 = scmp.ne.s32.totalorder %s225, %s226
      %p237 = scmp.eq.s32.totalorder %s23, 0
      %p238 = por %p236, %p237
      %p239 = scmp.ne.s32.totalorder %s225, %s226
      %p240 = scmp.eq.s32.totalorder %s24, 3
      %p241 = por %p239, %p240
      %p243 = scmp.ne.s32.totalorder %s226, %s242
      %p244 = scmp.eq.s32.totalorder %s24, 0
      %p245 = por %p243, %p244
      %p246 = scmp.le.s32.totalorder 1, %s18
      %p247 = scmp.lt.s32.totalorder %s18, 5
      %p248 = pnand %p246, %p247
      %p249 = pneg %p248
      // Predicated region
      $region9: #{_lambda_.1} parent=5 // pred_check
        _
      $region10: #{_lambda_.1} parent=5 // pred_check_branch
        %251 = sbr.rel (%p248) target = $region12
      $region11: #{_lambda_.1} parent=5 // pred_region
        %s252 = ssub.s32 %s18, 1
        // Predicated region
        $region13: #{_lambda_.1} parent=11 // pred_check
          %p253 = pneg %p65
        $region14: #{_lambda_.1} parent=11 // pred_check_branch
          %255 = sbr.rel (%p253) target = $region16
        $region15: #{_lambda_.1} parent=11 // pred_region
          _
        $region16: #{_lambda_.1} parent=11 // pred_fallthru
          _
        // Predicated region
        $region17: #{_lambda_.1} parent=11 // pred_check
          %p256 = pneg %p86
        $region18: #{_lambda_.1} parent=11 // pred_check_branch
          %258 = sbr.rel (%p256) target = $region20
        $region19: #{_lambda_.1} parent=11 // pred_region
          _
        $region20: #{_lambda_.1} parent=11 // pred_fallthru
          _
        // Predicated region
        $region21: #{_lambda_.1} parent=11 // pred_check
          %p259 = pneg %p107
        $region22: #{_lambda_.1} parent=11 // pred_check_branch
          %261 = sbr.rel (%p259) target = $region24
        $region23: #{_lambda_.1} parent=11 // pred_region
          _
        $region24: #{_lambda_.1} parent=11 // pred_fallthru
          _
        // Predicated region
        $region25: #{_lambda_.1} parent=11 // pred_check
          %p262 = pneg %p128
        $region26: #{_lambda_.1} parent=11 // pred_check_branch
          %264 = sbr.rel (%p262) target = $region28
        $region27: #{_lambda_.1} parent=11 // pred_region
          _
        $region28: #{_lambda_.1} parent=11 // pred_fallthru
          _
        // Predicated region
        $region29: #{_lambda_.1} parent=11 // pred_check
          %p265 = pneg %p149
        $region30: #{_lambda_.1} parent=11 // pred_check_branch
          %267 = sbr.rel (%p265) target = $region32
        $region31: #{_lambda_.1} parent=11 // pred_region
          _
        $region32: #{_lambda_.1} parent=11 // pred_fallthru
          _
        // Predicated region
        $region33: #{_lambda_.1} parent=11 // pred_check
          %p268 = pneg %p170
        $region34: #{_lambda_.1} parent=11 // pred_check_branch
          %270 = sbr.rel (%p268) target = $region36
        $region35: #{_lambda_.1} parent=11 // pred_region
          _
        $region36: #{_lambda_.1} parent=11 // pred_fallthru
          _
        // Predicated region
        $region37: #{_lambda_.1} parent=11 // pred_check
          %p271 = pneg %p191
        $region38: #{_lambda_.1} parent=11 // pred_check_branch
          %273 = sbr.rel (%p271) target = $region40
        $region39: #{_lambda_.1} parent=11 // pred_region
          _
        $region40: #{_lambda_.1} parent=11 // pred_fallthru
          _
        // Predicated region
        $region41: #{_lambda_.1} parent=11 // pred_check
          %p274 = pneg %p212
        $region42: #{_lambda_.1} parent=11 // pred_check_branch
          %276 = sbr.rel (%p274) target = $region44
        $region43: #{_lambda_.1} parent=11 // pred_region
          _
        $region44: #{_lambda_.1} parent=11 // pred_fallthru
          _
      $region12: #{_lambda_.1} parent=5 // pred_fallthru
        _
      %p277 = scmp.lt.s32.totalorder %s18, 4
      // Predicated region
      $region45: #{_lambda_.1} parent=5 // pred_check
        %p278 = pneg %p277
      $region46: #{_lambda_.1} parent=5 // pred_check_branch
        %280 = sbr.rel (%p278) target = $region48
      $region47: #{_lambda_.1} parent=5 // pred_region
        // Predicated region
        $region49: #{_lambda_.1} parent=47 // pred_check
          %p281 = pneg %p38
        $region50: #{_lambda_.1} parent=47 // pred_check_branch
          %283 = sbr.rel (%p281) target = $region52
        $region51: #{_lambda_.1} parent=47 // pred_region
          %s284 = sand.u32 %s28, 1
          %s285 = sand.u32 %s28, 1
          %s286 = smul.addr %s285, 100
          %s287 = scalar_lea.vmem [#allocation4], %s286
          %s288 = smul.addr %s18, 4
          %s289 = scalar_lea.vmem %s0, %s288
          // Predicated region
          $region53: #{_lambda_.1} parent=51 // pred_check
            _
          $region54: #{_lambda_.1} parent=51 // pred_check_branch
            %291 = sbr.rel (0) target = $region56
          $region55: #{_lambda_.1} parent=51 // pred_region
            // Predicated region
            $region57: #{_lambda_.1} parent=55 // pred_check
              _
            $region58: #{_lambda_.1} parent=55 // pred_check_branch
              %293 = sbr.rel target = $region60
            $region59: #{_lambda_.1} parent=55 // pred_region
              // Predicated region
              $region72: #{_lambda_.1} parent=59 // pred_check
                _
              $region73: #{_lambda_.1} parent=59 // pred_check_branch
                %357 = sbr.rel (0) target = $region75
              $region74: #{_lambda_.1} parent=59 // pred_region
                loop: start=0, step=1, limit=1
                $region76: #{_lambda_.1} parent=74 // loop_pre_header
                  _
                $region77: #{_lambda_.1} parent=74 // loop_header
                  %s359 = sphi 0, %s363
                  %p360 = scmp.ge.s32.totalorder %s359, 1
                  %s364 = sphi %s289, %s289
                  %s365 = sphi %s287, %s287
                $region78: #{_lambda_.1} parent=74 // loop_header_branch
                  %362 = sbr.rel (%p360) target = $region82
                $region79: #{_lambda_.1} parent=74 // loop_body
                  _
                $region80: #{_lambda_.1} parent=74 // loop_footer
                  %s363 = sadd.s32 1, %s359
                $region81: #{_lambda_.1} parent=74 // loop_footer_branch
                  %358 = sbr.rel target = $region77
                $region82: #{_lambda_.1} parent=74 // loop_exit
                  _
                %s367 = ssub.s32 16, 1
                loop: start=0, step=1, limit=1
                $region83: #{_lambda_.1} parent=74 // loop_pre_header
                  _
                $region84: #{_lambda_.1} parent=74 // loop_header
                  %s369 = sphi 0, %s373
                  %p370 = scmp.ge.s32.totalorder %s369, 1
                  %s374 = sphi %s289, %s289
                  %s375 = sphi %s287, %s287
                $region85: #{_lambda_.1} parent=74 // loop_header_branch
                  %372 = sbr.rel (%p370) target = $region89
                $region86: #{_lambda_.1} parent=74 // loop_body
                  %v376 = vld [vmem:[%s374] sm:%s367]
                  %377 = vst [vmem:[%s375] sm:%s367] %v376
                  %v378 = vld [vmem:[%s374 + $0x10] sm:%s367]
                  %379 = vst [vmem:[%s375 + $0x4] sm:%s367] %v378
                  %v380 = vld [vmem:[%s374 + $0x20] sm:%s367]
                  %381 = vst [vmem:[%s375 + $0x8] sm:%s367] %v380
                  %v382 = vld [vmem:[%s374 + $0x30] sm:%s367]
                  %383 = vst [vmem:[%s375 + $0xc] sm:%s367] %v382
                  %v384 = vld [vmem:[%s374 + $0x40] sm:%s367]
                  %385 = vst [vmem:[%s375 + $0x10] sm:%s367] %v384
                  %v386 = vld [vmem:[%s374 + $0x50] sm:%s367]
                  %387 = vst [vmem:[%s375 + $0x14] sm:%s367] %v386
                  %v388 = vld [vmem:[%s374 + $0x60] sm:%s367]
                  %389 = vst [vmem:[%s375 + $0x18] sm:%s367] %v388
                  %v390 = vld [vmem:[%s374 + $0x70] sm:%s367]
                  %391 = vst [vmem:[%s375 + $0x1c] sm:%s367] %v390
                  %v392 = vld [vmem:[%s374 + $0x80] sm:%s367]
                  %393 = vst [vmem:[%s375 + $0x20] sm:%s367] %v392
                  %v394 = vld [vmem:[%s374 + $0x90] sm:%s367]
                  %395 = vst [vmem:[%s375 + $0x24] sm:%s367] %v394
                  %v396 = vld [vmem:[%s374 + $0xa0] sm:%s367]
                  %397 = vst [vmem:[%s375 + $0x28] sm:%s367] %v396
                  %v398 = vld [vmem:[%s374 + $0xb0] sm:%s367]
                  %399 = vst [vmem:[%s375 + $0x2c] sm:%s367] %v398
                  %v400 = vld [vmem:[%s374 + $0xc0] sm:%s367]
                  %401 = vst [vmem:[%s375 + $0x30] sm:%s367] %v400
                  %v402 = vld [vmem:[%s374 + $0xd0] sm:%s367]
                  %403 = vst [vmem:[%s375 + $0x34] sm:%s367] %v402
                  %v404 = vld [vmem:[%s374 + $0xe0] sm:%s367]
                  %405 = vst [vmem:[%s375 + $0x38] sm:%s367] %v404
                  %v406 = vld [vmem:[%s374 + $0xf0] sm:%s367]
                  %407 = vst [vmem:[%s375 + $0x3c] sm:%s367] %v406
                  %v408 = vld [vmem:[%s374 + $0x100] sm:%s367]
                  %409 = vst [vmem:[%s375 + $0x40] sm:%s367] %v408
                  %v410 = vld [vmem:[%s374 + $0x110] sm:%s367]
                  %411 = vst [vmem:[%s375 + $0x44] sm:%s367] %v410
                  %v412 = vld [vmem:[%s374 + $0x120] sm:%s367]
                  %413 = vst [vmem:[%s375 + $0x48] sm:%s367] %v412
                  %v414 = vld [vmem:[%s374 + $0x130] sm:%s367]
                  %415 = vst [vmem:[%s375 + $0x4c] sm:%s367] %v414
                  %v416 = vld [vmem:[%s374 + $0x140] sm:%s367]
                  %417 = vst [vmem:[%s375 + $0x50] sm:%s367] %v416
                  %v418 = vld [vmem:[%s374 + $0x150] sm:%s367]
                  %419 = vst [vmem:[%s375 + $0x54] sm:%s367] %v418
                  %v420 = vld [vmem:[%s374 + $0x160] sm:%s367]
                  %421 = vst [vmem:[%s375 + $0x58] sm:%s367] %v420
                  %v422 = vld [vmem:[%s374 + $0x170] sm:%s367]
                  %423 = vst [vmem:[%s375 + $0x5c] sm:%s367] %v422
                  %v424 = vld [vmem:[%s374 + $0x180] sm:%s367]
                  %425 = vst [vmem:[%s375 + $0x60] sm:%s367] %v424
                $region87: #{_lambda_.1} parent=74 // loop_footer
                  %s373 = sadd.s32 1, %s369
                $region88: #{_lambda_.1} parent=74 // loop_footer_branch
                  %368 = sbr.rel target = $region84
                $region89: #{_lambda_.1} parent=74 // loop_exit
                  _
              $region75: #{_lambda_.1} parent=59 // pred_fallthru
                _
            $region60: #{_lambda_.1} parent=55 // pred_fallthru
              _
            // Predicated region
            $region61: #{_lambda_.1} parent=55 // pred_check
              _
            $region62: #{_lambda_.1} parent=55 // pred_check_branch
              %295 = sbr.rel (0) target = $region64
            $region63: #{_lambda_.1} parent=55 // pred_region
              %s297 = ssub.s32 16, 1
              loop: start=0, step=1, limit=1
              $region65: #{_lambda_.1} parent=63 // loop_pre_header
                _
              $region66: #{_lambda_.1} parent=63 // loop_header
                %s299 = sphi 0, %s303
                %p300 = scmp.ge.s32.totalorder %s299, 1
                %s304 = sphi %s289, %s289
                %s305 = sphi %s287, %s287
              $region67: #{_lambda_.1} parent=63 // loop_header_branch
                %302 = sbr.rel (%p300) target = $region71
              $region68: #{_lambda_.1} parent=63 // loop_body
                %v306 = vld [vmem:[%s304] sm:%s297]
                %307 = vst [vmem:[%s305] sm:%s297] %v306
                %v308 = vld [vmem:[%s304 + $0x10] sm:%s297]
                %309 = vst [vmem:[%s305 + $0x4] sm:%s297] %v308
                %v310 = vld [vmem:[%s304 + $0x20] sm:%s297]
                %311 = vst [vmem:[%s305 + $0x8] sm:%s297] %v310
                %v312 = vld [vmem:[%s304 + $0x30] sm:%s297]
                %313 = vst [vmem:[%s305 + $0xc] sm:%s297] %v312
                %v314 = vld [vmem:[%s304 + $0x40] sm:%s297]
                %315 = vst [vmem:[%s305 + $0x10] sm:%s297] %v314
                %v316 = vld [vmem:[%s304 + $0x50] sm:%s297]
                %317 = vst [vmem:[%s305 + $0x14] sm:%s297] %v316
                %v318 = vld [vmem:[%s304 + $0x60] sm:%s297]
                %319 = vst [vmem:[%s305 + $0x18] sm:%s297] %v318
                %v320 = vld [vmem:[%s304 + $0x70] sm:%s297]
                %321 = vst [vmem:[%s305 + $0x1c] sm:%s297] %v320
                %v322 = vld [vmem:[%s304 + $0x80] sm:%s297]
                %323 = vst [vmem:[%s305 + $0x20] sm:%s297] %v322
                %v324 = vld [vmem:[%s304 + $0x90] sm:%s297]
                %325 = vst [vmem:[%s305 + $0x24] sm:%s297] %v324
                %v326 = vld [vmem:[%s304 + $0xa0] sm:%s297]
                %327 = vst [vmem:[%s305 + $0x28] sm:%s297] %v326
                %v328 = vld [vmem:[%s304 + $0xb0] sm:%s297]
                %329 = vst [vmem:[%s305 + $0x2c] sm:%s297] %v328
                %v330 = vld [vmem:[%s304 + $0xc0] sm:%s297]
                %331 = vst [vmem:[%s305 + $0x30] sm:%s297] %v330
                %v332 = vld [vmem:[%s304 + $0xd0] sm:%s297]
                %333 = vst [vmem:[%s305 + $0x34] sm:%s297] %v332
                %v334 = vld [vmem:[%s304 + $0xe0] sm:%s297]
                %335 = vst [vmem:[%s305 + $0x38] sm:%s297] %v334
                %v336 = vld [vmem:[%s304 + $0xf0] sm:%s297]
                %337 = vst [vmem:[%s305 + $0x3c] sm:%s297] %v336
                %v338 = vld [vmem:[%s304 + $0x100] sm:%s297]
                %339 = vst [vmem:[%s305 + $0x40] sm:%s297] %v338
                %v340 = vld [vmem:[%s304 + $0x110] sm:%s297]
                %341 = vst [vmem:[%s305 + $0x44] sm:%s297] %v340
                %v342 = vld [vmem:[%s304 + $0x120] sm:%s297]
                %343 = vst [vmem:[%s305 + $0x48] sm:%s297] %v342
                %v344 = vld [vmem:[%s304 + $0x130] sm:%s297]
                %345 = vst [vmem:[%s305 + $0x4c] sm:%s297] %v344
                %v346 = vld [vmem:[%s304 + $0x140] sm:%s297]
                %347 = vst [vmem:[%s305 + $0x50] sm:%s297] %v346
                %v348 = vld [vmem:[%s304 + $0x150] sm:%s297]
                %349 = vst [vmem:[%s305 + $0x54] sm:%s297] %v348
                %v350 = vld [vmem:[%s304 + $0x160] sm:%s297]
                %351 = vst [vmem:[%s305 + $0x58] sm:%s297] %v350
                %v352 = vld [vmem:[%s304 + $0x170] sm:%s297]
                %353 = vst [vmem:[%s305 + $0x5c] sm:%s297] %v352
                %v354 = vld [vmem:[%s304 + $0x180] sm:%s297]
                %355 = vst [vmem:[%s305 + $0x60] sm:%s297] %v354
              $region69: #{_lambda_.1} parent=63 // loop_footer
                %s303 = sadd.s32 1, %s299
              $region70: #{_lambda_.1} parent=63 // loop_footer_branch
                %298 = sbr.rel target = $region66
              $region71: #{_lambda_.1} parent=63 // loop_exit
                _
            $region64: #{_lambda_.1} parent=55 // pred_fallthru
              _
          $region56: #{_lambda_.1} parent=51 // pred_fallthru
            _
          %426 = vnop
        $region52: #{_lambda_.1} parent=47 // pred_fallthru
          _
      $region48: #{_lambda_.1} parent=5 // pred_fallthru
        _
      %p427 = scmp.le.s32.totalorder 1, %s18
      %p428 = scmp.lt.s32.totalorder %s18, 5
      %p429 = pnand %p427, %p428
      %p430 = pneg %p429
      // Predicated region
      $region90: #{_lambda_.1} parent=5 // pred_check
        _
      $region91: #{_lambda_.1} parent=5 // pred_check_branch
        %432 = sbr.rel (%p429) target = $region93
      $region92: #{_lambda_.1} parent=5 // pred_region
        %s433 = ssub.s32 %s18, 1
        %s434 = sand.u32 %s31, 1
        %s435 = sand.u32 %s31, 1
        %s436 = smul.addr %s435, 100
        %s437 = scalar_lea.vmem [#allocation4], %s436
        // Predicated region
        $region94: #{_lambda_.1} parent=92 // pred_check
          %p438 = pneg %p44
        $region95: #{_lambda_.1} parent=92 // pred_check_branch
          %440 = sbr.rel (%p438) target = $region97
        $region96: #{_lambda_.1} parent=92 // pred_region
          _
        $region97: #{_lambda_.1} parent=92 // pred_fallthru
          _
        %s441 = sand.u32 %s31, 1
        %s442 = sand.u32 %s31, 1
        %s443 = smul.addr %s442, 100
        %s444 = scalar_lea.vmem [#allocation4], %s443
        %p445 = pneg %p44
        %p446 = pneg %p41
        %p447 = pneg %p65
        %p448 = pneg %p62
        %p449 = pneg %p86
        %p450 = pneg %p83
        %p451 = pneg %p107
        %p452 = pneg %p104
        %p453 = pneg %p128
        %p454 = pneg %p125
        %p455 = pneg %p149
        %p456 = pneg %p146
        %p457 = pneg %p170
        %p458 = pneg %p167
        %p459 = pneg %p191
        %p460 = pneg %p188
        %p461 = pneg %p212
        %p462 = pneg %p209
        %p463 = pneg %p238
        %p464 = pneg %p235
        %s465 = sand.u32 %s225, 1
        %s466 = scalar_lea.sflag [#allocation6], %s465
        %s467 = sand.u32 %s225, 1
        %s468 = smul.addr %s467, 8
        %s469 = scalar_lea.vmem [#allocation5], %s468
        %v471 = vld [vmem:[%s437] sm:$0xf]
        %v472 = vld [vmem:[%s437 + $0x4] sm:$0xf]
        %v473 = vld [vmem:[%s437 + $0x8] sm:$0xf]
        %v474 = vld [vmem:[%s437 + $0xc] sm:$0xf]
        %v475 = vld [vmem:[%s437 + $0x10] sm:$0xf]
        %v476 = vld [vmem:[%s1] sm:$0xf]
        %v477 = vld [vmem:[%s1 + $0x4] sm:$0xf]
        %v478 = vld [vmem:[%s1 + $0x8] sm:$0xf]
        %v479 = vld [vmem:[%s1 + $0xc] sm:$0xf]
        %v480 = vld [vmem:[%s1 + $0x10] sm:$0xf]
        %v481 = vld [vmem:[%s1 + $0x14] sm:$0xf]
        %v482 = vld [vmem:[%s1 + $0x18] sm:$0xf]
        %v483 = vld [vmem:[%s1 + $0x1c] sm:$0xf]
        %v484 = vld [vmem:[%s1 + $0x20] sm:$0xf]
        %v485 = vld [vmem:[%s1 + $0x24] sm:$0xf]
        %v486 = vld [vmem:[%s1 + $0x28] sm:$0xf]
        %v487 = vld [vmem:[%s1 + $0x2c] sm:$0xf]
        %v488 = vld [vmem:[%s1 + $0x30] sm:$0xf]
        %v489 = vld [vmem:[%s1 + $0x34] sm:$0xf]
        %v490 = vld [vmem:[%s1 + $0x38] sm:$0xf]
        %v491 = vld [vmem:[%s1 + $0x3c] sm:$0xf]
        %v492 = vld [vmem:[%s2] sm:$0x1]
        %v494 = vperm.slane %v492, 0
        %v501 = vunpack.c.l.b16 %v471
        %v502 = vunpack.c.l.b16 %v472
        %v503 = vunpack.c.l.b16 %v473
        %v504 = vunpack.c.l.b16 %v474
        %v505 = vunpack.c.l.b16 %v475
        %v506 = vpack.c.b16 %v502, %v501
        %v507 = vpack.c.b16 %v504, %v503
        %v508 = vpack.c.b16 %v505, %v505
        %v528 = vunpack.c.l.b16 %v476
        %v529 = vunpack.c.l.b16 %v477
        %v530 = vunpack.c.l.b16 %v478
        %v531 = vunpack.c.l.b16 %v479
        %v532 = vunpack.c.l.b16 %v480
        %v533 = vunpack.c.l.b16 %v481
        %v534 = vunpack.c.l.b16 %v482
        %v535 = vunpack.c.l.b16 %v483
        %v536 = vunpack.c.l.b16 %v484
        %v537 = vunpack.c.l.b16 %v485
        %v538 = vunpack.c.l.b16 %v486
        %v539 = vunpack.c.l.b16 %v487
        %v540 = vunpack.c.l.b16 %v488
        %v541 = vunpack.c.l.b16 %v489
        %v542 = vunpack.c.l.b16 %v490
        %v543 = vunpack.c.l.b16 %v491
        %v544 = vpack.c.b16 %v529, %v528
        %v545 = vpack.c.b16 %v531, %v530
        %v546 = vpack.c.b16 %v533, %v532
        %v547 = vpack.c.b16 %v535, %v534
        %v548 = vpack.c.b16 %v537, %v536
        %v549 = vpack.c.b16 %v539, %v538
        %v550 = vpack.c.b16 %v541, %v540
        %v551 = vpack.c.b16 %v543, %v542
        %560 = vmatpush.bf16.msra.mxu0 %v551
        %561 = vmatpush.bf16.msra.mxu0 %v550
        %562 = vmatpush.bf16.msra.mxu0 %v549
        %563 = vmatpush.bf16.msra.mxu0 %v548
        %564 = vmatpush.bf16.msra.mxu0 %v547
        %565 = vmatpush.bf16.msra.mxu0 %v546
        %566 = vmatpush.bf16.msra.mxu0 %v545
        %567 = vmatpush.bf16.msra.mxu0 %v544
        %568 = vmatmul.bf16.gmra.mxu0 %v506
        %v569 = vpop.f32.mrf.mxu0
        %v570 = vadd.f32 %v494, %v569
        %v571 = vpop.f32.mrf.mxu0
        %v572 = vadd.f32 %v494, %v571
        %573 = vmatmul.bf16.gmra.mxu0 %v507
        %v574 = vpop.f32.mrf.mxu0
        %v575 = vadd.f32 %v494, %v574
        %v576 = vpop.f32.mrf.mxu0
        %v577 = vadd.f32 %v494, %v576
        %578 = vmatmul.bf16.gmra.mxu0 %v508
        %v579 = vpop.f32.mrf.mxu0
        %v580 = vadd.f32 %v494, %v579
        %v581 = vpop.f32.mrf.mxu0
        %582 = vdwg.mxu0
        %v583 = vmax.f32 %v570, 0.0
        %v584 = vmax.f32 %v572, 0.0
        %v585 = vmax.f32 %v575, 0.0
        %v586 = vmax.f32 %v577, 0.0
        %v587 = vmax.f32 %v580, 0.0
        %v588 = vpack.c.bf16 %v583, %v583
        %v589 = vpack.c.bf16 %v584, %v584
        %v590 = vpack.c.bf16 %v585, %v585
        %v591 = vpack.c.bf16 %v586, %v586
        %v592 = vpack.c.bf16 %v587, %v587
        %vm593 = vcmask 519168
        %594 = vst.msk [vmem:[#allocation2] sm:$0xf] %vm593, %v588
        %595 = vst.msk [vmem:[#allocation2 + $0x4] sm:$0xf] %vm593, %v589
        %596 = vst.msk [vmem:[#allocation2 + $0x8] sm:$0xf] %vm593, %v590
        %597 = vst.msk [vmem:[#allocation2 + $0xc] sm:$0xf] %vm593, %v591
        %598 = vst.msk [vmem:[#allocation2 + $0x10] sm:$0xf] %vm593, %v592
        %s599 = scalar_lea.vmem %s437, 20 [#allocation4]
        %v600 = vld [vmem:[%s599] sm:$0xf]
        %v601 = vld [vmem:[%s599 + $0x4] sm:$0xf]
        %v602 = vld [vmem:[%s599 + $0x8] sm:$0xf]
        %v603 = vld [vmem:[%s599 + $0xc] sm:$0xf]
        %v604 = vld [vmem:[%s599 + $0x10] sm:$0xf]
        %v605 = vld [vmem:[%s1] sm:$0xf]
        %v606 = vld [vmem:[%s1 + $0x4] sm:$0xf]
        %v607 = vld [vmem:[%s1 + $0x8] sm:$0xf]
        %v608 = vld [vmem:[%s1 + $0xc] sm:$0xf]
        %v609 = vld [vmem:[%s1 + $0x10] sm:$0xf]
        %v610 = vld [vmem:[%s1 + $0x14] sm:$0xf]
        %v611 = vld [vmem:[%s1 + $0x18] sm:$0xf]
        %v612 = vld [vmem:[%s1 + $0x1c] sm:$0xf]
        %v613 = vld [vmem:[%s1 + $0x20] sm:$0xf]
        %v614 = vld [vmem:[%s1 + $0x24] sm:$0xf]
        %v615 = vld [vmem:[%s1 + $0x28] sm:$0xf]
        %v616 = vld [vmem:[%s1 + $0x2c] sm:$0xf]
        %v617 = vld [vmem:[%s1 + $0x30] sm:$0xf]
        %v618 = vld [vmem:[%s1 + $0x34] sm:$0xf]
        %v619 = vld [vmem:[%s1 + $0x38] sm:$0xf]
        %v620 = vld [vmem:[%s1 + $0x3c] sm:$0xf]
        %v621 = vld [vmem:[%s2] sm:$0x1]
        %v623 = vperm.slane %v621, 0
        %v630 = vunpack.c.l.b16 %v600
        %v631 = vunpack.c.l.b16 %v601
        %v632 = vunpack.c.l.b16 %v602
        %v633 = vunpack.c.l.b16 %v603
        %v634 = vunpack.c.l.b16 %v604
        %v635 = vpack.c.b16 %v631, %v630
        %v636 = vpack.c.b16 %v633, %v632
        %v637 = vpack.c.b16 %v634, %v634
        %v657 = vunpack.c.l.b16 %v605
        %v658 = vunpack.c.l.b16 %v606
        %v659 = vunpack.c.l.b16 %v607
        %v660 = vunpack.c.l.b16 %v608
        %v661 = vunpack.c.l.b16 %v609
        %v662 = vunpack.c.l.b16 %v610
        %v663 = vunpack.c.l.b16 %v611
        %v664 = vunpack.c.l.b16 %v612
        %v665 = vunpack.c.l.b16 %v613
        %v666 = vunpack.c.l.b16 %v614
        %v667 = vunpack.c.l.b16 %v615
        %v668 = vunpack.c.l.b16 %v616
        %v669 = vunpack.c.l.b16 %v617
        %v670 = vunpack.c.l.b16 %v618
        %v671 = vunpack.c.l.b16 %v619
        %v672 = vunpack.c.l.b16 %v620
        %v673 = vpack.c.b16 %v658, %v657
        %v674 = vpack.c.b16 %v660, %v659
        %v675 = vpack.c.b16 %v662, %v661
        %v676 = vpack.c.b16 %v664, %v663
        %v677 = vpack.c.b16 %v666, %v665
        %v678 = vpack.c.b16 %v668, %v667
        %v679 = vpack.c.b16 %v670, %v669
        %v680 = vpack.c.b16 %v672, %v671
        %689 = vmatpush.bf16.msra.mxu0 %v680
        %690 = vmatpush.bf16.msra.mxu0 %v679
        %691 = vmatpush.bf16.msra.mxu0 %v678
        %692 = vmatpush.bf16.msra.mxu0 %v677
        %693 = vmatpush.bf16.msra.mxu0 %v676
        %694 = vmatpush.bf16.msra.mxu0 %v675
        %695 = vmatpush.bf16.msra.mxu0 %v674
        %696 = vmatpush.bf16.msra.mxu0 %v673
        %697 = vmatmul.bf16.gmra.mxu0 %v635
        %v698 = vpop.f32.mrf.mxu0
        %v699 = vadd.f32 %v623, %v698
        %v700 = vpop.f32.mrf.mxu0
        %v701 = vadd.f32 %v623, %v700
        %702 = vmatmul.bf16.gmra.mxu0 %v636
        %v703 = vpop.f32.mrf.mxu0
        %v704 = vadd.f32 %v623, %v703
        %v705 = vpop.f32.mrf.mxu0
        %v706 = vadd.f32 %v623, %v705
        %707 = vmatmul.bf16.gmra.mxu0 %v637
        %v708 = vpop.f32.mrf.mxu0
        %v709 = vadd.f32 %v623, %v708
        %v710 = vpop.f32.mrf.mxu0
        %711 = vdwg.mxu0
        %v712 = vmax.f32 %v699, 0.0
        %v713 = vmax.f32 %v701, 0.0
        %v714 = vmax.f32 %v704, 0.0
        %v715 = vmax.f32 %v706, 0.0
        %v716 = vmax.f32 %v709, 0.0
        %v717 = vpack.c.bf16 %v712, %v712
        %v718 = vpack.c.bf16 %v713, %v713
        %v719 = vpack.c.bf16 %v714, %v714
        %v720 = vpack.c.bf16 %v715, %v715
        %v721 = vpack.c.bf16 %v716, %v716
        %s722 = scalar_lea.vmem [#allocation2], 20
        %723 = vst.msk [vmem:[%s722] sm:$0xf] %vm593, %v717
        %724 = vst.msk [vmem:[%s722 + $0x4] sm:$0xf] %vm593, %v718
        %725 = vst.msk [vmem:[%s722 + $0x8] sm:$0xf] %vm593, %v719
        %726 = vst.msk [vmem:[%s722 + $0xc] sm:$0xf] %vm593, %v720
        %727 = vst.msk [vmem:[%s722 + $0x10] sm:$0xf] %vm593, %v721
        %s728 = scalar_lea.vmem %s437, 40 [#allocation4]
        %v729 = vld [vmem:[%s728] sm:$0xf]
        %v730 = vld [vmem:[%s728 + $0x4] sm:$0xf]
        %v731 = vld [vmem:[%s728 + $0x8] sm:$0xf]
        %v732 = vld [vmem:[%s728 + $0xc] sm:$0xf]
        %v733 = vld [vmem:[%s728 + $0x10] sm:$0xf]
        %v734 = vld [vmem:[%s1] sm:$0xf]
        %v735 = vld [vmem:[%s1 + $0x4] sm:$0xf]
        %v736 = vld [vmem:[%s1 + $0x8] sm:$0xf]
        %v737 = vld [vmem:[%s1 + $0xc] sm:$0xf]
        %v738 = vld [vmem:[%s1 + $0x10] sm:$0xf]
        %v739 = vld [vmem:[%s1 + $0x14] sm:$0xf]
        %v740 = vld [vmem:[%s1 + $0x18] sm:$0xf]
        %v741 = vld [vmem:[%s1 + $0x1c] sm:$0xf]
        %v742 = vld [vmem:[%s1 + $0x20] sm:$0xf]
        %v743 = vld [vmem:[%s1 + $0x24] sm:$0xf]
        %v744 = vld [vmem:[%s1 + $0x28] sm:$0xf]
        %v745 = vld [vmem:[%s1 + $0x2c] sm:$0xf]
        %v746 = vld [vmem:[%s1 + $0x30] sm:$0xf]
        %v747 = vld [vmem:[%s1 + $0x34] sm:$0xf]
        %v748 = vld [vmem:[%s1 + $0x38] sm:$0xf]
        %v749 = vld [vmem:[%s1 + $0x3c] sm:$0xf]
        %v750 = vld [vmem:[%s2] sm:$0x1]
        %v752 = vperm.slane %v750, 0
        %v759 = vunpack.c.l.b16 %v729
        %v760 = vunpack.c.l.b16 %v730
        %v761 = vunpack.c.l.b16 %v731
        %v762 = vunpack.c.l.b16 %v732
        %v763 = vunpack.c.l.b16 %v733
        %v764 = vpack.c.b16 %v760, %v759
        %v765 = vpack.c.b16 %v762, %v761
        %v766 = vpack.c.b16 %v763, %v763
        %v786 = vunpack.c.l.b16 %v734
        %v787 = vunpack.c.l.b16 %v735
        %v788 = vunpack.c.l.b16 %v736
        %v789 = vunpack.c.l.b16 %v737
        %v790 = vunpack.c.l.b16 %v738
        %v791 = vunpack.c.l.b16 %v739
        %v792 = vunpack.c.l.b16 %v740
        %v793 = vunpack.c.l.b16 %v741
        %v794 = vunpack.c.l.b16 %v742
        %v795 = vunpack.c.l.b16 %v743
        %v796 = vunpack.c.l.b16 %v744
        %v797 = vunpack.c.l.b16 %v745
        %v798 = vunpack.c.l.b16 %v746
        %v799 = vunpack.c.l.b16 %v747
        %v800 = vunpack.c.l.b16 %v748
        %v801 = vunpack.c.l.b16 %v749
        %v802 = vpack.c.b16 %v787, %v786
        %v803 = vpack.c.b16 %v789, %v788
        %v804 = vpack.c.b16 %v791, %v790
        %v805 = vpack.c.b16 %v793, %v792
        %v806 = vpack.c.b16 %v795, %v794
        %v807 = vpack.c.b16 %v797, %v796
        %v808 = vpack.c.b16 %v799, %v798
        %v809 = vpack.c.b16 %v801, %v800
        %818 = vmatpush.bf16.msra.mxu0 %v809
        %819 = vmatpush.bf16.msra.mxu0 %v808
        %820 = vmatpush.bf16.msra.mxu0 %v807
        %821 = vmatpush.bf16.msra.mxu0 %v806
        %822 = vmatpush.bf16.msra.mxu0 %v805
        %823 = vmatpush.bf16.msra.mxu0 %v804
        %824 = vmatpush.bf16.msra.mxu0 %v803
        %825 = vmatpush.bf16.msra.mxu0 %v802
        %826 = vmatmul.bf16.gmra.mxu0 %v764
        %v827 = vpop.f32.mrf.mxu0
        %v828 = vadd.f32 %v752, %v827
        %v829 = vpop.f32.mrf.mxu0
        %v830 = vadd.f32 %v752, %v829
        %831 = vmatmul.bf16.gmra.mxu0 %v765
        %v832 = vpop.f32.mrf.mxu0
        %v833 = vadd.f32 %v752, %v832
        %v834 = vpop.f32.mrf.mxu0
        %v835 = vadd.f32 %v752, %v834
        %836 = vmatmul.bf16.gmra.mxu0 %v766
        %v837 = vpop.f32.mrf.mxu0
        %v838 = vadd.f32 %v752, %v837
        %v839 = vpop.f32.mrf.mxu0
        %840 = vdwg.mxu0
        %v841 = vmax.f32 %v828, 0.0
        %v842 = vmax.f32 %v830, 0.0
        %v843 = vmax.f32 %v833, 0.0
        %v844 = vmax.f32 %v835, 0.0
        %v845 = vmax.f32 %v838, 0.0
        %v846 = vpack.c.bf16 %v841, %v841
        %v847 = vpack.c.bf16 %v842, %v842
        %v848 = vpack.c.bf16 %v843, %v843
        %v849 = vpack.c.bf16 %v844, %v844
        %v850 = vpack.c.bf16 %v845, %v845
        %s851 = scalar_lea.vmem [#allocation2], 40
        %852 = vst.msk [vmem:[%s851] sm:$0xf] %vm593, %v846
        %853 = vst.msk [vmem:[%s851 + $0x4] sm:$0xf] %vm593, %v847
        %854 = vst.msk [vmem:[%s851 + $0x8] sm:$0xf] %vm593, %v848
        %855 = vst.msk [vmem:[%s851 + $0xc] sm:$0xf] %vm593, %v849
        %856 = vst.msk [vmem:[%s851 + $0x10] sm:$0xf] %vm593, %v850
        %s857 = scalar_lea.vmem %s437, 60 [#allocation4]
        %v858 = vld [vmem:[%s857] sm:$0xf]
        %v859 = vld [vmem:[%s857 + $0x4] sm:$0xf]
        %v860 = vld [vmem:[%s857 + $0x8] sm:$0xf]
        %v861 = vld [vmem:[%s857 + $0xc] sm:$0xf]
        %v862 = vld [vmem:[%s857 + $0x10] sm:$0xf]
        %v863 = vld [vmem:[%s1] sm:$0xf]
        %v864 = vld [vmem:[%s1 + $0x4] sm:$0xf]
        %v865 = vld [vmem:[%s1 + $0x8] sm:$0xf]
        %v866 = vld [vmem:[%s1 + $0xc] sm:$0xf]
        %v867 = vld [vmem:[%s1 + $0x10] sm:$0xf]
        %v868 = vld [vmem:[%s1 + $0x14] sm:$0xf]
        %v869 = vld [vmem:[%s1 + $0x18] sm:$0xf]
        %v870 = vld [vmem:[%s1 + $0x1c] sm:$0xf]
        %v871 = vld [vmem:[%s1 + $0x20] sm:$0xf]
        %v872 = vld [vmem:[%s1 + $0x24] sm:$0xf]
        %v873 = vld [vmem:[%s1 + $0x28] sm:$0xf]
        %v874 = vld [vmem:[%s1 + $0x2c] sm:$0xf]
        %v875 = vld [vmem:[%s1 + $0x30] sm:$0xf]
        %v876 = vld [vmem:[%s1 + $0x34] sm:$0xf]
        %v877 = vld [vmem:[%s1 + $0x38] sm:$0xf]
        %v878 = vld [vmem:[%s1 + $0x3c] sm:$0xf]
        %v879 = vld [vmem:[%s2] sm:$0x1]
        %v881 = vperm.slane %v879, 0
        %v888 = vunpack.c.l.b16 %v858
        %v889 = vunpack.c.l.b16 %v859
        %v890 = vunpack.c.l.b16 %v860
        %v891 = vunpack.c.l.b16 %v861
        %v892 = vunpack.c.l.b16 %v862
        %v893 = vpack.c.b16 %v889, %v888
        %v894 = vpack.c.b16 %v891, %v890
        %v895 = vpack.c.b16 %v892, %v892
        %v915 = vunpack.c.l.b16 %v863
        %v916 = vunpack.c.l.b16 %v864
        %v917 = vunpack.c.l.b16 %v865
        %v918 = vunpack.c.l.b16 %v866
        %v919 = vunpack.c.l.b16 %v867
        %v920 = vunpack.c.l.b16 %v868
        %v921 = vunpack.c.l.b16 %v869
        %v922 = vunpack.c.l.b16 %v870
        %v923 = vunpack.c.l.b16 %v871
        %v924 = vunpack.c.l.b16 %v872
        %v925 = vunpack.c.l.b16 %v873
        %v926 = vunpack.c.l.b16 %v874
        %v927 = vunpack.c.l.b16 %v875
        %v928 = vunpack.c.l.b16 %v876
        %v929 = vunpack.c.l.b16 %v877
        %v930 = vunpack.c.l.b16 %v878
        %v931 = vpack.c.b16 %v916, %v915
        %v932 = vpack.c.b16 %v918, %v917
        %v933 = vpack.c.b16 %v920, %v919
        %v934 = vpack.c.b16 %v922, %v921
        %v935 = vpack.c.b16 %v924, %v923
        %v936 = vpack.c.b16 %v926, %v925
        %v937 = vpack.c.b16 %v928, %v927
        %v938 = vpack.c.b16 %v930, %v929
        %947 = vmatpush.bf16.msra.mxu0 %v938
        %948 = vmatpush.bf16.msra.mxu0 %v937
        %949 = vmatpush.bf16.msra.mxu0 %v936
        %950 = vmatpush.bf16.msra.mxu0 %v935
        %951 = vmatpush.bf16.msra.mxu0 %v934
        %952 = vmatpush.bf16.msra.mxu0 %v933
        %953 = vmatpush.bf16.msra.mxu0 %v932
        %954 = vmatpush.bf16.msra.mxu0 %v931
        %955 = vmatmul.bf16.gmra.mxu0 %v893
        %v956 = vpop.f32.mrf.mxu0
        %v957 = vadd.f32 %v881, %v956
        %v958 = vpop.f32.mrf.mxu0
        %v959 = vadd.f32 %v881, %v958
        %960 = vmatmul.bf16.gmra.mxu0 %v894
        %v961 = vpop.f32.mrf.mxu0
        %v962 = vadd.f32 %v881, %v961
        %v963 = vpop.f32.mrf.mxu0
        %v964 = vadd.f32 %v881, %v963
        %965 = vmatmul.bf16.gmra.mxu0 %v895
        %v966 = vpop.f32.mrf.mxu0
        %v967 = vadd.f32 %v881, %v966
        %v968 = vpop.f32.mrf.mxu0
        %969 = vdwg.mxu0
        %v970 = vmax.f32 %v957, 0.0
        %v971 = vmax.f32 %v959, 0.0
        %v972 = vmax.f32 %v962, 0.0
        %v973 = vmax.f32 %v964, 0.0
        %v974 = vmax.f32 %v967, 0.0
        %v975 = vpack.c.bf16 %v970, %v970
        %v976 = vpack.c.bf16 %v971, %v971
        %v977 = vpack.c.bf16 %v972, %v972
        %v978 = vpack.c.bf16 %v973, %v973
        %v979 = vpack.c.bf16 %v974, %v974
        %s980 = scalar_lea.vmem [#allocation2], 60
        %981 = vst.msk [vmem:[%s980] sm:$0xf] %vm593, %v975
        %982 = vst.msk [vmem:[%s980 + $0x4] sm:$0xf] %vm593, %v976
        %983 = vst.msk [vmem:[%s980 + $0x8] sm:$0xf] %vm593, %v977
        %984 = vst.msk [vmem:[%s980 + $0xc] sm:$0xf] %vm593, %v978
        %985 = vst.msk [vmem:[%s980 + $0x10] sm:$0xf] %vm593, %v979
        %s986 = scalar_lea.vmem %s437, 80 [#allocation4]
        %v987 = vld [vmem:[%s986] sm:$0xf]
        %v988 = vld [vmem:[%s986 + $0x4] sm:$0xf]
        %v989 = vld [vmem:[%s986 + $0x8] sm:$0xf]
        %v990 = vld [vmem:[%s986 + $0xc] sm:$0xf]
        %v991 = vld [vmem:[%s986 + $0x10] sm:$0xf]
        %v992 = vld [vmem:[%s1] sm:$0xf]
        %v993 = vld [vmem:[%s1 + $0x4] sm:$0xf]
        %v994 = vld [vmem:[%s1 + $0x8] sm:$0xf]
        %v995 = vld [vmem:[%s1 + $0xc] sm:$0xf]
        %v996 = vld [vmem:[%s1 + $0x10] sm:$0xf]
        %v997 = vld [vmem:[%s1 + $0x14] sm:$0xf]
        %v998 = vld [vmem:[%s1 + $0x18] sm:$0xf]
        %v999 = vld [vmem:[%s1 + $0x1c] sm:$0xf]
        %v1000 = vld [vmem:[%s1 + $0x20] sm:$0xf]
        %v1001 = vld [vmem:[%s1 + $0x24] sm:$0xf]
        %v1002 = vld [vmem:[%s1 + $0x28] sm:$0xf]
        %v1003 = vld [vmem:[%s1 + $0x2c] sm:$0xf]
        %v1004 = vld [vmem:[%s1 + $0x30] sm:$0xf]
        %v1005 = vld [vmem:[%s1 + $0x34] sm:$0xf]
        %v1006 = vld [vmem:[%s1 + $0x38] sm:$0xf]
        %v1007 = vld [vmem:[%s1 + $0x3c] sm:$0xf]
        %v1008 = vld [vmem:[%s2] sm:$0x1]
        %v1010 = vperm.slane %v1008, 0
        %v1017 = vunpack.c.l.b16 %v987
        %v1018 = vunpack.c.l.b16 %v988
        %v1019 = vunpack.c.l.b16 %v989
        %v1020 = vunpack.c.l.b16 %v990
        %v1021 = vunpack.c.l.b16 %v991
        %v1022 = vpack.c.b16 %v1018, %v1017
        %v1023 = vpack.c.b16 %v1020, %v1019
        %v1024 = vpack.c.b16 %v1021, %v1021
        %v1044 = vunpack.c.l.b16 %v992
        %v1045 = vunpack.c.l.b16 %v993
        %v1046 = vunpack.c.l.b16 %v994
        %v1047 = vunpack.c.l.b16 %v995
        %v1048 = vunpack.c.l.b16 %v996
        %v1049 = vunpack.c.l.b16 %v997
        %v1050 = vunpack.c.l.b16 %v998
        %v1051 = vunpack.c.l.b16 %v999
        %v1052 = vunpack.c.l.b16 %v1000
        %v1053 = vunpack.c.l.b16 %v1001
        %v1054 = vunpack.c.l.b16 %v1002
        %v1055 = vunpack.c.l.b16 %v1003
        %v1056 = vunpack.c.l.b16 %v1004
        %v1057 = vunpack.c.l.b16 %v1005
        %v1058 = vunpack.c.l.b16 %v1006
        %v1059 = vunpack.c.l.b16 %v1007
        %v1060 = vpack.c.b16 %v1045, %v1044
        %v1061 = vpack.c.b16 %v1047, %v1046
        %v1062 = vpack.c.b16 %v1049, %v1048
        %v1063 = vpack.c.b16 %v1051, %v1050
        %v1064 = vpack.c.b16 %v1053, %v1052
        %v1065 = vpack.c.b16 %v1055, %v1054
        %v1066 = vpack.c.b16 %v1057, %v1056
        %v1067 = vpack.c.b16 %v1059, %v1058
        %1076 = vmatpush.bf16.msra.mxu0 %v1067
        %1077 = vmatpush.bf16.msra.mxu0 %v1066
        %1078 = vmatpush.bf16.msra.mxu0 %v1065
        %1079 = vmatpush.bf16.msra.mxu0 %v1064
        %1080 = vmatpush.bf16.msra.mxu0 %v1063
        %1081 = vmatpush.bf16.msra.mxu0 %v1062
        %1082 = vmatpush.bf16.msra.mxu0 %v1061
        %1083 = vmatpush.bf16.msra.mxu0 %v1060
        %1084 = vmatmul.bf16.gmra.mxu0 %v1022
        %v1085 = vpop.f32.mrf.mxu0
        %v1086 = vadd.f32 %v1010, %v1085
        %v1087 = vpop.f32.mrf.mxu0
        %v1088 = vadd.f32 %v1010, %v1087
        %1089 = vmatmul.bf16.gmra.mxu0 %v1023
        %v1090 = vpop.f32.mrf.mxu0
        %v1091 = vadd.f32 %v1010, %v1090
        %v1092 = vpop.f32.mrf.mxu0
        %v1093 = vadd.f32 %v1010, %v1092
        %1094 = vmatmul.bf16.gmra.mxu0 %v1024
        %v1095 = vpop.f32.mrf.mxu0
        %v1096 = vadd.f32 %v1010, %v1095
        %v1097 = vpop.f32.mrf.mxu0
        %1098 = vdwg.mxu0
        %v1099 = vmax.f32 %v1086, 0.0
        %v1100 = vmax.f32 %v1088, 0.0
        %v1101 = vmax.f32 %v1091, 0.0
        %v1102 = vmax.f32 %v1093, 0.0
        %v1103 = vmax.f32 %v1096, 0.0
        %v1104 = vpack.c.bf16 %v1099, %v1099
        %v1105 = vpack.c.bf16 %v1100, %v1100
        %v1106 = vpack.c.bf16 %v1101, %v1101
        %v1107 = vpack.c.bf16 %v1102, %v1102
        %v1108 = vpack.c.bf16 %v1103, %v1103
        %s1109 = scalar_lea.vmem [#allocation2], 80
        %1110 = vst.msk [vmem:[%s1109] sm:$0xf] %vm593, %v1104
        %1111 = vst.msk [vmem:[%s1109 + $0x4] sm:$0xf] %vm593, %v1105
        %1112 = vst.msk [vmem:[%s1109 + $0x8] sm:$0xf] %vm593, %v1106
        %1113 = vst.msk [vmem:[%s1109 + $0xc] sm:$0xf] %vm593, %v1107
        %1114 = vst.msk [vmem:[%s1109 + $0x10] sm:$0xf] %vm593, %v1108
        %v1115 = vld [vmem:[#allocation2] sm:$0xf]
        %v1116 = vld [vmem:[#allocation2 + $0x4] sm:$0xf]
        %v1117 = vld [vmem:[#allocation2 + $0x8] sm:$0xf]
        %v1118 = vld [vmem:[#allocation2 + $0x14] sm:$0xf]
        %v1119 = vld [vmem:[#allocation2 + $0x18] sm:$0xf]
        %v1120 = vld [vmem:[#allocation2 + $0x1c] sm:$0xf]
        %v1121 = vld [vmem:[#allocation2 + $0x28] sm:$0xf]
        %v1122 = vld [vmem:[#allocation2 + $0x2c] sm:$0xf]
        %v1123 = vld [vmem:[#allocation2 + $0x30] sm:$0xf]
        %v1124 = vld [vmem:[%s3] sm:$0xf]
        %v1125 = vld [vmem:[%s3 + $0x4] sm:$0xf]
        %v1126 = vld [vmem:[%s3 + $0x8] sm:$0xf]
        %v1127 = vld [vmem:[%s3 + $0xc] sm:$0xf]
        %v1128 = vld [vmem:[%s3 + $0x10] sm:$0xf]
        %v1129 = vld [vmem:[%s3 + $0x14] sm:$0xf]
        %v1130 = vld [vmem:[%s3 + $0x18] sm:$0xf]
        %v1131 = vld [vmem:[%s3 + $0x1c] sm:$0xf]
        %v1141 = vunpack.c.l.b16 %v1115
        %v1142 = vunpack.c.l.b16 %v1116
        %v1143 = vunpack.c.l.b16 %v1117
        %v1144 = vunpack.c.l.b16 %v1118
        %v1145 = vunpack.c.l.b16 %v1119
        %v1146 = vunpack.c.l.b16 %v1120
        %v1147 = vunpack.c.l.b16 %v1121
        %v1148 = vunpack.c.l.b16 %v1122
        %v1149 = vunpack.c.l.b16 %v1123
        %v1150 = vpack.c.b16 %v1142, %v1141
        %v1151 = vpack.c.b16 %v1144, %v1143
        %v1152 = vpack.c.b16 %v1146, %v1145
        %v1153 = vpack.c.b16 %v1148, %v1147
        %v1154 = vpack.c.b16 %v1149, %v1149
        %v1163 = vunpack.c.l.b16 %v1124
        %v1164 = vunpack.c.l.b16 %v1125
        %v1165 = vunpack.c.l.b16 %v1126
        %v1166 = vunpack.c.l.b16 %v1127
        %v1167 = vunpack.c.l.b16 %v1128
        %v1168 = vunpack.c.l.b16 %v1129
        %v1169 = vunpack.c.l.b16 %v1130
        %v1170 = vunpack.c.l.b16 %v1131
        %v1171 = vpack.c.b16 %v1164, %v1163
        %v1172 = vpack.c.b16 %v1166, %v1165
        %v1173 = vpack.c.b16 %v1168, %v1167
        %v1174 = vpack.c.b16 %v1170, %v1169
        %vm1179 = vcmask 523264
        %v1181 = vsel %vm1179, %v1150, 0
        %v1184 = vsel %vm1179, %v1151, 0
        %v1187 = vsel %vm1179, %v1152, 0
        %v1190 = vsel %vm1179, %v1153, 0
        %v1193 = vsel %vm1179, %v1154, 0
        %1195 = vmatpush.bf16.msra.mxu0 0
        %1196 = vmatpush.bf16.msra.mxu0 0
        %1197 = vmatpush.bf16.msra.mxu0 0
        %1198 = vmatpush.bf16.msra.mxu0 0
        %1199 = vmatpush.bf16.msra.mxu0 %v1174
        %1200 = vmatpush.bf16.msra.mxu0 %v1173
        %1201 = vmatpush.bf16.msra.mxu0 %v1172
        %1202 = vmatpush.bf16.msra.mxu0 %v1171
        %1203 = vmatmul.bf16.gmra.mxu0 %v1181
        %v1204 = vpop.f32.mrf.mxu0
        %v1205 = vadd.f32 0.0, %v1204
        %v1206 = vpop.f32.mrf.mxu0
        %v1207 = vadd.f32 0.0, %v1206
        %1208 = vmatmul.bf16.gmra.mxu0 %v1184
        %v1209 = vpop.f32.mrf.mxu0
        %v1210 = vadd.f32 0.0, %v1209
        %v1211 = vpop.f32.mrf.mxu0
        %v1212 = vadd.f32 0.0, %v1211
        %1213 = vmatmul.bf16.gmra.mxu0 %v1187
        %v1214 = vpop.f32.mrf.mxu0
        %v1215 = vadd.f32 0.0, %v1214
        %v1216 = vpop.f32.mrf.mxu0
        %v1217 = vadd.f32 0.0, %v1216
        %1218 = vmatmul.bf16.gmra.mxu0 %v1190
        %v1219 = vpop.f32.mrf.mxu0
        %v1220 = vadd.f32 0.0, %v1219
        %v1221 = vpop.f32.mrf.mxu0
        %v1222 = vadd.f32 0.0, %v1221
        %1223 = vmatmul.bf16.gmra.mxu0 %v1193
        %v1224 = vpop.f32.mrf.mxu0
        %v1225 = vadd.f32 0.0, %v1224
        %v1226 = vpop.f32.mrf.mxu0
        %1227 = vdwg.mxu0
        %1228 = vst.msk [vmem:[#allocation3] sm:$0xff] %vm1179, %v1205
        %1229 = vst.msk [vmem:[#allocation3 + $0x8] sm:$0xff] %vm1179, %v1207
        %1230 = vst.msk [vmem:[#allocation3 + $0x10] sm:$0xff] %vm1179, %v1210
        %1231 = vst.msk [vmem:[#allocation3 + $0x18] sm:$0xff] %vm1179, %v1212
        %1232 = vst.msk [vmem:[#allocation3 + $0x20] sm:$0xff] %vm1179, %v1215
        %1233 = vst.msk [vmem:[#allocation3 + $0x28] sm:$0xff] %vm1179, %v1217
        %1234 = vst.msk [vmem:[#allocation3 + $0x30] sm:$0xff] %vm1179, %v1220
        %1235 = vst.msk [vmem:[#allocation3 + $0x38] sm:$0xff] %vm1179, %v1222
        %1236 = vst.msk [vmem:[#allocation3 + $0x40] sm:$0xff] %vm1179, %v1225
        %s1237 = scalar_lea.vmem [#allocation2], 4
        %v1238 = vld [vmem:[%s1237] sm:$0xf]
        %v1239 = vld [vmem:[%s1237 + $0x4] sm:$0xf]
        %v1240 = vld [vmem:[%s1237 + $0x8] sm:$0xf]
        %v1241 = vld [vmem:[%s1237 + $0x14] sm:$0xf]
        %v1242 = vld [vmem:[%s1237 + $0x18] sm:$0xf]
        %v1243 = vld [vmem:[%s1237 + $0x1c] sm:$0xf]
        %v1244 = vld [vmem:[%s1237 + $0x28] sm:$0xf]
        %v1245 = vld [vmem:[%s1237 + $0x2c] sm:$0xf]
        %v1246 = vld [vmem:[%s1237 + $0x30] sm:$0xf]
        %s1247 = scalar_lea.vmem %s3, 32
        %v1248 = vld [vmem:[%s1247] sm:$0xf]
        %v1249 = vld [vmem:[%s1247 + $0x4] sm:$0xf]
        %v1250 = vld [vmem:[%s1247 + $0x8] sm:$0xf]
        %v1251 = vld [vmem:[%s1247 + $0xc] sm:$0xf]
        %v1252 = vld [vmem:[%s1247 + $0x10] sm:$0xf]
        %v1253 = vld [vmem:[%s1247 + $0x14] sm:$0xf]
        %v1254 = vld [vmem:[%s1247 + $0x18] sm:$0xf]
        %v1255 = vld [vmem:[%s1247 + $0x1c] sm:$0xf]
        %v1265 = vunpack.c.l.b16 %v1238
        %v1266 = vunpack.c.l.b16 %v1239
        %v1267 = vunpack.c.l.b16 %v1240
        %v1268 = vunpack.c.l.b16 %v1241
        %v1269 = vunpack.c.l.b16 %v1242
        %v1270 = vunpack.c.l.b16 %v1243
        %v1271 = vunpack.c.l.b16 %v1244
        %v1272 = vunpack.c.l.b16 %v1245
        %v1273 = vunpack.c.l.b16 %v1246
        %v1274 = vpack.c.b16 %v1266, %v1265
        %v1275 = vpack.c.b16 %v1268, %v1267
        %v1276 = vpack.c.b16 %v1270, %v1269
        %v1277 = vpack.c.b16 %v1272, %v1271
        %v1278 = vpack.c.b16 %v1273, %v1273
        %v1287 = vunpack.c.l.b16 %v1248
        %v1288 = vunpack.c.l.b16 %v1249
        %v1289 = vunpack.c.l.b16 %v1250
        %v1290 = vunpack.c.l.b16 %v1251
        %v1291 = vunpack.c.l.b16 %v1252
        %v1292 = vunpack.c.l.b16 %v1253
        %v1293 = vunpack.c.l.b16 %v1254
        %v1294 = vunpack.c.l.b16 %v1255
        %v1295 = vpack.c.b16 %v1288, %v1287
        %v1296 = vpack.c.b16 %v1290, %v1289
        %v1297 = vpack.c.b16 %v1292, %v1291
        %v1298 = vpack.c.b16 %v1294, %v1293
        %v1304 = vsel %vm1179, %v1274, 0
        %v1307 = vsel %vm1179, %v1275, 0
        %v1310 = vsel %vm1179, %v1276, 0
        %v1313 = vsel %vm1179, %v1277, 0
        %v1316 = vsel %vm1179, %v1278, 0
        %1318 = vmatpush.bf16.msra.mxu0 0
        %1319 = vmatpush.bf16.msra.mxu0 0
        %1320 = vmatpush.bf16.msra.mxu0 0
        %1321 = vmatpush.bf16.msra.mxu0 0
        %1322 = vmatpush.bf16.msra.mxu0 %v1298
        %1323 = vmatpush.bf16.msra.mxu0 %v1297
        %1324 = vmatpush.bf16.msra.mxu0 %v1296
        %1325 = vmatpush.bf16.msra.mxu0 %v1295
        %1326 = vmatmul.bf16.gmra.mxu0 %v1304
        %v1327 = vpop.f32.mrf.mxu0
        %v1328 = vadd.f32 0.0, %v1327
        %v1329 = vpop.f32.mrf.mxu0
        %v1330 = vadd.f32 0.0, %v1329
        %1331 = vmatmul.bf16.gmra.mxu0 %v1307
        %v1332 = vpop.f32.mrf.mxu0
        %v1333 = vadd.f32 0.0, %v1332
        %v1334 = vpop.f32.mrf.mxu0
        %v1335 = vadd.f32 0.0, %v1334
        %1336 = vmatmul.bf16.gmra.mxu0 %v1310
        %v1337 = vpop.f32.mrf.mxu0
        %v1338 = vadd.f32 0.0, %v1337
        %v1339 = vpop.f32.mrf.mxu0
        %v1340 = vadd.f32 0.0, %v1339
        %1341 = vmatmul.bf16.gmra.mxu0 %v1313
        %v1342 = vpop.f32.mrf.mxu0
        %v1343 = vadd.f32 0.0, %v1342
        %v1344 = vpop.f32.mrf.mxu0
        %v1345 = vadd.f32 0.0, %v1344
        %1346 = vmatmul.bf16.gmra.mxu0 %v1316
        %v1347 = vpop.f32.mrf.mxu0
        %v1348 = vadd.f32 0.0, %v1347
        %v1349 = vpop.f32.mrf.mxu0
        %1350 = vdwg.mxu0
        %v1351 = vld [vmem:[#allocation3] sm:$0xff]
        %v1352 = vld [vmem:[#allocation3 + $0x8] sm:$0xff]
        %v1353 = vld [vmem:[#allocation3 + $0x10] sm:$0xff]
        %v1354 = vld [vmem:[#allocation3 + $0x18] sm:$0xff]
        %v1355 = vld [vmem:[#allocation3 + $0x20] sm:$0xff]
        %v1356 = vld [vmem:[#allocation3 + $0x28] sm:$0xff]
        %v1357 = vld [vmem:[#allocation3 + $0x30] sm:$0xff]
        %v1358 = vld [vmem:[#allocation3 + $0x38] sm:$0xff]
        %v1359 = vld [vmem:[#allocation3 + $0x40] sm:$0xff]
        %v1360 = vadd.f32 %v1351, %v1328
        %v1361 = vadd.f32 %v1352, %v1330
        %v1362 = vadd.f32 %v1353, %v1333
        %v1363 = vadd.f32 %v1354, %v1335
        %v1364 = vadd.f32 %v1355, %v1338
        %v1365 = vadd.f32 %v1356, %v1340
        %v1366 = vadd.f32 %v1357, %v1343
        %v1367 = vadd.f32 %v1358, %v1345
        %v1368 = vadd.f32 %v1359, %v1348
        %1369 = vst.msk [vmem:[#allocation3] sm:$0xff] %vm1179, %v1360
        %1370 = vst.msk [vmem:[#allocation3 + $0x8] sm:$0xff] %vm1179, %v1361
        %1371 = vst.msk [vmem:[#allocation3 + $0x10] sm:$0xff] %vm1179, %v1362
        %1372 = vst.msk [vmem:[#allocation3 + $0x18] sm:$0xff] %vm1179, %v1363
        %1373 = vst.msk [vmem:[#allocation3 + $0x20] sm:$0xff] %vm1179, %v1364
        %1374 = vst.msk [vmem:[#allocation3 + $0x28] sm:$0xff] %vm1179, %v1365
        %1375 = vst.msk [vmem:[#allocation3 + $0x30] sm:$0xff] %vm1179, %v1366
        %1376 = vst.msk [vmem:[#allocation3 + $0x38] sm:$0xff] %vm1179, %v1367
        %1377 = vst.msk [vmem:[#allocation3 + $0x40] sm:$0xff] %vm1179, %v1368
        %s1378 = scalar_lea.vmem [#allocation2], 8
        %v1379 = vld [vmem:[%s1378] sm:$0xf]
        %v1380 = vld [vmem:[%s1378 + $0x4] sm:$0xf]
        %v1381 = vld [vmem:[%s1378 + $0x8] sm:$0xf]
        %v1382 = vld [vmem:[%s1378 + $0x14] sm:$0xf]
        %v1383 = vld [vmem:[%s1378 + $0x18] sm:$0xf]
        %v1384 = vld [vmem:[%s1378 + $0x1c] sm:$0xf]
        %v1385 = vld [vmem:[%s1378 + $0x28] sm:$0xf]
        %v1386 = vld [vmem:[%s1378 + $0x2c] sm:$0xf]
        %v1387 = vld [vmem:[%s1378 + $0x30] sm:$0xf]
        %s1388 = scalar_lea.vmem %s3, 64
        %v1389 = vld [vmem:[%s1388] sm:$0xf]
        %v1390 = vld [vmem:[%s1388 + $0x4] sm:$0xf]
        %v1391 = vld [vmem:[%s1388 + $0x8] sm:$0xf]
        %v1392 = vld [vmem:[%s1388 + $0xc] sm:$0xf]
        %v1393 = vld [vmem:[%s1388 + $0x10] sm:$0xf]
        %v1394 = vld [vmem:[%s1388 + $0x14] sm:$0xf]
        %v1395 = vld [vmem:[%s1388 + $0x18] sm:$0xf]
        %v1396 = vld [vmem:[%s1388 + $0x1c] sm:$0xf]
        %v1406 = vunpack.c.l.b16 %v1379
        %v1407 = vunpack.c.l.b16 %v1380
        %v1408 = vunpack.c.l.b16 %v1381
        %v1409 = vunpack.c.l.b16 %v1382
        %v1410 = vunpack.c.l.b16 %v1383
        %v1411 = vunpack.c.l.b16 %v1384
        %v1412 = vunpack.c.l.b16 %v1385
        %v1413 = vunpack.c.l.b16 %v1386
        %v1414 = vunpack.c.l.b16 %v1387
        %v1415 = vpack.c.b16 %v1407, %v1406
        %v1416 = vpack.c.b16 %v1409, %v1408
        %v1417 = vpack.c.b16 %v1411, %v1410
        %v1418 = vpack.c.b16 %v1413, %v1412
        %v1419 = vpack.c.b16 %v1414, %v1414
        %v1428 = vunpack.c.l.b16 %v1389
        %v1429 = vunpack.c.l.b16 %v1390
        %v1430 = vunpack.c.l.b16 %v1391
        %v1431 = vunpack.c.l.b16 %v1392
        %v1432 = vunpack.c.l.b16 %v1393
        %v1433 = vunpack.c.l.b16 %v1394
        %v1434 = vunpack.c.l.b16 %v1395
        %v1435 = vunpack.c.l.b16 %v1396
        %v1436 = vpack.c.b16 %v1429, %v1428
        %v1437 = vpack.c.b16 %v1431, %v1430
        %v1438 = vpack.c.b16 %v1433, %v1432
        %v1439 = vpack.c.b16 %v1435, %v1434
        %v1445 = vsel %vm1179, %v1415, 0
        %v1448 = vsel %vm1179, %v1416, 0
        %v1451 = vsel %vm1179, %v1417, 0
        %v1454 = vsel %vm1179, %v1418, 0
        %v1457 = vsel %vm1179, %v1419, 0
        %1459 = vmatpush.bf16.msra.mxu0 0
        %1460 = vmatpush.bf16.msra.mxu0 0
        %1461 = vmatpush.bf16.msra.mxu0 0
        %1462 = vmatpush.bf16.msra.mxu0 0
        %1463 = vmatpush.bf16.msra.mxu0 %v1439
        %1464 = vmatpush.bf16.msra.mxu0 %v1438
        %1465 = vmatpush.bf16.msra.mxu0 %v1437
        %1466 = vmatpush.bf16.msra.mxu0 %v1436
        %1467 = vmatmul.bf16.gmra.mxu0 %v1445
        %v1468 = vpop.f32.mrf.mxu0
        %v1469 = vadd.f32 0.0, %v1468
        %v1470 = vpop.f32.mrf.mxu0
        %v1471 = vadd.f32 0.0, %v1470
        %1472 = vmatmul.bf16.gmra.mxu0 %v1448
        %v1473 = vpop.f32.mrf.mxu0
        %v1474 = vadd.f32 0.0, %v1473
        %v1475 = vpop.f32.mrf.mxu0
        %v1476 = vadd.f32 0.0, %v1475
        %1477 = vmatmul.bf16.gmra.mxu0 %v1451
        %v1478 = vpop.f32.mrf.mxu0
        %v1479 = vadd.f32 0.0, %v1478
        %v1480 = vpop.f32.mrf.mxu0
        %v1481 = vadd.f32 0.0, %v1480
        %1482 = vmatmul.bf16.gmra.mxu0 %v1454
        %v1483 = vpop.f32.mrf.mxu0
        %v1484 = vadd.f32 0.0, %v1483
        %v1485 = vpop.f32.mrf.mxu0
        %v1486 = vadd.f32 0.0, %v1485
        %1487 = vmatmul.bf16.gmra.mxu0 %v1457
        %v1488 = vpop.f32.mrf.mxu0
        %v1489 = vadd.f32 0.0, %v1488
        %v1490 = vpop.f32.mrf.mxu0
        %1491 = vdwg.mxu0
        %v1492 = vld [vmem:[#allocation3] sm:$0xff]
        %v1493 = vld [vmem:[#allocation3 + $0x8] sm:$0xff]
        %v1494 = vld [vmem:[#allocation3 + $0x10] sm:$0xff]
        %v1495 = vld [vmem:[#allocation3 + $0x18] sm:$0xff]
        %v1496 = vld [vmem:[#allocation3 + $0x20] sm:$0xff]
        %v1497 = vld [vmem:[#allocation3 + $0x28] sm:$0xff]
        %v1498 = vld [vmem:[#allocation3 + $0x30] sm:$0xff]
        %v1499 = vld [vmem:[#allocation3 + $0x38] sm:$0xff]
        %v1500 = vld [vmem:[#allocation3 + $0x40] sm:$0xff]
        %v1501 = vadd.f32 %v1492, %v1469
        %v1502 = vadd.f32 %v1493, %v1471
        %v1503 = vadd.f32 %v1494, %v1474
        %v1504 = vadd.f32 %v1495, %v1476
        %v1505 = vadd.f32 %v1496, %v1479
        %v1506 = vadd.f32 %v1497, %v1481
        %v1507 = vadd.f32 %v1498, %v1484
        %v1508 = vadd.f32 %v1499, %v1486
        %v1509 = vadd.f32 %v1500, %v1489
        %1510 = vst.msk [vmem:[#allocation3] sm:$0xff] %vm1179, %v1501
        %1511 = vst.msk [vmem:[#allocation3 + $0x8] sm:$0xff] %vm1179, %v1502
        %1512 = vst.msk [vmem:[#allocation3 + $0x10] sm:$0xff] %vm1179, %v1503
        %1513 = vst.msk [vmem:[#allocation3 + $0x18] sm:$0xff] %vm1179, %v1504
        %1514 = vst.msk [vmem:[#allocation3 + $0x20] sm:$0xff] %vm1179, %v1505
        %1515 = vst.msk [vmem:[#allocation3 + $0x28] sm:$0xff] %vm1179, %v1506
        %1516 = vst.msk [vmem:[#allocation3 + $0x30] sm:$0xff] %vm1179, %v1507
        %1517 = vst.msk [vmem:[#allocation3 + $0x38] sm:$0xff] %vm1179, %v1508
        %1518 = vst.msk [vmem:[#allocation3 + $0x40] sm:$0xff] %vm1179, %v1509
        %v1519 = vld [vmem:[%s722] sm:$0xf]
        %v1520 = vld [vmem:[%s722 + $0x4] sm:$0xf]
        %v1521 = vld [vmem:[%s722 + $0x8] sm:$0xf]
        %v1522 = vld [vmem:[%s722 + $0x14] sm:$0xf]
        %v1523 = vld [vmem:[%s722 + $0x18] sm:$0xf]
        %v1524 = vld [vmem:[%s722 + $0x1c] sm:$0xf]
        %v1525 = vld [vmem:[%s722 + $0x28] sm:$0xf]
        %v1526 = vld [vmem:[%s722 + $0x2c] sm:$0xf]
        %v1527 = vld [vmem:[%s722 + $0x30] sm:$0xf]
        %s1528 = scalar_lea.vmem %s3, 96
        %v1529 = vld [vmem:[%s1528] sm:$0xf]
        %v1530 = vld [vmem:[%s1528 + $0x4] sm:$0xf]
        %v1531 = vld [vmem:[%s1528 + $0x8] sm:$0xf]
        %v1532 = vld [vmem:[%s1528 + $0xc] sm:$0xf]
        %v1533 = vld [vmem:[%s1528 + $0x10] sm:$0xf]
        %v1534 = vld [vmem:[%s1528 + $0x14] sm:$0xf]
        %v1535 = vld [vmem:[%s1528 + $0x18] sm:$0xf]
        %v1536 = vld [vmem:[%s1528 + $0x1c] sm:$0xf]
        %v1546 = vunpack.c.l.b16 %v1519
        %v1547 = vunpack.c.l.b16 %v1520
        %v1548 = vunpack.c.l.b16 %v1521
        %v1549 = vunpack.c.l.b16 %v1522
        %v1550 = vunpack.c.l.b16 %v1523
        %v1551 = vunpack.c.l.b16 %v1524
        %v1552 = vunpack.c.l.b16 %v1525
        %v1553 = vunpack.c.l.b16 %v1526
        %v1554 = vunpack.c.l.b16 %v1527
        %v1555 = vpack.c.b16 %v1547, %v1546
        %v1556 = vpack.c.b16 %v1549, %v1548
        %v1557 = vpack.c.b16 %v1551, %v1550
        %v1558 = vpack.c.b16 %v1553, %v1552
        %v1559 = vpack.c.b16 %v1554, %v1554
        %v1568 = vunpack.c.l.b16 %v1529
        %v1569 = vunpack.c.l.b16 %v1530
        %v1570 = vunpack.c.l.b16 %v1531
        %v1571 = vunpack.c.l.b16 %v1532
        %v1572 = vunpack.c.l.b16 %v1533
        %v1573 = vunpack.c.l.b16 %v1534
        %v1574 = vunpack.c.l.b16 %v1535
        %v1575 = vunpack.c.l.b16 %v1536
        %v1576 = vpack.c.b16 %v1569, %v1568
        %v1577 = vpack.c.b16 %v1571, %v1570
        %v1578 = vpack.c.b16 %v1573, %v1572
        %v1579 = vpack.c.b16 %v1575, %v1574
        %v1585 = vsel %vm1179, %v1555, 0
        %v1588 = vsel %vm1179, %v1556, 0
        %v1591 = vsel %vm1179, %v1557, 0
        %v1594 = vsel %vm1179, %v1558, 0
        %v1597 = vsel %vm1179, %v1559, 0
        %1599 = vmatpush.bf16.msra.mxu0 0
        %1600 = vmatpush.bf16.msra.mxu0 0
        %1601 = vmatpush.bf16.msra.mxu0 0
        %1602 = vmatpush.bf16.msra.mxu0 0
        %1603 = vmatpush.bf16.msra.mxu0 %v1579
        %1604 = vmatpush.bf16.msra.mxu0 %v1578
        %1605 = vmatpush.bf16.msra.mxu0 %v1577
        %1606 = vmatpush.bf16.msra.mxu0 %v1576
        %1607 = vmatmul.bf16.gmra.mxu0 %v1585
        %v1608 = vpop.f32.mrf.mxu0
        %v1609 = vadd.f32 0.0, %v1608
        %v1610 = vpop.f32.mrf.mxu0
        %v1611 = vadd.f32 0.0, %v1610
        %1612 = vmatmul.bf16.gmra.mxu0 %v1588
        %v1613 = vpop.f32.mrf.mxu0
        %v1614 = vadd.f32 0.0, %v1613
        %v1615 = vpop.f32.mrf.mxu0
        %v1616 = vadd.f32 0.0, %v1615
        %1617 = vmatmul.bf16.gmra.mxu0 %v1591
        %v1618 = vpop.f32.mrf.mxu0
        %v1619 = vadd.f32 0.0, %v1618
        %v1620 = vpop.f32.mrf.mxu0
        %v1621 = vadd.f32 0.0, %v1620
        %1622 = vmatmul.bf16.gmra.mxu0 %v1594
        %v1623 = vpop.f32.mrf.mxu0
        %v1624 = vadd.f32 0.0, %v1623
        %v1625 = vpop.f32.mrf.mxu0
        %v1626 = vadd.f32 0.0, %v1625
        %1627 = vmatmul.bf16.gmra.mxu0 %v1597
        %v1628 = vpop.f32.mrf.mxu0
        %v1629 = vadd.f32 0.0, %v1628
        %v1630 = vpop.f32.mrf.mxu0
        %1631 = vdwg.mxu0
        %v1632 = vld [vmem:[#allocation3] sm:$0xff]
        %v1633 = vld [vmem:[#allocation3 + $0x8] sm:$0xff]
        %v1634 = vld [vmem:[#allocation3 + $0x10] sm:$0xff]
        %v1635 = vld [vmem:[#allocation3 + $0x18] sm:$0xff]
        %v1636 = vld [vmem:[#allocation3 + $0x20] sm:$0xff]
        %v1637 = vld [vmem:[#allocation3 + $0x28] sm:$0xff]
        %v1638 = vld [vmem:[#allocation3 + $0x30] sm:$0xff]
        %v1639 = vld [vmem:[#allocation3 + $0x38] sm:$0xff]
        %v1640 = vld [vmem:[#allocation3 + $0x40] sm:$0xff]
        %v1641 = vadd.f32 %v1632, %v1609
        %v1642 = vadd.f32 %v1633, %v1611
        %v1643 = vadd.f32 %v1634, %v1614
        %v1644 = vadd.f32 %v1635, %v1616
        %v1645 = vadd.f32 %v1636, %v1619
        %v1646 = vadd.f32 %v1637, %v1621
        %v1647 = vadd.f32 %v1638, %v1624
        %v1648 = vadd.f32 %v1639, %v1626
        %v1649 = vadd.f32 %v1640, %v1629
        %1650 = vst.msk [vmem:[#allocation3] sm:$0xff] %vm1179, %v1641
        %1651 = vst.msk [vmem:[#allocation3 + $0x8] sm:$0xff] %vm1179, %v1642
        %1652 = vst.msk [vmem:[#allocation3 + $0x10] sm:$0xff] %vm1179, %v1643
        %1653 = vst.msk [vmem:[#allocation3 + $0x18] sm:$0xff] %vm1179, %v1644
        %1654 = vst.msk [vmem:[#allocation3 + $0x20] sm:$0xff] %vm1179, %v1645
        %1655 = vst.msk [vmem:[#allocation3 + $0x28] sm:$0xff] %vm1179, %v1646
        %1656 = vst.msk [vmem:[#allocation3 + $0x30] sm:$0xff] %vm1179, %v1647
        %1657 = vst.msk [vmem:[#allocation3 + $0x38] sm:$0xff] %vm1179, %v1648
        %1658 = vst.msk [vmem:[#allocation3 + $0x40] sm:$0xff] %vm1179, %v1649
        %s1659 = scalar_lea.vmem [#allocation2], 24
        %v1660 = vld [vmem:[%s1659] sm:$0xf]
        %v1661 = vld [vmem:[%s1659 + $0x4] sm:$0xf]
        %v1662 = vld [vmem:[%s1659 + $0x8] sm:$0xf]
        %v1663 = vld [vmem:[%s1659 + $0x14] sm:$0xf]
        %v1664 = vld [vmem:[%s1659 + $0x18] sm:$0xf]
        %v1665 = vld [vmem:[%s1659 + $0x1c] sm:$0xf]
        %v1666 = vld [vmem:[%s1659 + $0x28] sm:$0xf]
        %v1667 = vld [vmem:[%s1659 + $0x2c] sm:$0xf]
        %v1668 = vld [vmem:[%s1659 + $0x30] sm:$0xf]
        %s1669 = scalar_lea.vmem %s3, 128
        %v1670 = vld [vmem:[%s1669] sm:$0xf]
        %v1671 = vld [vmem:[%s1669 + $0x4] sm:$0xf]
        %v1672 = vld [vmem:[%s1669 + $0x8] sm:$0xf]
        %v1673 = vld [vmem:[%s1669 + $0xc] sm:$0xf]
        %v1674 = vld [vmem:[%s1669 + $0x10] sm:$0xf]
        %v1675 = vld [vmem:[%s1669 + $0x14] sm:$0xf]
        %v1676 = vld [vmem:[%s1669 + $0x18] sm:$0xf]
        %v1677 = vld [vmem:[%s1669 + $0x1c] sm:$0xf]
        %v1687 = vunpack.c.l.b16 %v1660
        %v1688 = vunpack.c.l.b16 %v1661
        %v1689 = vunpack.c.l.b16 %v1662
        %v1690 = vunpack.c.l.b16 %v1663
        %v1691 = vunpack.c.l.b16 %v1664
        %v1692 = vunpack.c.l.b16 %v1665
        %v1693 = vunpack.c.l.b16 %v1666
        %v1694 = vunpack.c.l.b16 %v1667
        %v1695 = vunpack.c.l.b16 %v1668
        %v1696 = vpack.c.b16 %v1688, %v1687
        %v1697 = vpack.c.b16 %v1690, %v1689
        %v1698 = vpack.c.b16 %v1692, %v1691
        %v1699 = vpack.c.b16 %v1694, %v1693
        %v1700 = vpack.c.b16 %v1695, %v1695
        %v1709 = vunpack.c.l.b16 %v1670
        %v1710 = vunpack.c.l.b16 %v1671
        %v1711 = vunpack.c.l.b16 %v1672
        %v1712 = vunpack.c.l.b16 %v1673
        %v1713 = vunpack.c.l.b16 %v1674
        %v1714 = vunpack.c.l.b16 %v1675
        %v1715 = vunpack.c.l.b16 %v1676
        %v1716 = vunpack.c.l.b16 %v1677
        %v1717 = vpack.c.b16 %v1710, %v1709
        %v1718 = vpack.c.b16 %v1712, %v1711
        %v1719 = vpack.c.b16 %v1714, %v1713
        %v1720 = vpack.c.b16 %v1716, %v1715
        %v1726 = vsel %vm1179, %v1696, 0
        %v1729 = vsel %vm1179, %v1697, 0
        %v1732 = vsel %vm1179, %v1698, 0
        %v1735 = vsel %vm1179, %v1699, 0
        %v1738 = vsel %vm1179, %v1700, 0
        %1740 = vmatpush.bf16.msra.mxu0 0
        %1741 = vmatpush.bf16.msra.mxu0 0
        %1742 = vmatpush.bf16.msra.mxu0 0
        %1743 = vmatpush.bf16.msra.mxu0 0
        %1744 = vmatpush.bf16.msra.mxu0 %v1720
        %1745 = vmatpush.bf16.msra.mxu0 %v1719
        %1746 = vmatpush.bf16.msra.mxu0 %v1718
        %1747 = vmatpush.bf16.msra.mxu0 %v1717
        %1748 = vmatmul.bf16.gmra.mxu0 %v1726
        %v1749 = vpop.f32.mrf.mxu0
        %v1750 = vadd.f32 0.0, %v1749
        %v1751 = vpop.f32.mrf.mxu0
        %v1752 = vadd.f32 0.0, %v1751
        %1753 = vmatmul.bf16.gmra.mxu0 %v1729
        %v1754 = vpop.f32.mrf.mxu0
        %v1755 = vadd.f32 0.0, %v1754
        %v1756 = vpop.f32.mrf.mxu0
        %v1757 = vadd.f32 0.0, %v1756
        %1758 = vmatmul.bf16.gmra.mxu0 %v1732
        %v1759 = vpop.f32.mrf.mxu0
        %v1760 = vadd.f32 0.0, %v1759
        %v1761 = vpop.f32.mrf.mxu0
        %v1762 = vadd.f32 0.0, %v1761
        %1763 = vmatmul.bf16.gmra.mxu0 %v1735
        %v1764 = vpop.f32.mrf.mxu0
        %v1765 = vadd.f32 0.0, %v1764
        %v1766 = vpop.f32.mrf.mxu0
        %v1767 = vadd.f32 0.0, %v1766
        %1768 = vmatmul.bf16.gmra.mxu0 %v1738
        %v1769 = vpop.f32.mrf.mxu0
        %v1770 = vadd.f32 0.0, %v1769
        %v1771 = vpop.f32.mrf.mxu0
        %1772 = vdwg.mxu0
        %v1773 = vld [vmem:[#allocation3] sm:$0xff]
        %v1774 = vld [vmem:[#allocation3 + $0x8] sm:$0xff]
        %v1775 = vld [vmem:[#allocation3 + $0x10] sm:$0xff]
        %v1776 = vld [vmem:[#allocation3 + $0x18] sm:$0xff]
        %v1777 = vld [vmem:[#allocation3 + $0x20] sm:$0xff]
        %v1778 = vld [vmem:[#allocation3 + $0x28] sm:$0xff]
        %v1779 = vld [vmem:[#allocation3 + $0x30] sm:$0xff]
        %v1780 = vld [vmem:[#allocation3 + $0x38] sm:$0xff]
        %v1781 = vld [vmem:[#allocation3 + $0x40] sm:$0xff]
        %v1782 = vadd.f32 %v1773, %v1750
        %v1783 = vadd.f32 %v1774, %v1752
        %v1784 = vadd.f32 %v1775, %v1755
        %v1785 = vadd.f32 %v1776, %v1757
        %v1786 = vadd.f32 %v1777, %v1760
        %v1787 = vadd.f32 %v1778, %v1762
        %v1788 = vadd.f32 %v1779, %v1765
        %v1789 = vadd.f32 %v1780, %v1767
        %v1790 = vadd.f32 %v1781, %v1770
        %1791 = vst.msk [vmem:[#allocation3] sm:$0xff] %vm1179, %v1782
        %1792 = vst.msk [vmem:[#allocation3 + $0x8] sm:$0xff] %vm1179, %v1783
        %1793 = vst.msk [vmem:[#allocation3 + $0x10] sm:$0xff] %vm1179, %v1784
        %1794 = vst.msk [vmem:[#allocation3 + $0x18] sm:$0xff] %vm1179, %v1785
        %1795 = vst.msk [vmem:[#allocation3 + $0x20] sm:$0xff] %vm1179, %v1786
        %1796 = vst.msk [vmem:[#allocation3 + $0x28] sm:$0xff] %vm1179, %v1787
        %1797 = vst.msk [vmem:[#allocation3 + $0x30] sm:$0xff] %vm1179, %v1788
        %1798 = vst.msk [vmem:[#allocation3 + $0x38] sm:$0xff] %vm1179, %v1789
        %1799 = vst.msk [vmem:[#allocation3 + $0x40] sm:$0xff] %vm1179, %v1790
        %s1800 = scalar_lea.vmem [#allocation2], 28
        %v1801 = vld [vmem:[%s1800] sm:$0xf]
        %v1802 = vld [vmem:[%s1800 + $0x4] sm:$0xf]
        %v1803 = vld [vmem:[%s1800 + $0x8] sm:$0xf]
        %v1804 = vld [vmem:[%s1800 + $0x14] sm:$0xf]
        %v1805 = vld [vmem:[%s1800 + $0x18] sm:$0xf]
        %v1806 = vld [vmem:[%s1800 + $0x1c] sm:$0xf]
        %v1807 = vld [vmem:[%s1800 + $0x28] sm:$0xf]
        %v1808 = vld [vmem:[%s1800 + $0x2c] sm:$0xf]
        %v1809 = vld [vmem:[%s1800 + $0x30] sm:$0xf]
        %s1810 = scalar_lea.vmem %s3, 160
        %v1811 = vld [vmem:[%s1810] sm:$0xf]
        %v1812 = vld [vmem:[%s1810 + $0x4] sm:$0xf]
        %v1813 = vld [vmem:[%s1810 + $0x8] sm:$0xf]
        %v1814 = vld [vmem:[%s1810 + $0xc] sm:$0xf]
        %v1815 = vld [vmem:[%s1810 + $0x10] sm:$0xf]
        %v1816 = vld [vmem:[%s1810 + $0x14] sm:$0xf]
        %v1817 = vld [vmem:[%s1810 + $0x18] sm:$0xf]
        %v1818 = vld [vmem:[%s1810 + $0x1c] sm:$0xf]
        %v1828 = vunpack.c.l.b16 %v1801
        %v1829 = vunpack.c.l.b16 %v1802
        %v1830 = vunpack.c.l.b16 %v1803
        %v1831 = vunpack.c.l.b16 %v1804
        %v1832 = vunpack.c.l.b16 %v1805
        %v1833 = vunpack.c.l.b16 %v1806
        %v1834 = vunpack.c.l.b16 %v1807
        %v1835 = vunpack.c.l.b16 %v1808
        %v1836 = vunpack.c.l.b16 %v1809
        %v1837 = vpack.c.b16 %v1829, %v1828
        %v1838 = vpack.c.b16 %v1831, %v1830
        %v1839 = vpack.c.b16 %v1833, %v1832
        %v1840 = vpack.c.b16 %v1835, %v1834
        %v1841 = vpack.c.b16 %v1836, %v1836
        %v1850 = vunpack.c.l.b16 %v1811
        %v1851 = vunpack.c.l.b16 %v1812
        %v1852 = vunpack.c.l.b16 %v1813
        %v1853 = vunpack.c.l.b16 %v1814
        %v1854 = vunpack.c.l.b16 %v1815
        %v1855 = vunpack.c.l.b16 %v1816
        %v1856 = vunpack.c.l.b16 %v1817
        %v1857 = vunpack.c.l.b16 %v1818
        %v1858 = vpack.c.b16 %v1851, %v1850
        %v1859 = vpack.c.b16 %v1853, %v1852
        %v1860 = vpack.c.b16 %v1855, %v1854
        %v1861 = vpack.c.b16 %v1857, %v1856
        %v1867 = vsel %vm1179, %v1837, 0
        %v1870 = vsel %vm1179, %v1838, 0
        %v1873 = vsel %vm1179, %v1839, 0
        %v1876 = vsel %vm1179, %v1840, 0
        %v1879 = vsel %vm1179, %v1841, 0
        %1881 = vmatpush.bf16.msra.mxu0 0
        %1882 = vmatpush.bf16.msra.mxu0 0
        %1883 = vmatpush.bf16.msra.mxu0 0
        %1884 = vmatpush.bf16.msra.mxu0 0
        %1885 = vmatpush.bf16.msra.mxu0 %v1861
        %1886 = vmatpush.bf16.msra.mxu0 %v1860
        %1887 = vmatpush.bf16.msra.mxu0 %v1859
        %1888 = vmatpush.bf16.msra.mxu0 %v1858
        %1889 = vmatmul.bf16.gmra.mxu0 %v1867
        %v1890 = vpop.f32.mrf.mxu0
        %v1891 = vadd.f32 0.0, %v1890
        %v1892 = vpop.f32.mrf.mxu0
        %v1893 = vadd.f32 0.0, %v1892
        %1894 = vmatmul.bf16.gmra.mxu0 %v1870
        %v1895 = vpop.f32.mrf.mxu0
        %v1896 = vadd.f32 0.0, %v1895
        %v1897 = vpop.f32.mrf.mxu0
        %v1898 = vadd.f32 0.0, %v1897
        %1899 = vmatmul.bf16.gmra.mxu0 %v1873
        %v1900 = vpop.f32.mrf.mxu0
        %v1901 = vadd.f32 0.0, %v1900
        %v1902 = vpop.f32.mrf.mxu0
        %v1903 = vadd.f32 0.0, %v1902
        %1904 = vmatmul.bf16.gmra.mxu0 %v1876
        %v1905 = vpop.f32.mrf.mxu0
        %v1906 = vadd.f32 0.0, %v1905
        %v1907 = vpop.f32.mrf.mxu0
        %v1908 = vadd.f32 0.0, %v1907
        %1909 = vmatmul.bf16.gmra.mxu0 %v1879
        %v1910 = vpop.f32.mrf.mxu0
        %v1911 = vadd.f32 0.0, %v1910
        %v1912 = vpop.f32.mrf.mxu0
        %1913 = vdwg.mxu0
        %v1914 = vld [vmem:[#allocation3] sm:$0xff]
        %v1915 = vld [vmem:[#allocation3 + $0x8] sm:$0xff]
        %v1916 = vld [vmem:[#allocation3 + $0x10] sm:$0xff]
        %v1917 = vld [vmem:[#allocation3 + $0x18] sm:$0xff]
        %v1918 = vld [vmem:[#allocation3 + $0x20] sm:$0xff]
        %v1919 = vld [vmem:[#allocation3 + $0x28] sm:$0xff]
        %v1920 = vld [vmem:[#allocation3 + $0x30] sm:$0xff]
        %v1921 = vld [vmem:[#allocation3 + $0x38] sm:$0xff]
        %v1922 = vld [vmem:[#allocation3 + $0x40] sm:$0xff]
        %v1923 = vadd.f32 %v1914, %v1891
        %v1924 = vadd.f32 %v1915, %v1893
        %v1925 = vadd.f32 %v1916, %v1896
        %v1926 = vadd.f32 %v1917, %v1898
        %v1927 = vadd.f32 %v1918, %v1901
        %v1928 = vadd.f32 %v1919, %v1903
        %v1929 = vadd.f32 %v1920, %v1906
        %v1930 = vadd.f32 %v1921, %v1908
        %v1931 = vadd.f32 %v1922, %v1911
        %1932 = vst.msk [vmem:[#allocation3] sm:$0xff] %vm1179, %v1923
        %1933 = vst.msk [vmem:[#allocation3 + $0x8] sm:$0xff] %vm1179, %v1924
        %1934 = vst.msk [vmem:[#allocation3 + $0x10] sm:$0xff] %vm1179, %v1925
        %1935 = vst.msk [vmem:[#allocation3 + $0x18] sm:$0xff] %vm1179, %v1926
        %1936 = vst.msk [vmem:[#allocation3 + $0x20] sm:$0xff] %vm1179, %v1927
        %1937 = vst.msk [vmem:[#allocation3 + $0x28] sm:$0xff] %vm1179, %v1928
        %1938 = vst.msk [vmem:[#allocation3 + $0x30] sm:$0xff] %vm1179, %v1929
        %1939 = vst.msk [vmem:[#allocation3 + $0x38] sm:$0xff] %vm1179, %v1930
        %1940 = vst.msk [vmem:[#allocation3 + $0x40] sm:$0xff] %vm1179, %v1931
        %v1941 = vld [vmem:[%s851] sm:$0xf]
        %v1942 = vld [vmem:[%s851 + $0x4] sm:$0xf]
        %v1943 = vld [vmem:[%s851 + $0x8] sm:$0xf]
        %v1944 = vld [vmem:[%s851 + $0x14] sm:$0xf]
        %v1945 = vld [vmem:[%s851 + $0x18] sm:$0xf]
        %v1946 = vld [vmem:[%s851 + $0x1c] sm:$0xf]
        %v1947 = vld [vmem:[%s851 + $0x28] sm:$0xf]
        %v1948 = vld [vmem:[%s851 + $0x2c] sm:$0xf]
        %v1949 = vld [vmem:[%s851 + $0x30] sm:$0xf]
        %s1950 = scalar_lea.vmem %s3, 192
        %v1951 = vld [vmem:[%s1950] sm:$0xf]
        %v1952 = vld [vmem:[%s1950 + $0x4] sm:$0xf]
        %v1953 = vld [vmem:[%s1950 + $0x8] sm:$0xf]
        %v1954 = vld [vmem:[%s1950 + $0xc] sm:$0xf]
        %v1955 = vld [vmem:[%s1950 + $0x10] sm:$0xf]
        %v1956 = vld [vmem:[%s1950 + $0x14] sm:$0xf]
        %v1957 = vld [vmem:[%s1950 + $0x18] sm:$0xf]
        %v1958 = vld [vmem:[%s1950 + $0x1c] sm:$0xf]
        %v1968 = vunpack.c.l.b16 %v1941
        %v1969 = vunpack.c.l.b16 %v1942
        %v1970 = vunpack.c.l.b16 %v1943
        %v1971 = vunpack.c.l.b16 %v1944
        %v1972 = vunpack.c.l.b16 %v1945
        %v1973 = vunpack.c.l.b16 %v1946
        %v1974 = vunpack.c.l.b16 %v1947
        %v1975 = vunpack.c.l.b16 %v1948
        %v1976 = vunpack.c.l.b16 %v1949
        %v1977 = vpack.c.b16 %v1969, %v1968
        %v1978 = vpack.c.b16 %v1971, %v1970
        %v1979 = vpack.c.b16 %v1973, %v1972
        %v1980 = vpack.c.b16 %v1975, %v1974
        %v1981 = vpack.c.b16 %v1976, %v1976
        %v1990 = vunpack.c.l.b16 %v1951
        %v1991 = vunpack.c.l.b16 %v1952
        %v1992 = vunpack.c.l.b16 %v1953
        %v1993 = vunpack.c.l.b16 %v1954
        %v1994 = vunpack.c.l.b16 %v1955
        %v1995 = vunpack.c.l.b16 %v1956
        %v1996 = vunpack.c.l.b16 %v1957
        %v1997 = vunpack.c.l.b16 %v1958
        %v1998 = vpack.c.b16 %v1991, %v1990
        %v1999 = vpack.c.b16 %v1993, %v1992
        %v2000 = vpack.c.b16 %v1995, %v1994
        %v2001 = vpack.c.b16 %v1997, %v1996
        %v2007 = vsel %vm1179, %v1977, 0
        %v2010 = vsel %vm1179, %v1978, 0
        %v2013 = vsel %vm1179, %v1979, 0
        %v2016 = vsel %vm1179, %v1980, 0
        %v2019 = vsel %vm1179, %v1981, 0
        %2021 = vmatpush.bf16.msra.mxu0 0
        %2022 = vmatpush.bf16.msra.mxu0 0
        %2023 = vmatpush.bf16.msra.mxu0 0
        %2024 = vmatpush.bf16.msra.mxu0 0
        %2025 = vmatpush.bf16.msra.mxu0 %v2001
        %2026 = vmatpush.bf16.msra.mxu0 %v2000
        %2027 = vmatpush.bf16.msra.mxu0 %v1999
        %2028 = vmatpush.bf16.msra.mxu0 %v1998
        %2029 = vmatmul.bf16.gmra.mxu0 %v2007
        %v2030 = vpop.f32.mrf.mxu0
        %v2031 = vadd.f32 0.0, %v2030
        %v2032 = vpop.f32.mrf.mxu0
        %v2033 = vadd.f32 0.0, %v2032
        %2034 = vmatmul.bf16.gmra.mxu0 %v2010
        %v2035 = vpop.f32.mrf.mxu0
        %v2036 = vadd.f32 0.0, %v2035
        %v2037 = vpop.f32.mrf.mxu0
        %v2038 = vadd.f32 0.0, %v2037
        %2039 = vmatmul.bf16.gmra.mxu0 %v2013
        %v2040 = vpop.f32.mrf.mxu0
        %v2041 = vadd.f32 0.0, %v2040
        %v2042 = vpop.f32.mrf.mxu0
        %v2043 = vadd.f32 0.0, %v2042
        %2044 = vmatmul.bf16.gmra.mxu0 %v2016
        %v2045 = vpop.f32.mrf.mxu0
        %v2046 = vadd.f32 0.0, %v2045
        %v2047 = vpop.f32.mrf.mxu0
        %v2048 = vadd.f32 0.0, %v2047
        %2049 = vmatmul.bf16.gmra.mxu0 %v2019
        %v2050 = vpop.f32.mrf.mxu0
        %v2051 = vadd.f32 0.0, %v2050
        %v2052 = vpop.f32.mrf.mxu0
        %2053 = vdwg.mxu0
        %v2054 = vld [vmem:[#allocation3] sm:$0xff]
        %v2055 = vld [vmem:[#allocation3 + $0x8] sm:$0xff]
        %v2056 = vld [vmem:[#allocation3 + $0x10] sm:$0xff]
        %v2057 = vld [vmem:[#allocation3 + $0x18] sm:$0xff]
        %v2058 = vld [vmem:[#allocation3 + $0x20] sm:$0xff]
        %v2059 = vld [vmem:[#allocation3 + $0x28] sm:$0xff]
        %v2060 = vld [vmem:[#allocation3 + $0x30] sm:$0xff]
        %v2061 = vld [vmem:[#allocation3 + $0x38] sm:$0xff]
        %v2062 = vld [vmem:[#allocation3 + $0x40] sm:$0xff]
        %v2063 = vadd.f32 %v2054, %v2031
        %v2064 = vadd.f32 %v2055, %v2033
        %v2065 = vadd.f32 %v2056, %v2036
        %v2066 = vadd.f32 %v2057, %v2038
        %v2067 = vadd.f32 %v2058, %v2041
        %v2068 = vadd.f32 %v2059, %v2043
        %v2069 = vadd.f32 %v2060, %v2046
        %v2070 = vadd.f32 %v2061, %v2048
        %v2071 = vadd.f32 %v2062, %v2051
        %2072 = vst.msk [vmem:[#allocation3] sm:$0xff] %vm1179, %v2063
        %2073 = vst.msk [vmem:[#allocation3 + $0x8] sm:$0xff] %vm1179, %v2064
        %2074 = vst.msk [vmem:[#allocation3 + $0x10] sm:$0xff] %vm1179, %v2065
        %2075 = vst.msk [vmem:[#allocation3 + $0x18] sm:$0xff] %vm1179, %v2066
        %2076 = vst.msk [vmem:[#allocation3 + $0x20] sm:$0xff] %vm1179, %v2067
        %2077 = vst.msk [vmem:[#allocation3 + $0x28] sm:$0xff] %vm1179, %v2068
        %2078 = vst.msk [vmem:[#allocation3 + $0x30] sm:$0xff] %vm1179, %v2069
        %2079 = vst.msk [vmem:[#allocation3 + $0x38] sm:$0xff] %vm1179, %v2070
        %2080 = vst.msk [vmem:[#allocation3 + $0x40] sm:$0xff] %vm1179, %v2071
        %s2081 = scalar_lea.vmem [#allocation2], 44
        %v2082 = vld [vmem:[%s2081] sm:$0xf]
        %v2083 = vld [vmem:[%s2081 + $0x4] sm:$0xf]
        %v2084 = vld [vmem:[%s2081 + $0x8] sm:$0xf]
        %v2085 = vld [vmem:[%s2081 + $0x14] sm:$0xf]
        %v2086 = vld [vmem:[%s2081 + $0x18] sm:$0xf]
        %v2087 = vld [vmem:[%s2081 + $0x1c] sm:$0xf]
        %v2088 = vld [vmem:[%s2081 + $0x28] sm:$0xf]
        %v2089 = vld [vmem:[%s2081 + $0x2c] sm:$0xf]
        %v2090 = vld [vmem:[%s2081 + $0x30] sm:$0xf]
        %s2091 = scalar_lea.vmem %s3, 224
        %v2092 = vld [vmem:[%s2091] sm:$0xf]
        %v2093 = vld [vmem:[%s2091 + $0x4] sm:$0xf]
        %v2094 = vld [vmem:[%s2091 + $0x8] sm:$0xf]
        %v2095 = vld [vmem:[%s2091 + $0xc] sm:$0xf]
        %v2096 = vld [vmem:[%s2091 + $0x10] sm:$0xf]
        %v2097 = vld [vmem:[%s2091 + $0x14] sm:$0xf]
        %v2098 = vld [vmem:[%s2091 + $0x18] sm:$0xf]
        %v2099 = vld [vmem:[%s2091 + $0x1c] sm:$0xf]
        %v2109 = vunpack.c.l.b16 %v2082
        %v2110 = vunpack.c.l.b16 %v2083
        %v2111 = vunpack.c.l.b16 %v2084
        %v2112 = vunpack.c.l.b16 %v2085
        %v2113 = vunpack.c.l.b16 %v2086
        %v2114 = vunpack.c.l.b16 %v2087
        %v2115 = vunpack.c.l.b16 %v2088
        %v2116 = vunpack.c.l.b16 %v2089
        %v2117 = vunpack.c.l.b16 %v2090
        %v2118 = vpack.c.b16 %v2110, %v2109
        %v2119 = vpack.c.b16 %v2112, %v2111
        %v2120 = vpack.c.b16 %v2114, %v2113
        %v2121 = vpack.c.b16 %v2116, %v2115
        %v2122 = vpack.c.b16 %v2117, %v2117
        %v2131 = vunpack.c.l.b16 %v2092
        %v2132 = vunpack.c.l.b16 %v2093
        %v2133 = vunpack.c.l.b16 %v2094
        %v2134 = vunpack.c.l.b16 %v2095
        %v2135 = vunpack.c.l.b16 %v2096
        %v2136 = vunpack.c.l.b16 %v2097
        %v2137 = vunpack.c.l.b16 %v2098
        %v2138 = vunpack.c.l.b16 %v2099
        %v2139 = vpack.c.b16 %v2132, %v2131
        %v2140 = vpack.c.b16 %v2134, %v2133
        %v2141 = vpack.c.b16 %v2136, %v2135
        %v2142 = vpack.c.b16 %v2138, %v2137
        %v2148 = vsel %vm1179, %v2118, 0
        %v2151 = vsel %vm1179, %v2119, 0
        %v2154 = vsel %vm1179, %v2120, 0
        %v2157 = vsel %vm1179, %v2121, 0
        %v2160 = vsel %vm1179, %v2122, 0
        %2162 = vmatpush.bf16.msra.mxu0 0
        %2163 = vmatpush.bf16.msra.mxu0 0
        %2164 = vmatpush.bf16.msra.mxu0 0
        %2165 = vmatpush.bf16.msra.mxu0 0
        %2166 = vmatpush.bf16.msra.mxu0 %v2142
        %2167 = vmatpush.bf16.msra.mxu0 %v2141
        %2168 = vmatpush.bf16.msra.mxu0 %v2140
        %2169 = vmatpush.bf16.msra.mxu0 %v2139
        %2170 = vmatmul.bf16.gmra.mxu0 %v2148
        %v2171 = vpop.f32.mrf.mxu0
        %v2172 = vadd.f32 0.0, %v2171
        %v2173 = vpop.f32.mrf.mxu0
        %v2174 = vadd.f32 0.0, %v2173
        %2175 = vmatmul.bf16.gmra.mxu0 %v2151
        %v2176 = vpop.f32.mrf.mxu0
        %v2177 = vadd.f32 0.0, %v2176
        %v2178 = vpop.f32.mrf.mxu0
        %v2179 = vadd.f32 0.0, %v2178
        %2180 = vmatmul.bf16.gmra.mxu0 %v2154
        %v2181 = vpop.f32.mrf.mxu0
        %v2182 = vadd.f32 0.0, %v2181
        %v2183 = vpop.f32.mrf.mxu0
        %v2184 = vadd.f32 0.0, %v2183
        %2185 = vmatmul.bf16.gmra.mxu0 %v2157
        %v2186 = vpop.f32.mrf.mxu0
        %v2187 = vadd.f32 0.0, %v2186
        %v2188 = vpop.f32.mrf.mxu0
        %v2189 = vadd.f32 0.0, %v2188
        %2190 = vmatmul.bf16.gmra.mxu0 %v2160
        %v2191 = vpop.f32.mrf.mxu0
        %v2192 = vadd.f32 0.0, %v2191
        %v2193 = vpop.f32.mrf.mxu0
        %2194 = vdwg.mxu0
        %v2195 = vld [vmem:[#allocation3] sm:$0xff]
        %v2196 = vld [vmem:[#allocation3 + $0x8] sm:$0xff]
        %v2197 = vld [vmem:[#allocation3 + $0x10] sm:$0xff]
        %v2198 = vld [vmem:[#allocation3 + $0x18] sm:$0xff]
        %v2199 = vld [vmem:[#allocation3 + $0x20] sm:$0xff]
        %v2200 = vld [vmem:[#allocation3 + $0x28] sm:$0xff]
        %v2201 = vld [vmem:[#allocation3 + $0x30] sm:$0xff]
        %v2202 = vld [vmem:[#allocation3 + $0x38] sm:$0xff]
        %v2203 = vld [vmem:[#allocation3 + $0x40] sm:$0xff]
        %v2204 = vadd.f32 %v2195, %v2172
        %v2205 = vadd.f32 %v2196, %v2174
        %v2206 = vadd.f32 %v2197, %v2177
        %v2207 = vadd.f32 %v2198, %v2179
        %v2208 = vadd.f32 %v2199, %v2182
        %v2209 = vadd.f32 %v2200, %v2184
        %v2210 = vadd.f32 %v2201, %v2187
        %v2211 = vadd.f32 %v2202, %v2189
        %v2212 = vadd.f32 %v2203, %v2192
        %2213 = vst.msk [vmem:[#allocation3] sm:$0xff] %vm1179, %v2204
        %2214 = vst.msk [vmem:[#allocation3 + $0x8] sm:$0xff] %vm1179, %v2205
        %2215 = vst.msk [vmem:[#allocation3 + $0x10] sm:$0xff] %vm1179, %v2206
        %2216 = vst.msk [vmem:[#allocation3 + $0x18] sm:$0xff] %vm1179, %v2207
        %2217 = vst.msk [vmem:[#allocation3 + $0x20] sm:$0xff] %vm1179, %v2208
        %2218 = vst.msk [vmem:[#allocation3 + $0x28] sm:$0xff] %vm1179, %v2209
        %2219 = vst.msk [vmem:[#allocation3 + $0x30] sm:$0xff] %vm1179, %v2210
        %2220 = vst.msk [vmem:[#allocation3 + $0x38] sm:$0xff] %vm1179, %v2211
        %2221 = vst.msk [vmem:[#allocation3 + $0x40] sm:$0xff] %vm1179, %v2212
        %s2222 = scalar_lea.vmem [#allocation2], 48
        %v2223 = vld [vmem:[%s2222] sm:$0xf]
        %v2224 = vld [vmem:[%s2222 + $0x4] sm:$0xf]
        %v2225 = vld [vmem:[%s2222 + $0x8] sm:$0xf]
        %v2226 = vld [vmem:[%s2222 + $0x14] sm:$0xf]
        %v2227 = vld [vmem:[%s2222 + $0x18] sm:$0xf]
        %v2228 = vld [vmem:[%s2222 + $0x1c] sm:$0xf]
        %v2229 = vld [vmem:[%s2222 + $0x28] sm:$0xf]
        %v2230 = vld [vmem:[%s2222 + $0x2c] sm:$0xf]
        %v2231 = vld [vmem:[%s2222 + $0x30] sm:$0xf]
        %s2232 = scalar_lea.vmem %s3, 256
        %v2233 = vld [vmem:[%s2232] sm:$0xf]
        %v2234 = vld [vmem:[%s2232 + $0x4] sm:$0xf]
        %v2235 = vld [vmem:[%s2232 + $0x8] sm:$0xf]
        %v2236 = vld [vmem:[%s2232 + $0xc] sm:$0xf]
        %v2237 = vld [vmem:[%s2232 + $0x10] sm:$0xf]
        %v2238 = vld [vmem:[%s2232 + $0x14] sm:$0xf]
        %v2239 = vld [vmem:[%s2232 + $0x18] sm:$0xf]
        %v2240 = vld [vmem:[%s2232 + $0x1c] sm:$0xf]
        %v2250 = vunpack.c.l.b16 %v2223
        %v2251 = vunpack.c.l.b16 %v2224
        %v2252 = vunpack.c.l.b16 %v2225
        %v2253 = vunpack.c.l.b16 %v2226
        %v2254 = vunpack.c.l.b16 %v2227
        %v2255 = vunpack.c.l.b16 %v2228
        %v2256 = vunpack.c.l.b16 %v2229
        %v2257 = vunpack.c.l.b16 %v2230
        %v2258 = vunpack.c.l.b16 %v2231
        %v2259 = vpack.c.b16 %v2251, %v2250
        %v2260 = vpack.c.b16 %v2253, %v2252
        %v2261 = vpack.c.b16 %v2255, %v2254
        %v2262 = vpack.c.b16 %v2257, %v2256
        %v2263 = vpack.c.b16 %v2258, %v2258
        %v2272 = vunpack.c.l.b16 %v2233
        %v2273 = vunpack.c.l.b16 %v2234
        %v2274 = vunpack.c.l.b16 %v2235
        %v2275 = vunpack.c.l.b16 %v2236
        %v2276 = vunpack.c.l.b16 %v2237
        %v2277 = vunpack.c.l.b16 %v2238
        %v2278 = vunpack.c.l.b16 %v2239
        %v2279 = vunpack.c.l.b16 %v2240
        %v2280 = vpack.c.b16 %v2273, %v2272
        %v2281 = vpack.c.b16 %v2275, %v2274
        %v2282 = vpack.c.b16 %v2277, %v2276
        %v2283 = vpack.c.b16 %v2279, %v2278
        %v2289 = vsel %vm1179, %v2259, 0
        %v2292 = vsel %vm1179, %v2260, 0
        %v2295 = vsel %vm1179, %v2261, 0
        %v2298 = vsel %vm1179, %v2262, 0
        %v2301 = vsel %vm1179, %v2263, 0
        %2303 = vmatpush.bf16.msra.mxu0 0
        %2304 = vmatpush.bf16.msra.mxu0 0
        %2305 = vmatpush.bf16.msra.mxu0 0
        %2306 = vmatpush.bf16.msra.mxu0 0
        %2307 = vmatpush.bf16.msra.mxu0 %v2283
        %2308 = vmatpush.bf16.msra.mxu0 %v2282
        %2309 = vmatpush.bf16.msra.mxu0 %v2281
        %2310 = vmatpush.bf16.msra.mxu0 %v2280
        %2311 = vmatmul.bf16.gmra.mxu0 %v2289
        %v2312 = vpop.f32.mrf.mxu0
        %v2313 = vadd.f32 0.0, %v2312
        %v2314 = vpop.f32.mrf.mxu0
        %v2315 = vadd.f32 0.0, %v2314
        %2316 = vmatmul.bf16.gmra.mxu0 %v2292
        %v2317 = vpop.f32.mrf.mxu0
        %v2318 = vadd.f32 0.0, %v2317
        %v2319 = vpop.f32.mrf.mxu0
        %v2320 = vadd.f32 0.0, %v2319
        %2321 = vmatmul.bf16.gmra.mxu0 %v2295
        %v2322 = vpop.f32.mrf.mxu0
        %v2323 = vadd.f32 0.0, %v2322
        %v2324 = vpop.f32.mrf.mxu0
        %v2325 = vadd.f32 0.0, %v2324
        %2326 = vmatmul.bf16.gmra.mxu0 %v2298
        %v2327 = vpop.f32.mrf.mxu0
        %v2328 = vadd.f32 0.0, %v2327
        %v2329 = vpop.f32.mrf.mxu0
        %v2330 = vadd.f32 0.0, %v2329
        %2331 = vmatmul.bf16.gmra.mxu0 %v2301
        %v2332 = vpop.f32.mrf.mxu0
        %v2333 = vadd.f32 0.0, %v2332
        %v2334 = vpop.f32.mrf.mxu0
        %2335 = vdwg.mxu0
        %v2336 = vld [vmem:[#allocation3] sm:$0xff]
        %v2337 = vld [vmem:[#allocation3 + $0x8] sm:$0xff]
        %v2338 = vld [vmem:[#allocation3 + $0x10] sm:$0xff]
        %v2339 = vld [vmem:[#allocation3 + $0x18] sm:$0xff]
        %v2340 = vld [vmem:[#allocation3 + $0x20] sm:$0xff]
        %v2341 = vld [vmem:[#allocation3 + $0x28] sm:$0xff]
        %v2342 = vld [vmem:[#allocation3 + $0x30] sm:$0xff]
        %v2343 = vld [vmem:[#allocation3 + $0x38] sm:$0xff]
        %v2344 = vld [vmem:[#allocation3 + $0x40] sm:$0xff]
        %v2345 = vadd.f32 %v2336, %v2313
        %v2346 = vadd.f32 %v2337, %v2315
        %v2347 = vadd.f32 %v2338, %v2318
        %v2348 = vadd.f32 %v2339, %v2320
        %v2349 = vadd.f32 %v2340, %v2323
        %v2350 = vadd.f32 %v2341, %v2325
        %v2351 = vadd.f32 %v2342, %v2328
        %v2352 = vadd.f32 %v2343, %v2330
        %v2353 = vadd.f32 %v2344, %v2333
        %2354 = vst.msk [vmem:[#allocation3] sm:$0xff] %vm1179, %v2345
        %2355 = vst.msk [vmem:[#allocation3 + $0x8] sm:$0xff] %vm1179, %v2346
        %2356 = vst.msk [vmem:[#allocation3 + $0x10] sm:$0xff] %vm1179, %v2347
        %2357 = vst.msk [vmem:[#allocation3 + $0x18] sm:$0xff] %vm1179, %v2348
        %2358 = vst.msk [vmem:[#allocation3 + $0x20] sm:$0xff] %vm1179, %v2349
        %2359 = vst.msk [vmem:[#allocation3 + $0x28] sm:$0xff] %vm1179, %v2350
        %2360 = vst.msk [vmem:[#allocation3 + $0x30] sm:$0xff] %vm1179, %v2351
        %2361 = vst.msk [vmem:[#allocation3 + $0x38] sm:$0xff] %vm1179, %v2352
        %2362 = vst.msk [vmem:[#allocation3 + $0x40] sm:$0xff] %vm1179, %v2353
        %v2363 = vld [vmem:[#allocation3] sm:$0xff]
        %v2364 = vld [vmem:[%s4] sm:$0x1]
        %v2366 = vperm.slane %v2364, 0
        %v2368 = vadd.f32 %v2363, %v2366
        %v2369 = vmax.f32 %v2368, 0.0
        %v2370 = vpack.c.bf16 %v2369, %v2369
        %v2371 = vld [vmem:[%s5] sm:$0xf]
        %v2372 = vld [vmem:[%s5 + $0x4] sm:$0xf]
        %v2373 = vld [vmem:[%s5 + $0x8] sm:$0xf]
        %v2374 = vld [vmem:[%s5 + $0xc] sm:$0xf]
        %v2375 = vld [vmem:[%s5 + $0x10] sm:$0xf]
        %v2376 = vld [vmem:[%s5 + $0x14] sm:$0xf]
        %v2377 = vld [vmem:[%s5 + $0x18] sm:$0xf]
        %v2378 = vld [vmem:[%s5 + $0x1c] sm:$0xf]
        %v2379 = vld [vmem:[#allocation3 + $0x8] sm:$0xff]
        %v2380 = vadd.f32 %v2379, %v2366
        %v2381 = vmax.f32 %v2380, 0.0
        %v2382 = vpack.c.bf16 %v2381, %v2381
        %s2383 = scalar_lea.vmem %s5, 32
        %v2384 = vld [vmem:[%s2383] sm:$0xf]
        %v2385 = vld [vmem:[%s2383 + $0x4] sm:$0xf]
        %v2386 = vld [vmem:[%s2383 + $0x8] sm:$0xf]
        %v2387 = vld [vmem:[%s2383 + $0xc] sm:$0xf]
        %v2388 = vld [vmem:[%s2383 + $0x10] sm:$0xf]
        %v2389 = vld [vmem:[%s2383 + $0x14] sm:$0xf]
        %v2390 = vld [vmem:[%s2383 + $0x18] sm:$0xf]
        %v2391 = vld [vmem:[%s2383 + $0x1c] sm:$0xf]
        %v2400 = vunpack.c.l.b16 %v2384
        %v2401 = vunpack.c.l.b16 %v2385
        %v2402 = vunpack.c.l.b16 %v2386
        %v2403 = vunpack.c.l.b16 %v2387
        %v2404 = vunpack.c.l.b16 %v2388
        %v2405 = vunpack.c.l.b16 %v2389
        %v2406 = vunpack.c.l.b16 %v2390
        %v2407 = vunpack.c.l.b16 %v2391
        %v2408 = vpack.c.b16 %v2401, %v2400
        %v2409 = vpack.c.b16 %v2403, %v2402
        %v2410 = vpack.c.b16 %v2405, %v2404
        %v2411 = vpack.c.b16 %v2407, %v2406
        %v2417 = vsel %vm1179, %v2382, 0
        %2419 = vmatpush.bf16.msra.mxu0 0
        %2420 = vmatpush.bf16.msra.mxu0 0
        %2421 = vmatpush.bf16.msra.mxu0 0
        %2422 = vmatpush.bf16.msra.mxu0 0
        %2423 = vmatpush.bf16.msra.mxu0 %v2411
        %2424 = vmatpush.bf16.msra.mxu0 %v2410
        %2425 = vmatpush.bf16.msra.mxu0 %v2409
        %2426 = vmatpush.bf16.msra.mxu0 %v2408
        %2427 = vmatmul.bf16.gmra.mxu0 %v2417
        %v2428 = vpop.f32.mrf.mxu0
        %v2429 = vadd.f32 0.0, %v2428
        %v2430 = vpop.f32.mrf.mxu0
        %2431 = vdwg.mxu0
        %v2440 = vunpack.c.l.b16 %v2371
        %v2441 = vunpack.c.l.b16 %v2372
        %v2442 = vunpack.c.l.b16 %v2373
        %v2443 = vunpack.c.l.b16 %v2374
        %v2444 = vunpack.c.l.b16 %v2375
        %v2445 = vunpack.c.l.b16 %v2376
        %v2446 = vunpack.c.l.b16 %v2377
        %v2447 = vunpack.c.l.b16 %v2378
        %v2448 = vpack.c.b16 %v2441, %v2440
        %v2449 = vpack.c.b16 %v2443, %v2442
        %v2450 = vpack.c.b16 %v2445, %v2444
        %v2451 = vpack.c.b16 %v2447, %v2446
        %v2457 = vsel %vm1179, %v2370, 0
        %2459 = vmatpush.bf16.msra.mxu0 0
        %2460 = vmatpush.bf16.msra.mxu0 0
        %2461 = vmatpush.bf16.msra.mxu0 0
        %2462 = vmatpush.bf16.msra.mxu0 0
        %2463 = vmatpush.bf16.msra.mxu0 %v2451
        %2464 = vmatpush.bf16.msra.mxu0 %v2450
        %2465 = vmatpush.bf16.msra.mxu0 %v2449
        %2466 = vmatpush.bf16.msra.mxu0 %v2448
        %2467 = vmatmul.bf16.gmra.mxu0 %v2457
        %v2468 = vpop.f32.mrf.mxu0
        %v2469 = vadd.f32 %v2429, %v2468
        %v2470 = vpop.f32.mrf.mxu0
        %2471 = vdwg.mxu0
        %v2472 = vld [vmem:[#allocation3 + $0x10] sm:$0xff]
        %v2473 = vadd.f32 %v2472, %v2366
        %v2474 = vmax.f32 %v2473, 0.0
        %v2475 = vpack.c.bf16 %v2474, %v2474
        %s2476 = scalar_lea.vmem %s5, 64
        %v2477 = vld [vmem:[%s2476] sm:$0xf]
        %v2478 = vld [vmem:[%s2476 + $0x4] sm:$0xf]
        %v2479 = vld [vmem:[%s2476 + $0x8] sm:$0xf]
        %v2480 = vld [vmem:[%s2476 + $0xc] sm:$0xf]
        %v2481 = vld [vmem:[%s2476 + $0x10] sm:$0xf]
        %v2482 = vld [vmem:[%s2476 + $0x14] sm:$0xf]
        %v2483 = vld [vmem:[%s2476 + $0x18] sm:$0xf]
        %v2484 = vld [vmem:[%s2476 + $0x1c] sm:$0xf]
        %v2493 = vunpack.c.l.b16 %v2477
        %v2494 = vunpack.c.l.b16 %v2478
        %v2495 = vunpack.c.l.b16 %v2479
        %v2496 = vunpack.c.l.b16 %v2480
        %v2497 = vunpack.c.l.b16 %v2481
        %v2498 = vunpack.c.l.b16 %v2482
        %v2499 = vunpack.c.l.b16 %v2483
        %v2500 = vunpack.c.l.b16 %v2484
        %v2501 = vpack.c.b16 %v2494, %v2493
        %v2502 = vpack.c.b16 %v2496, %v2495
        %v2503 = vpack.c.b16 %v2498, %v2497
        %v2504 = vpack.c.b16 %v2500, %v2499
        %v2510 = vsel %vm1179, %v2475, 0
        %2512 = vmatpush.bf16.msra.mxu0 0
        %2513 = vmatpush.bf16.msra.mxu0 0
        %2514 = vmatpush.bf16.msra.mxu0 0
        %2515 = vmatpush.bf16.msra.mxu0 0
        %2516 = vmatpush.bf16.msra.mxu0 %v2504
        %2517 = vmatpush.bf16.msra.mxu0 %v2503
        %2518 = vmatpush.bf16.msra.mxu0 %v2502
        %2519 = vmatpush.bf16.msra.mxu0 %v2501
        %2520 = vmatmul.bf16.gmra.mxu0 %v2510
        %v2521 = vpop.f32.mrf.mxu0
        %v2522 = vadd.f32 0.0, %v2521
        %v2523 = vpop.f32.mrf.mxu0
        %2524 = vdwg.mxu0
        %v2525 = vadd.f32 %v2469, %v2522
        %v2526 = vld [vmem:[#allocation3 + $0x18] sm:$0xff]
        %v2527 = vadd.f32 %v2526, %v2366
        %v2528 = vmax.f32 %v2527, 0.0
        %v2529 = vpack.c.bf16 %v2528, %v2528
        %s2530 = scalar_lea.vmem %s5, 96
        %v2531 = vld [vmem:[%s2530] sm:$0xf]
        %v2532 = vld [vmem:[%s2530 + $0x4] sm:$0xf]
        %v2533 = vld [vmem:[%s2530 + $0x8] sm:$0xf]
        %v2534 = vld [vmem:[%s2530 + $0xc] sm:$0xf]
        %v2535 = vld [vmem:[%s2530 + $0x10] sm:$0xf]
        %v2536 = vld [vmem:[%s2530 + $0x14] sm:$0xf]
        %v2537 = vld [vmem:[%s2530 + $0x18] sm:$0xf]
        %v2538 = vld [vmem:[%s2530 + $0x1c] sm:$0xf]
        %v2547 = vunpack.c.l.b16 %v2531
        %v2548 = vunpack.c.l.b16 %v2532
        %v2549 = vunpack.c.l.b16 %v2533
        %v2550 = vunpack.c.l.b16 %v2534
        %v2551 = vunpack.c.l.b16 %v2535
        %v2552 = vunpack.c.l.b16 %v2536
        %v2553 = vunpack.c.l.b16 %v2537
        %v2554 = vunpack.c.l.b16 %v2538
        %v2555 = vpack.c.b16 %v2548, %v2547
        %v2556 = vpack.c.b16 %v2550, %v2549
        %v2557 = vpack.c.b16 %v2552, %v2551
        %v2558 = vpack.c.b16 %v2554, %v2553
        %v2564 = vsel %vm1179, %v2529, 0
        %2566 = vmatpush.bf16.msra.mxu0 0
        %2567 = vmatpush.bf16.msra.mxu0 0
        %2568 = vmatpush.bf16.msra.mxu0 0
        %2569 = vmatpush.bf16.msra.mxu0 0
        %2570 = vmatpush.bf16.msra.mxu0 %v2558
        %2571 = vmatpush.bf16.msra.mxu0 %v2557
        %2572 = vmatpush.bf16.msra.mxu0 %v2556
        %2573 = vmatpush.bf16.msra.mxu0 %v2555
        %2574 = vmatmul.bf16.gmra.mxu0 %v2564
        %v2575 = vpop.f32.mrf.mxu0
        %v2576 = vadd.f32 0.0, %v2575
        %v2577 = vpop.f32.mrf.mxu0
        %2578 = vdwg.mxu0
        %v2579 = vadd.f32 %v2525, %v2576
        %v2580 = vld [vmem:[#allocation3 + $0x20] sm:$0xff]
        %v2581 = vadd.f32 %v2580, %v2366
        %v2582 = vmax.f32 %v2581, 0.0
        %v2583 = vpack.c.bf16 %v2582, %v2582
        %s2584 = scalar_lea.vmem %s5, 128
        %v2585 = vld [vmem:[%s2584] sm:$0xf]
        %v2586 = vld [vmem:[%s2584 + $0x4] sm:$0xf]
        %v2587 = vld [vmem:[%s2584 + $0x8] sm:$0xf]
        %v2588 = vld [vmem:[%s2584 + $0xc] sm:$0xf]
        %v2589 = vld [vmem:[%s2584 + $0x10] sm:$0xf]
        %v2590 = vld [vmem:[%s2584 + $0x14] sm:$0xf]
        %v2591 = vld [vmem:[%s2584 + $0x18] sm:$0xf]
        %v2592 = vld [vmem:[%s2584 + $0x1c] sm:$0xf]
        %v2601 = vunpack.c.l.b16 %v2585
        %v2602 = vunpack.c.l.b16 %v2586
        %v2603 = vunpack.c.l.b16 %v2587
        %v2604 = vunpack.c.l.b16 %v2588
        %v2605 = vunpack.c.l.b16 %v2589
        %v2606 = vunpack.c.l.b16 %v2590
        %v2607 = vunpack.c.l.b16 %v2591
        %v2608 = vunpack.c.l.b16 %v2592
        %v2609 = vpack.c.b16 %v2602, %v2601
        %v2610 = vpack.c.b16 %v2604, %v2603
        %v2611 = vpack.c.b16 %v2606, %v2605
        %v2612 = vpack.c.b16 %v2608, %v2607
        %v2618 = vsel %vm1179, %v2583, 0
        %2620 = vmatpush.bf16.msra.mxu0 0
        %2621 = vmatpush.bf16.msra.mxu0 0
        %2622 = vmatpush.bf16.msra.mxu0 0
        %2623 = vmatpush.bf16.msra.mxu0 0
        %2624 = vmatpush.bf16.msra.mxu0 %v2612
        %2625 = vmatpush.bf16.msra.mxu0 %v2611
        %2626 = vmatpush.bf16.msra.mxu0 %v2610
        %2627 = vmatpush.bf16.msra.mxu0 %v2609
        %2628 = vmatmul.bf16.gmra.mxu0 %v2618
        %v2629 = vpop.f32.mrf.mxu0
        %v2630 = vadd.f32 0.0, %v2629
        %v2631 = vpop.f32.mrf.mxu0
        %2632 = vdwg.mxu0
        %v2633 = vadd.f32 %v2579, %v2630
        %v2634 = vld [vmem:[#allocation3 + $0x28] sm:$0xff]
        %v2635 = vadd.f32 %v2634, %v2366
        %v2636 = vmax.f32 %v2635, 0.0
        %v2637 = vpack.c.bf16 %v2636, %v2636
        %s2638 = scalar_lea.vmem %s5, 160
        %v2639 = vld [vmem:[%s2638] sm:$0xf]
        %v2640 = vld [vmem:[%s2638 + $0x4] sm:$0xf]
        %v2641 = vld [vmem:[%s2638 + $0x8] sm:$0xf]
        %v2642 = vld [vmem:[%s2638 + $0xc] sm:$0xf]
        %v2643 = vld [vmem:[%s2638 + $0x10] sm:$0xf]
        %v2644 = vld [vmem:[%s2638 + $0x14] sm:$0xf]
        %v2645 = vld [vmem:[%s2638 + $0x18] sm:$0xf]
        %v2646 = vld [vmem:[%s2638 + $0x1c] sm:$0xf]
        %v2655 = vunpack.c.l.b16 %v2639
        %v2656 = vunpack.c.l.b16 %v2640
        %v2657 = vunpack.c.l.b16 %v2641
        %v2658 = vunpack.c.l.b16 %v2642
        %v2659 = vunpack.c.l.b16 %v2643
        %v2660 = vunpack.c.l.b16 %v2644
        %v2661 = vunpack.c.l.b16 %v2645
        %v2662 = vunpack.c.l.b16 %v2646
        %v2663 = vpack.c.b16 %v2656, %v2655
        %v2664 = vpack.c.b16 %v2658, %v2657
        %v2665 = vpack.c.b16 %v2660, %v2659
        %v2666 = vpack.c.b16 %v2662, %v2661
        %v2672 = vsel %vm1179, %v2637, 0
        %2674 = vmatpush.bf16.msra.mxu0 0
        %2675 = vmatpush.bf16.msra.mxu0 0
        %2676 = vmatpush.bf16.msra.mxu0 0
        %2677 = vmatpush.bf16.msra.mxu0 0
        %2678 = vmatpush.bf16.msra.mxu0 %v2666
        %2679 = vmatpush.bf16.msra.mxu0 %v2665
        %2680 = vmatpush.bf16.msra.mxu0 %v2664
        %2681 = vmatpush.bf16.msra.mxu0 %v2663
        %2682 = vmatmul.bf16.gmra.mxu0 %v2672
        %v2683 = vpop.f32.mrf.mxu0
        %v2684 = vadd.f32 0.0, %v2683
        %v2685 = vpop.f32.mrf.mxu0
        %2686 = vdwg.mxu0
        %v2687 = vadd.f32 %v2633, %v2684
        %v2688 = vld [vmem:[#allocation3 + $0x30] sm:$0xff]
        %v2689 = vadd.f32 %v2688, %v2366
        %v2690 = vmax.f32 %v2689, 0.0
        %v2691 = vpack.c.bf16 %v2690, %v2690
        %s2692 = scalar_lea.vmem %s5, 192
        %v2693 = vld [vmem:[%s2692] sm:$0xf]
        %v2694 = vld [vmem:[%s2692 + $0x4] sm:$0xf]
        %v2695 = vld [vmem:[%s2692 + $0x8] sm:$0xf]
        %v2696 = vld [vmem:[%s2692 + $0xc] sm:$0xf]
        %v2697 = vld [vmem:[%s2692 + $0x10] sm:$0xf]
        %v2698 = vld [vmem:[%s2692 + $0x14] sm:$0xf]
        %v2699 = vld [vmem:[%s2692 + $0x18] sm:$0xf]
        %v2700 = vld [vmem:[%s2692 + $0x1c] sm:$0xf]
        %v2709 = vunpack.c.l.b16 %v2693
        %v2710 = vunpack.c.l.b16 %v2694
        %v2711 = vunpack.c.l.b16 %v2695
        %v2712 = vunpack.c.l.b16 %v2696
        %v2713 = vunpack.c.l.b16 %v2697
        %v2714 = vunpack.c.l.b16 %v2698
        %v2715 = vunpack.c.l.b16 %v2699
        %v2716 = vunpack.c.l.b16 %v2700
        %v2717 = vpack.c.b16 %v2710, %v2709
        %v2718 = vpack.c.b16 %v2712, %v2711
        %v2719 = vpack.c.b16 %v2714, %v2713
        %v2720 = vpack.c.b16 %v2716, %v2715
        %v2726 = vsel %vm1179, %v2691, 0
        %2728 = vmatpush.bf16.msra.mxu0 0
        %2729 = vmatpush.bf16.msra.mxu0 0
        %2730 = vmatpush.bf16.msra.mxu0 0
        %2731 = vmatpush.bf16.msra.mxu0 0
        %2732 = vmatpush.bf16.msra.mxu0 %v2720
        %2733 = vmatpush.bf16.msra.mxu0 %v2719
        %2734 = vmatpush.bf16.msra.mxu0 %v2718
        %2735 = vmatpush.bf16.msra.mxu0 %v2717
        %2736 = vmatmul.bf16.gmra.mxu0 %v2726
        %v2737 = vpop.f32.mrf.mxu0
        %v2738 = vadd.f32 0.0, %v2737
        %v2739 = vpop.f32.mrf.mxu0
        %2740 = vdwg.mxu0
        %v2741 = vadd.f32 %v2687, %v2738
        %v2742 = vld [vmem:[#allocation3 + $0x38] sm:$0xff]
        %v2743 = vadd.f32 %v2742, %v2366
        %v2744 = vmax.f32 %v2743, 0.0
        %v2745 = vpack.c.bf16 %v2744, %v2744
        %s2746 = scalar_lea.vmem %s5, 224
        %v2747 = vld [vmem:[%s2746] sm:$0xf]
        %v2748 = vld [vmem:[%s2746 + $0x4] sm:$0xf]
        %v2749 = vld [vmem:[%s2746 + $0x8] sm:$0xf]
        %v2750 = vld [vmem:[%s2746 + $0xc] sm:$0xf]
        %v2751 = vld [vmem:[%s2746 + $0x10] sm:$0xf]
        %v2752 = vld [vmem:[%s2746 + $0x14] sm:$0xf]
        %v2753 = vld [vmem:[%s2746 + $0x18] sm:$0xf]
        %v2754 = vld [vmem:[%s2746 + $0x1c] sm:$0xf]
        %v2763 = vunpack.c.l.b16 %v2747
        %v2764 = vunpack.c.l.b16 %v2748
        %v2765 = vunpack.c.l.b16 %v2749
        %v2766 = vunpack.c.l.b16 %v2750
        %v2767 = vunpack.c.l.b16 %v2751
        %v2768 = vunpack.c.l.b16 %v2752
        %v2769 = vunpack.c.l.b16 %v2753
        %v2770 = vunpack.c.l.b16 %v2754
        %v2771 = vpack.c.b16 %v2764, %v2763
        %v2772 = vpack.c.b16 %v2766, %v2765
        %v2773 = vpack.c.b16 %v2768, %v2767
        %v2774 = vpack.c.b16 %v2770, %v2769
        %v2780 = vsel %vm1179, %v2745, 0
        %2782 = vmatpush.bf16.msra.mxu0 0
        %2783 = vmatpush.bf16.msra.mxu0 0
        %2784 = vmatpush.bf16.msra.mxu0 0
        %2785 = vmatpush.bf16.msra.mxu0 0
        %2786 = vmatpush.bf16.msra.mxu0 %v2774
        %2787 = vmatpush.bf16.msra.mxu0 %v2773
        %2788 = vmatpush.bf16.msra.mxu0 %v2772
        %2789 = vmatpush.bf16.msra.mxu0 %v2771
        %2790 = vmatmul.bf16.gmra.mxu0 %v2780
        %v2791 = vpop.f32.mrf.mxu0
        %v2792 = vadd.f32 0.0, %v2791
        %v2793 = vpop.f32.mrf.mxu0
        %2794 = vdwg.mxu0
        %v2795 = vadd.f32 %v2741, %v2792
        %v2796 = vld [vmem:[#allocation3 + $0x40] sm:$0xff]
        %v2797 = vadd.f32 %v2796, %v2366
        %v2798 = vmax.f32 %v2797, 0.0
        %v2799 = vpack.c.bf16 %v2798, %v2798
        %s2800 = scalar_lea.vmem %s5, 256
        %v2801 = vld [vmem:[%s2800] sm:$0xf]
        %v2802 = vld [vmem:[%s2800 + $0x4] sm:$0xf]
        %v2803 = vld [vmem:[%s2800 + $0x8] sm:$0xf]
        %v2804 = vld [vmem:[%s2800 + $0xc] sm:$0xf]
        %v2805 = vld [vmem:[%s2800 + $0x10] sm:$0xf]
        %v2806 = vld [vmem:[%s2800 + $0x14] sm:$0xf]
        %v2807 = vld [vmem:[%s2800 + $0x18] sm:$0xf]
        %v2808 = vld [vmem:[%s2800 + $0x1c] sm:$0xf]
        %v2817 = vunpack.c.l.b16 %v2801
        %v2818 = vunpack.c.l.b16 %v2802
        %v2819 = vunpack.c.l.b16 %v2803
        %v2820 = vunpack.c.l.b16 %v2804
        %v2821 = vunpack.c.l.b16 %v2805
        %v2822 = vunpack.c.l.b16 %v2806
        %v2823 = vunpack.c.l.b16 %v2807
        %v2824 = vunpack.c.l.b16 %v2808
        %v2825 = vpack.c.b16 %v2818, %v2817
        %v2826 = vpack.c.b16 %v2820, %v2819
        %v2827 = vpack.c.b16 %v2822, %v2821
        %v2828 = vpack.c.b16 %v2824, %v2823
        %v2834 = vsel %vm1179, %v2799, 0
        %2836 = vmatpush.bf16.msra.mxu0 0
        %2837 = vmatpush.bf16.msra.mxu0 0
        %2838 = vmatpush.bf16.msra.mxu0 0
        %2839 = vmatpush.bf16.msra.mxu0 0
        %2840 = vmatpush.bf16.msra.mxu0 %v2828
        %2841 = vmatpush.bf16.msra.mxu0 %v2827
        %2842 = vmatpush.bf16.msra.mxu0 %v2826
        %2843 = vmatpush.bf16.msra.mxu0 %v2825
        %2844 = vmatmul.bf16.gmra.mxu0 %v2834
        %v2845 = vpop.f32.mrf.mxu0
        %v2846 = vadd.f32 0.0, %v2845
        %v2847 = vpop.f32.mrf.mxu0
        %2848 = vdwg.mxu0
        %v2849 = vadd.f32 %v2795, %v2846
        %v2850 = vld [vmem:[%s6] sm:$0x1]
        %v2852 = vperm.slane %v2850, 0
        %v2854 = vadd.f32 %v2849, %v2852
        %v2855 = vmax.f32 %v2854, 0.0
        %v2856 = vpack.c.bf16 %v2855, %v2855
        %v2857 = vld [vmem:[%s7] sm:$0xf]
        %v2858 = vld [vmem:[%s7 + $0x4] sm:$0xf]
        %v2859 = vld [vmem:[%s7 + $0x8] sm:$0xf]
        %v2860 = vld [vmem:[%s7 + $0xc] sm:$0xf]
        %v2861 = vld [vmem:[%s7 + $0x10] sm:$0xf]
        %v2862 = vld [vmem:[%s7 + $0x14] sm:$0xf]
        %v2863 = vld [vmem:[%s7 + $0x18] sm:$0xf]
        %v2864 = vld [vmem:[%s7 + $0x1c] sm:$0xf]
        %v2865 = vld [vmem:[%s8] sm:$0x1]
        %v2867 = vperm.slane %v2865, 0
        %v2877 = vunpack.c.l.b16 %v2857
        %v2878 = vunpack.c.l.b16 %v2858
        %v2879 = vunpack.c.l.b16 %v2859
        %v2880 = vunpack.c.l.b16 %v2860
        %v2881 = vunpack.c.l.b16 %v2861
        %v2882 = vunpack.c.l.b16 %v2862
        %v2883 = vunpack.c.l.b16 %v2863
        %v2884 = vunpack.c.l.b16 %v2864
        %v2885 = vpack.c.b16 %v2878, %v2877
        %v2886 = vpack.c.b16 %v2880, %v2879
        %v2887 = vpack.c.b16 %v2882, %v2881
        %v2888 = vpack.c.b16 %v2884, %v2883
        %v2894 = vsel %vm1179, %v2856, 0
        %2896 = vmatpush.bf16.msra.mxu0 0
        %2897 = vmatpush.bf16.msra.mxu0 0
        %2898 = vmatpush.bf16.msra.mxu0 0
        %2899 = vmatpush.bf16.msra.mxu0 0
        %2900 = vmatpush.bf16.msra.mxu0 %v2888
        %2901 = vmatpush.bf16.msra.mxu0 %v2887
        %2902 = vmatpush.bf16.msra.mxu0 %v2886
        %2903 = vmatpush.bf16.msra.mxu0 %v2885
        %2904 = vmatmul.bf16.gmra.mxu0 %v2894
        %v2905 = vpop.f32.mrf.mxu0
        %v2906 = vadd.f32 %v2867, %v2905
        %v2907 = vpop.f32.mrf.mxu0
        %2908 = vdwg.mxu0
        %2909 = vst [vmem:[%s469] sm:$0xff] %v2906
        %s2910 = sand.u32 %s225, 1
        %s2911 = scalar_lea.sflag [#allocation6], %s2910
        %s2912 = sand.u32 %s225, 1
        %s2913 = smul.addr %s2912, 8
        %s2914 = scalar_lea.vmem [#allocation5], %s2913
        // Predicated region
        $region98: #{_lambda_.1} parent=92 // pred_check
          %p2915 = pneg %p235
        $region99: #{_lambda_.1} parent=92 // pred_check_branch
          %2917 = sbr.rel (%p2915) target = $region101
        $region100: #{_lambda_.1} parent=92 // pred_region
          %2919 = vsyncadd %s2911, 0
          %s2920 = smul.addr %s23, 8
          %s2921 = scalar_lea.hbm %s9, %s2920
          %s2923 = sshll.u32 %s2914, 4
          %s2924 = int_to_ptr.vmem [resolvable:$true] %s2923
          %s2925 = sshll.u32 %s2921, 4
          %s2926 = int_to_ptr.hbm [resolvable:$true] %s2925
          %2928 = dma.vmem_to_hbm [thread:$0]  %s2924, 128, %s2926, %s2911
        $region101: #{_lambda_.1} parent=92 // pred_fallthru
          _
      $region93: #{_lambda_.1} parent=5 // pred_fallthru
        _
      %p2929 = scmp.le.s32.totalorder 2, %s18
      // Predicated region
      $region102: #{_lambda_.1} parent=5 // pred_check
        %p2930 = pneg %p2929
      $region103: #{_lambda_.1} parent=5 // pred_check_branch
        %2932 = sbr.rel (%p2930) target = $region105
      $region104: #{_lambda_.1} parent=5 // pred_region
        %s2933 = ssub.s32 %s18, 2
        // Predicated region
        $region106: #{_lambda_.1} parent=104 // pred_check
          %p2934 = pneg %p241
        $region107: #{_lambda_.1} parent=104 // pred_check_branch
          %2936 = sbr.rel (%p2934) target = $region109
        $region108: #{_lambda_.1} parent=104 // pred_region
          %s2937 = sand.u32 %s226, 1
          %s2938 = scalar_lea.sflag [#allocation6], %s2937
          %s2939 = sand.u32 %s226, 1
          %s2940 = smul.addr %s2939, 8
          %s2941 = scalar_lea.vmem [#allocation5], %s2940
          %2943 = dma.done %s2938, 128
        $region109: #{_lambda_.1} parent=104 // pred_fallthru
          _
      $region105: #{_lambda_.1} parent=5 // pred_fallthru
        _
    $region6: #{_lambda_.1} parent=1 // loop_footer
      %s22 = sadd.s32 1, %s18
    $region7: #{_lambda_.1} parent=1 // loop_footer_branch
      %17 = sbr.rel target = $region3
    $region8: #{_lambda_.1} parent=1 // loop_exit
      _
    %2944 = vsyncpa [#allocation6], 1
    %s2945 = scalar_lea.sflag [#allocation6], 1
    %2946 = vsyncpa %s2945, 1

</llo_original>
